<compile_context>
chip_gen: v7x
topology: tpu7x:2x2x1
jax: 0.10.0
libtpu: 0.0.40
codegen_flags: <defaults>
</compile_context>

<pallas_src>
import functools
import math

import jax
import jax.numpy as jnp
from jax import lax
from jax.experimental import pallas as pl
from jax.experimental.pallas import tpu as pltpu

_HEAD_PAD = 128  # one lane tile per head


# ----------------------------- fused kernel --------------------------------

def _fastvar_block_kernel(
    x_ref, ada_ref, kv_ref,
    sa_qkv_w_ref, sa_qkv_b_ref, sa_proj_w_ref, sa_proj_b_ref,
    ca_norm_w_ref, ca_norm_b_ref, ca_q_w_ref, ca_q_b_ref,
    ca_kv_w_ref, ca_kv_b_ref, ca_proj_w_ref, ca_proj_b_ref, ca_gamma_ref,
    fc1_w_ref, fc1_b_ref, fc2_w_ref, fc2_b_ref,
    o_ref,
    *, num_heads, eps):
    f32, bf16 = jnp.float32, jnp.bfloat16
    H, HP = num_heads, _HEAD_PAD
    B, L, C = x_ref.shape
    Lk = kv_ref.shape[0] // B

    x = x_ref[...].astype(f32)                   # (B, L, C)
    ada = ada_ref[...].astype(f32)               # (B, 6, C)
    gamma1, gamma2 = ada[:, 0:1, :], ada[:, 1:2, :]
    scale1, scale2 = ada[:, 2:3, :], ada[:, 3:4, :]
    shift1, shift2 = ada[:, 4:5, :], ada[:, 5:6, :]

    def layernorm(h):                            # LN (no affine), f32 math
        mu = jnp.mean(h, axis=-1, keepdims=True)
        var = jnp.mean(jnp.square(h - mu), axis=-1, keepdims=True)
        return (h - mu) * lax.rsqrt(var + eps)

    def linear(a2d, w_ref, b_ref):               # bf16 MXU operands, f32 acc
        return jnp.dot(a2d.astype(bf16), w_ref[...],
                       preferred_element_type=f32) + b_ref[...]

    def heads_attention(q_slab, k_slab, v_slab, Lq, Lkv):
        # Slabs are bf16 with each head occupying its own zero-padded 128-lane
        # tile, so every slice below is lane-tile aligned (no relayouts) and
        # per-head outputs never round-trip through VMEM scratch.
        outs = []
        for h in range(H):                       # static loop over heads
            q = q_slab[:, h * HP:(h + 1) * HP].reshape(B, Lq, HP)
            k = k_slab[:, h * HP:(h + 1) * HP].reshape(B, Lkv, HP)
            v = v_slab[:, h * HP:(h + 1) * HP].reshape(B, Lkv, HP)
            # attn scale already folded into q weights/bias at prepare time;
            # K^T is expressed through contraction dims (no explicit transpose).
            s = jnp.einsum('bqd,bkd->bqk', q, k, preferred_element_type=f32)
            m = jnp.max(s, axis=-1, keepdims=True)
            p = jnp.exp(s - m)
            p = p * pl.reciprocal(jnp.sum(p, axis=-1, keepdims=True), approx=True)
            o = jnp.einsum('bqk,bkd->bqd', p.astype(bf16), v,
                           preferred_element_type=f32)       # (B, Lq, HP)
            outs.append(o.reshape(B * Lq, HP))
        # 128-lane-aligned concat; zero-padded lanes are absorbed by the
        # zero-row-padded (H*128, C) projection weights.
        return jnp.concatenate(outs, axis=-1).astype(bf16)   # (B*Lq, H*HP)

    # ---------------- self-attention branch ---------------------------------
    x_sa_in = layernorm(x) * (scale1 + 1.0) + shift1
    qkv = linear(x_sa_in.reshape(B * L, C), sa_qkv_w_ref,
                 sa_qkv_b_ref).astype(bf16)                   # (B*L, 3*H*HP)
    o_sa = heads_attention(qkv[:, :H * HP], qkv[:, H * HP:2 * H * HP],
                           qkv[:, 2 * H * HP:], L, L)
    sa_out = jnp.dot(o_sa, sa_proj_w_ref[...],
                     preferred_element_type=f32) + sa_proj_b_ref[...]
    x = x + sa_out.reshape(B, L, C) * gamma1

    # ---------------- cross-attention branch --------------------------------
    x_ca_in = layernorm(x) * ca_norm_w_ref[...] + ca_norm_b_ref[...]
    q_c = linear(x_ca_in.reshape(B * L, C), ca_q_w_ref,
                 ca_q_b_ref).astype(bf16)                     # (B*L, H*HP)
    kv_c = linear(kv_ref[...], ca_kv_w_ref,
                  ca_kv_b_ref).astype(bf16)                   # (B*Lk, 2*H*HP)
    o_ca = heads_attention(q_c, kv_c[:, :H * HP], kv_c[:, H * HP:], L, Lk)
    ca_out = jnp.dot(o_ca, ca_proj_w_ref[...],
                     preferred_element_type=f32) + ca_proj_b_ref[...]
    x = x + ca_out.reshape(B, L, C) * ca_gamma_ref[...]

    # ---------------- FFN branch ---------------------------------------------
    x_ffn_in = layernorm(x) * (scale2 + 1.0) + shift2
    h1 = jax.nn.gelu(linear(x_ffn_in.reshape(B * L, C), fc1_w_ref, fc1_b_ref),
                     approximate=True)
    ffn_out = linear(h1, fc2_w_ref, fc2_b_ref)
    x = x + ffn_out.reshape(B, L, C) * gamma2

    o_ref[...] = x.astype(o_ref.dtype)


# ----------------------------- parameters ----------------------------------

def init_params(key, C, H, kv_dim, mlp_hidden):
    """Torch-layout parameters (weights are (out, in))."""
    ks = jax.random.split(key, 16)
    s = 0.02

    def w(k, shape):
        return jax.random.normal(k, shape, jnp.float32) * s

    p = {}
    p['ada_gss'] = jax.random.normal(ks[0], (1, 1, 6, C), jnp.float32) / math.sqrt(C)
    # self-attention (FastVARSelfAttention)
    p['sa_qkv_w'] = w(ks[1], (3 * C, C))       # mat_qkv.weight (no Linear bias)
    p['sa_q_bias'] = w(ks[2], (C,))            # q_bias
    p['sa_v_bias'] = w(ks[3], (C,))            # v_bias (zero_k_bias is zeros)
    p['sa_proj_w'] = w(ks[4], (C, C))
    p['sa_proj_b'] = w(ks[5], (C,))
    # cross-attention (CrossAttention)
    p['ca_q_w'] = w(ks[6], (C, C))             # mat_q.weight
    p['ca_q_b'] = w(ks[7], (C,))               # mat_q.bias
    p['ca_kv_w'] = w(ks[8], (2 * C, kv_dim))   # mat_kv.weight (no bias)
    p['ca_v_bias'] = w(ks[9], (C,))            # v_bias (zero_k_bias is zeros)
    p['ca_proj_w'] = w(ks[10], (C, C))
    p['ca_proj_b'] = w(ks[11], (C,))
    p['ca_norm_w'] = jnp.ones((C,), jnp.float32)
    p['ca_norm_b'] = jnp.zeros((C,), jnp.float32)
    p['ca_gamma'] = 0.1 * jnp.ones((C,), jnp.float32)   # cross_attn_layer_scale=0.1
    # FFN
    p['fc1_w'] = w(ks[12], (mlp_hidden, C))
    p['fc1_b'] = w(ks[13], (mlp_hidden,))
    p['fc2_w'] = w(ks[14], (C, mlp_hidden))
    p['fc2_b'] = w(ks[15], (C,))
    return p


_WEIGHT_ORDER = (
    'sa_qkv_w', 'sa_qkv_b', 'sa_proj_w', 'sa_proj_b',
    'ca_norm_w', 'ca_norm_b', 'ca_q_w', 'ca_q_b',
    'ca_kv_w', 'ca_kv_b', 'ca_proj_w', 'ca_proj_b', 'ca_gamma',
    'fc1_w', 'fc1_b', 'fc2_w', 'fc2_b',
)


def _pad_heads_cols(w, H, hd):
    """(in, H*hd) -> (in, H*128): head h's hd columns land at [h*128, h*128+hd)."""
    in_dim = w.shape[0]
    out = jnp.zeros((in_dim, H, _HEAD_PAD), w.dtype)
    out = out.at[:, :, :hd].set(w.reshape(in_dim, H, hd))
    return out.reshape(in_dim, H * _HEAD_PAD)


def _pad_heads_bias(b, H, hd):
    """(H*hd,) -> (1, H*128) with the same per-head lane padding."""
    out = jnp.zeros((H, _HEAD_PAD), b.dtype).at[:, :hd].set(b.reshape(H, hd))
    return out.reshape(1, H * _HEAD_PAD)


def _pad_heads_rows(w, H, hd):
    """(H*hd, out) -> (H*128, out): zero rows at padded head positions."""
    out_dim = w.shape[1]
    out = jnp.zeros((H, _HEAD_PAD, out_dim), w.dtype)
    out = out.at[:, :hd, :].set(w.reshape(H, hd, out_dim))
    return out.reshape(H * _HEAD_PAD, out_dim)


def prepare_params(p, C, H):
    """One-time, hot-path-free preprocessing:
      * weights transposed to (in, out) and cast to bf16,
      * q/zero-k/v biases pre-concatenated,
      * each head's q/k/v columns zero-padded to its own 128-lane tile,
        projection weights zero-row-padded to match,
      * attention scale 1/sqrt(hd) folded into q weights AND biases.
    NOTE: linear layers run with bf16 operands (f32 accumulation) while the
    reference runs them in f32 -> ~1e-3-level relative deltas (the reference's
    flash attention is bf16 anyway).  Folding the scale before bf16 rounding
    is numerically negligible."""
    bf = jnp.bfloat16
    hd = C // H
    scale = 1.0 / math.sqrt(hd)
    mlp_hidden = p['fc1_w'].shape[0]
    HPH = H * _HEAD_PAD

    q = {'ada_gss': p['ada_gss']}

    # --- self-attention ------------------------------------------------------
    w_qkv_t = p['sa_qkv_w'].T                                   # (C, 3C) [q|k|v]
    wq, wk, wv = w_qkv_t[:, :C], w_qkv_t[:, C:2 * C], w_qkv_t[:, 2 * C:]
    q['sa_qkv_w'] = jnp.concatenate(
        [_pad_heads_cols(wq * scale, H, hd),
         _pad_heads_cols(wk, H, hd),
         _pad_heads_cols(wv, H, hd)], axis=1).astype(bf)        # (C, 3*H*128)
    q['sa_qkv_b'] = jnp.concatenate(
        [_pad_heads_bias(p['sa_q_bias'] * scale, H, hd),
         jnp.zeros((1, HPH), jnp.float32),
         _pad_heads_bias(p['sa_v_bias'], H, hd)], axis=1)       # (1, 3*H*128)
    q['sa_proj_w'] = _pad_heads_rows(p['sa_proj_w'].T, H, hd).astype(bf)  # (H*128, C)
    q['sa_proj_b'] = p['sa_proj_b'].reshape(1, C)

    # --- cross-attention -----------------------------------------------------
    q['ca_norm_w'] = p['ca_norm_w'].reshape(1, C)
    q['ca_norm_b'] = p['ca_norm_b'].reshape(1, C)
    q['ca_q_w'] = _pad_heads_cols(p['ca_q_w'].T * scale, H, hd).astype(bf)  # (C, H*128)
    q['ca_q_b'] = _pad_heads_bias(p['ca_q_b'] * scale, H, hd)               # (1, H*128)
    w_kv_t = p['ca_kv_w'].T                                     # (kv_dim, 2C) [k|v]
    q['ca_kv_w'] = jnp.concatenate(
        [_pad_heads_cols(w_kv_t[:, :C], H, hd),
         _pad_heads_cols(w_kv_t[:, C:], H, hd)], axis=1).astype(bf)  # (kv_dim, 2*H*128)
    q['ca_kv_b'] = jnp.concatenate(
        [jnp.zeros((1, HPH), jnp.float32),
         _pad_heads_bias(p['ca_v_bias'], H, hd)], axis=1)       # (1, 2*H*128)
    q['ca_proj_w'] = _pad_heads_rows(p['ca_proj_w'].T, H, hd).astype(bf)    # (H*128, C)
    q['ca_proj_b'] = p['ca_proj_b'].reshape(1, C)
    q['ca_gamma'] = p['ca_gamma'].reshape(1, C)

    # --- FFN ------------------------------------------------------------------
    q['fc1_w'] = p['fc1_w'].T.astype(bf)                        # (C, mlp_hidden)
    q['fc1_b'] = p['fc1_b'].reshape(1, mlp_hidden)
    q['fc2_w'] = p['fc2_w'].T.astype(bf)                        # (mlp_hidden, C)
    q['fc2_b'] = p['fc2_b'].reshape(1, C)
    return q


# ----------------------------- forward --------------------------------------

def fastvar_cross_attn_block(prepared, x, cond_BD, kv_compact, *,
                             Lkv, num_heads, eps=1e-6, batch_blocks=1):
    """x: (B,L,C) f32; cond_BD: (B,1,6,C); kv_compact: (B*Lkv, kv_dim)
    (uniform KV segment length per batch, cu_seqlens_k = [0, Lkv, 2Lkv, ...]).
    batch_blocks=1 -> single fused step (best for single-TC v5e/v6e);
    batch_blocks=2 -> one 'parallel' step per v7x TensorCore."""
    B, L, C = x.shape
    kv_dim = kv_compact.shape[-1]
    assert B % batch_blocks == 0
    Bb = B // batch_blocks

    ada = (prepared['ada_gss'] + cond_BD).reshape(B, 6, C)      # tiny XLA add
    weights = [prepared[k] for k in _WEIGHT_ORDER]

    in_specs = [
        pl.BlockSpec((Bb, L, C), lambda g: (g, 0, 0)),
        pl.BlockSpec((Bb, 6, C), lambda g: (g, 0, 0)),
        pl.BlockSpec((Bb * Lkv, kv_dim), lambda g: (g, 0)),
    ] + [pl.BlockSpec(w.shape, lambda g: (0, 0)) for w in weights]
    # Constant-index weight blocks: with batch_blocks=1 there is exactly one
    # grid step, so every weight is DMA'd into VMEM exactly once.

    kernel = functools.partial(_fastvar_block_kernel,
                               num_heads=num_heads, eps=eps)

    return pl.pallas_call(
        kernel,
        out_shape=jax.ShapeDtypeStruct((B, L, C), jnp.float32),
        grid=(batch_blocks,),
        in_specs=in_specs,
        out_specs=pl.BlockSpec((Bb, L, C), lambda g: (g, 0, 0)),
        compiler_params=pltpu.CompilerParams(
            dimension_semantics=("parallel",)),
    )(x, ada, kv_compact, *weights)


# ----------------------------- pure-JAX reference ----------------------------

def reference_forward(p, x, cond_BD, kv_compact, *, Lkv, num_heads, eps=1e-6):
    B, L, C = x.shape
    H = num_heads
    hd = C // H
    scale = 1.0 / math.sqrt(hd)
    ada = (p['ada_gss'] + cond_BD).reshape(B, 6, C)
    gamma1, gamma2 = ada[:, 0:1, :], ada[:, 1:2, :]
    scale1, scale2 = ada[:, 2:3, :], ada[:, 3:4, :]
    shift1, shift2 = ada[:, 4:5, :], ada[:, 5:6, :]

    def ln(h):
        mu = h.mean(-1, keepdims=True)
        var = ((h - mu) ** 2).mean(-1, keepdims=True)
        return (h - mu) / jnp.sqrt(var + eps)

    def attn(qh, kh, vh):  # (B,H,Lq,hd),(B,H,Lk,hd),(B,H,Lk,hd)
        s = jnp.einsum('bhqd,bhkd->bhqk', qh, kh) * scale
        pm = jax.nn.softmax(s, axis=-1)
        return jnp.einsum('bhqk,bhkd->bhqd', pm, vh)

    # self-attention
    x_sa = ln(x) * (scale1 + 1.0) + shift1
    qkv_b = jnp.concatenate([p['sa_q_bias'], jnp.zeros((C,), jnp.float32),
                             p['sa_v_bias']])
    qkv = (x_sa @ p['sa_qkv_w'].T + qkv_b).reshape(B, L, 3, H, hd)
    q_, k_, v_ = (qkv[:, :, i].transpose(0, 2, 1, 3) for i in range(3))
    o = attn(q_, k_, v_).transpose(0, 2, 1, 3).reshape(B, L, C)
    x = x + (o @ p['sa_proj_w'].T + p['sa_proj_b']) * gamma1

    # cross-attention
    x_ca = ln(x) * p['ca_norm_w'] + p['ca_norm_b']
    qc = (x_ca @ p['ca_q_w'].T + p['ca_q_b']).reshape(B, L, H, hd).transpose(0, 2, 1, 3)
    kv_b = jnp.concatenate([jnp.zeros((C,), jnp.float32), p['ca_v_bias']])
    kvc = (kv_compact @ p['ca_kv_w'].T + kv_b).reshape(B, Lkv, 2, H, hd)
    kc = kvc[:, :, 0].transpose(0, 2, 1, 3)
    vc = kvc[:, :, 1].transpose(0, 2, 1, 3)
    oc = attn(qc, kc, vc).transpose(0, 2, 1, 3).reshape(B, L, C)
    x = x + (oc @ p['ca_proj_w'].T + p['ca_proj_b']) * p['ca_gamma']

    # FFN
    x_f = ln(x) * (scale2 + 1.0) + shift2
    h1 = jax.nn.gelu(x_f @ p['fc1_w'].T + p['fc1_b'], approximate=True)
    x = x + (h1 @ p['fc2_w'].T + p['fc2_b']) * gamma2
    return x


# ----------------------------- main -----------------------------------------

if __name__ == "__main__":
    B, L, C, H = 2, 16, 64, 4           # embed_dim=64, num_heads=4, head_dim=16
    kv_dim, Lkv = 32, 16                # uniform KV length per batch element
    mlp_ratio = 4.0
    mlp_hidden = round(C * mlp_ratio / 256) * 256   # 256 (FFN hidden rounding rule)

    key = jax.random.PRNGKey(0)
    kp, kx, kc, kk = jax.random.split(key, 4)
    raw_params = init_params(kp, C, H, kv_dim, mlp_hidden)
    prepared = prepare_params(raw_params, C, H)     # one-time layout/dtype prep

    x = jax.random.normal(kx, (B, L, C), jnp.float32)
    cond_BD = jax.random.normal(kc, (B, 1, 6, C), jnp.float32)
    kv_compact = jax.random.normal(kk, (B * Lkv, kv_dim), jnp.float32)
    # cu_seqlens_k = [0, Lkv, 2*Lkv], max_seqlen_k = Lkv (implicit, uniform)

    fwd = jax.jit(functools.partial(fastvar_cross_attn_block,
                                    Lkv=Lkv, num_heads=H))
    out = fwd(prepared, x, cond_BD, kv_compact)
    jax.block_until_ready(out)
    assert out.shape == (B, L, C) and out.dtype == jnp.float32

    ref = reference_forward(raw_params, x, cond_BD, kv_compact, Lkv=Lkv, num_heads=H)
    err = float(jnp.max(jnp.abs(out - ref)))
    assert err < 3e-2, f"max abs err {err}"
    print("KERNEL_OK")
</pallas_src>

<mosaic_0001>
module attributes {stable_mosaic.version = 11 : i64} {
  func.func @_fastvar_block_kernel(%arg0: i32, %arg1: memref<2x16x64xf32, #tpu.memory_space<vmem>>, %arg2: memref<2x6x64xf32, #tpu.memory_space<vmem>>, %arg3: memref<32x32xf32, #tpu.memory_space<vmem>>, %arg4: memref<64x1536xbf16, #tpu.memory_space<vmem>>, %arg5: memref<1x1536xf32, #tpu.memory_space<vmem>>, %arg6: memref<512x64xbf16, #tpu.memory_space<vmem>>, %arg7: memref<1x64xf32, #tpu.memory_space<vmem>>, %arg8: memref<1x64xf32, #tpu.memory_space<vmem>>, %arg9: memref<1x64xf32, #tpu.memory_space<vmem>>, %arg10: memref<64x512xbf16, #tpu.memory_space<vmem>>, %arg11: memref<1x512xf32, #tpu.memory_space<vmem>>, %arg12: memref<32x1024xbf16, #tpu.memory_space<vmem>>, %arg13: memref<1x1024xf32, #tpu.memory_space<vmem>>, %arg14: memref<512x64xbf16, #tpu.memory_space<vmem>>, %arg15: memref<1x64xf32, #tpu.memory_space<vmem>>, %arg16: memref<1x64xf32, #tpu.memory_space<vmem>>, %arg17: memref<64x256xbf16, #tpu.memory_space<vmem>>, %arg18: memref<1x256xf32, #tpu.memory_space<vmem>>, %arg19: memref<256x64xbf16, #tpu.memory_space<vmem>>, %arg20: memref<1x64xf32, #tpu.memory_space<vmem>>, %arg21: memref<2x16x64xf32, #tpu.memory_space<vmem>>) attributes {dimension_semantics = [#tpu.dimension_semantics<parallel>], iteration_bounds = array<i64: 1>, scalar_prefetch = 0 : i64, scratch_operands = 0 : i64, tpu.core_type = #tpu.core_type<tc>, window_params = [{transform_indices = @transform_0, window_bounds = array<i64: 2, 16, 64>}, {transform_indices = @transform_1, window_bounds = array<i64: 2, 6, 64>}, {transform_indices = @transform_2, window_bounds = array<i64: 32, 32>}, {pipeline_mode = #tpu.pipeline_mode<synchronous>, transform_indices = @transform_3, window_bounds = array<i64: 64, 1536>}, {pipeline_mode = #tpu.pipeline_mode<synchronous>, transform_indices = @transform_4, window_bounds = array<i64: 1, 1536>}, {pipeline_mode = #tpu.pipeline_mode<synchronous>, transform_indices = @transform_5, window_bounds = array<i64: 512, 64>}, {pipeline_mode = #tpu.pipeline_mode<synchronous>, transform_indices = @transform_6, window_bounds = array<i64: 1, 64>}, {pipeline_mode = #tpu.pipeline_mode<synchronous>, transform_indices = @transform_7, window_bounds = array<i64: 1, 64>}, {pipeline_mode = #tpu.pipeline_mode<synchronous>, transform_indices = @transform_8, window_bounds = array<i64: 1, 64>}, {pipeline_mode = #tpu.pipeline_mode<synchronous>, transform_indices = @transform_9, window_bounds = array<i64: 64, 512>}, {pipeline_mode = #tpu.pipeline_mode<synchronous>, transform_indices = @transform_10, window_bounds = array<i64: 1, 512>}, {pipeline_mode = #tpu.pipeline_mode<synchronous>, transform_indices = @transform_11, window_bounds = array<i64: 32, 1024>}, {pipeline_mode = #tpu.pipeline_mode<synchronous>, transform_indices = @transform_12, window_bounds = array<i64: 1, 1024>}, {pipeline_mode = #tpu.pipeline_mode<synchronous>, transform_indices = @transform_13, window_bounds = array<i64: 512, 64>}, {pipeline_mode = #tpu.pipeline_mode<synchronous>, transform_indices = @transform_14, window_bounds = array<i64: 1, 64>}, {pipeline_mode = #tpu.pipeline_mode<synchronous>, transform_indices = @transform_15, window_bounds = array<i64: 1, 64>}, {pipeline_mode = #tpu.pipeline_mode<synchronous>, transform_indices = @transform_16, window_bounds = array<i64: 64, 256>}, {pipeline_mode = #tpu.pipeline_mode<synchronous>, transform_indices = @transform_17, window_bounds = array<i64: 1, 256>}, {pipeline_mode = #tpu.pipeline_mode<synchronous>, transform_indices = @transform_18, window_bounds = array<i64: 256, 64>}, {pipeline_mode = #tpu.pipeline_mode<synchronous>, transform_indices = @transform_19, window_bounds = array<i64: 1, 64>}, {transform_indices = @transform_20, window_bounds = array<i64: 2, 16, 64>}]} {
    %c0 = arith.constant 0 : index
    %c0_0 = arith.constant 0 : index
    %c0_1 = arith.constant 0 : index
    %0 = vector.load %arg1[%c0, %c0_0, %c0_1] : memref<2x16x64xf32, #tpu.memory_space<vmem>>, vector<2x16x64xf32>
    %c0_2 = arith.constant 0 : index
    %c0_3 = arith.constant 0 : index
    %c0_4 = arith.constant 0 : index
    %1 = vector.load %arg2[%c0_2, %c0_3, %c0_4] : memref<2x6x64xf32, #tpu.memory_space<vmem>>, vector<2x6x64xf32>
    %2 = vector.extract_strided_slice %1 {offsets = [0, 0, 0], sizes = [2, 1, 64], strides = [1, 1, 1]} : vector<2x6x64xf32> to vector<2x1x64xf32>
    %3 = vector.extract_strided_slice %1 {offsets = [0, 1, 0], sizes = [2, 1, 64], strides = [1, 1, 1]} : vector<2x6x64xf32> to vector<2x1x64xf32>
    %4 = vector.extract_strided_slice %1 {offsets = [0, 2, 0], sizes = [2, 1, 64], strides = [1, 1, 1]} : vector<2x6x64xf32> to vector<2x1x64xf32>
    %5 = vector.extract_strided_slice %1 {offsets = [0, 3, 0], sizes = [2, 1, 64], strides = [1, 1, 1]} : vector<2x6x64xf32> to vector<2x1x64xf32>
    %6 = vector.extract_strided_slice %1 {offsets = [0, 4, 0], sizes = [2, 1, 64], strides = [1, 1, 1]} : vector<2x6x64xf32> to vector<2x1x64xf32>
    %7 = vector.extract_strided_slice %1 {offsets = [0, 5, 0], sizes = [2, 1, 64], strides = [1, 1, 1]} : vector<2x6x64xf32> to vector<2x1x64xf32>
    %cst = arith.constant dense<0.000000e+00> : vector<2x16xf32>
    %8 = vector.multi_reduction <add>, %0, %cst [2] : vector<2x16x64xf32> to vector<2x16xf32>
    %9 = vector.shape_cast %8 : vector<2x16xf32> to vector<2x16x1xf32>
    %cst_5 = arith.constant 6.400000e+01 : f32
    %10 = vector.broadcast %cst_5 : f32 to vector<2x16x1xf32>
    %11 = arith.divf %9, %10 : vector<2x16x1xf32>
    %12 = vector.broadcast %11 : vector<2x16x1xf32> to vector<2x16x64xf32>
    %13 = arith.subf %0, %12 : vector<2x16x64xf32>
    %14 = arith.mulf %13, %13 : vector<2x16x64xf32>
    %cst_6 = arith.constant dense<0.000000e+00> : vector<2x16xf32>
    %15 = vector.multi_reduction <add>, %14, %cst_6 [2] : vector<2x16x64xf32> to vector<2x16xf32>
    %16 = vector.shape_cast %15 : vector<2x16xf32> to vector<2x16x1xf32>
    %cst_7 = arith.constant 6.400000e+01 : f32
    %17 = vector.broadcast %cst_7 : f32 to vector<2x16x1xf32>
    %18 = arith.divf %16, %17 : vector<2x16x1xf32>
    %19 = vector.broadcast %11 : vector<2x16x1xf32> to vector<2x16x64xf32>
    %20 = arith.subf %0, %19 : vector<2x16x64xf32>
    %cst_8 = arith.constant 9.99999997E-7 : f32
    %21 = vector.broadcast %cst_8 : f32 to vector<2x16x1xf32>
    %22 = arith.addf %18, %21 : vector<2x16x1xf32>
    %23 = math.rsqrt %22 : vector<2x16x1xf32>
    %24 = vector.broadcast %23 : vector<2x16x1xf32> to vector<2x16x64xf32>
    %25 = arith.mulf %20, %24 : vector<2x16x64xf32>
    %cst_9 = arith.constant 1.000000e+00 : f32
    %26 = vector.broadcast %cst_9 : f32 to vector<2x1x64xf32>
    %27 = arith.addf %4, %26 : vector<2x1x64xf32>
    %28 = vector.broadcast %27 : vector<2x1x64xf32> to vector<2x16x64xf32>
    %29 = arith.mulf %25, %28 : vector<2x16x64xf32>
    %30 = vector.broadcast %6 : vector<2x1x64xf32> to vector<2x16x64xf32>
    %31 = arith.addf %29, %30 : vector<2x16x64xf32>
    %32 = vector.shape_cast %31 : vector<2x16x64xf32> to vector<32x64xf32>
    %33 = arith.truncf %32 : vector<32x64xf32> to vector<32x64xbf16>
    %c0_10 = arith.constant 0 : index
    %c0_11 = arith.constant 0 : index
    %34 = vector.load %arg4[%c0_10, %c0_11] : memref<64x1536xbf16, #tpu.memory_space<vmem>>, vector<64x1536xbf16>
    %cst_12 = arith.constant dense<0.000000e+00> : vector<32x1536xf32>
    %35 = tpu.matmul %33, %34, %cst_12 {dimension_numbers = #tpu.dot_dimension_numbers<[1], [0], [0], [1], [0, 0, 1, 1], [], []>} : vector<32x64xbf16>, vector<64x1536xbf16>, vector<32x1536xf32> -> vector<32x1536xf32>
    %c0_13 = arith.constant 0 : index
    %c0_14 = arith.constant 0 : index
    %36 = vector.load %arg5[%c0_13, %c0_14] : memref<1x1536xf32, #tpu.memory_space<vmem>>, vector<1x1536xf32>
    %37 = vector.broadcast %36 : vector<1x1536xf32> to vector<32x1536xf32>
    %38 = arith.addf %35, %37 : vector<32x1536xf32>
    %39 = arith.truncf %38 : vector<32x1536xf32> to vector<32x1536xbf16>
    %40 = vector.extract_strided_slice %39 {offsets = [0, 0], sizes = [32, 512], strides = [1, 1]} : vector<32x1536xbf16> to vector<32x512xbf16>
    %41 = vector.extract_strided_slice %39 {offsets = [0, 512], sizes = [32, 512], strides = [1, 1]} : vector<32x1536xbf16> to vector<32x512xbf16>
    %42 = vector.extract_strided_slice %39 {offsets = [0, 1024], sizes = [32, 512], strides = [1, 1]} : vector<32x1536xbf16> to vector<32x512xbf16>
    %43 = vector.extract_strided_slice %40 {offsets = [0, 0], sizes = [32, 128], strides = [1, 1]} : vector<32x512xbf16> to vector<32x128xbf16>
    %44 = vector.shape_cast %43 : vector<32x128xbf16> to vector<2x16x128xbf16>
    %45 = vector.extract_strided_slice %41 {offsets = [0, 0], sizes = [32, 128], strides = [1, 1]} : vector<32x512xbf16> to vector<32x128xbf16>
    %46 = vector.shape_cast %45 : vector<32x128xbf16> to vector<2x16x128xbf16>
    %47 = vector.extract_strided_slice %42 {offsets = [0, 0], sizes = [32, 128], strides = [1, 1]} : vector<32x512xbf16> to vector<32x128xbf16>
    %48 = vector.shape_cast %47 : vector<32x128xbf16> to vector<2x16x128xbf16>
    "tpu.trace_start"() <{level = 10 : i32, message = "bqd,bkd->bqk"}> : () -> ()
    %cst_15 = arith.constant dense<0.000000e+00> : vector<2x16x16xf32>
    %49 = tpu.matmul %44, %46, %cst_15 {dimension_numbers = #tpu.dot_dimension_numbers<[2], [2], [1], [1], [0, 0, 0, 1, 1, 1], [0], [0]>} : vector<2x16x128xbf16>, vector<2x16x128xbf16>, vector<2x16x16xf32> -> vector<2x16x16xf32>
    "tpu.trace_stop"() : () -> ()
    %cst_16 = arith.constant dense<0xFF800000> : vector<2x16xf32>
    %50 = vector.multi_reduction <maximumf>, %49, %cst_16 [2] : vector<2x16x16xf32> to vector<2x16xf32>
    %51 = vector.shape_cast %50 : vector<2x16xf32> to vector<2x16x1xf32>
    %52 = vector.broadcast %51 : vector<2x16x1xf32> to vector<2x16x16xf32>
    %53 = arith.subf %49, %52 : vector<2x16x16xf32>
    %54 = math.exp %53 : vector<2x16x16xf32>
    %cst_17 = arith.constant dense<0.000000e+00> : vector<2x16xf32>
    %55 = vector.multi_reduction <add>, %54, %cst_17 [2] : vector<2x16x16xf32> to vector<2x16xf32>
    %56 = vector.shape_cast %55 : vector<2x16xf32> to vector<2x16x1xf32>
    %57 = tpu.reciprocal %56 {approx = true} : vector<2x16x1xf32> -> vector<2x16x1xf32>
    %58 = vector.broadcast %57 : vector<2x16x1xf32> to vector<2x16x16xf32>
    %59 = arith.mulf %54, %58 : vector<2x16x16xf32>
    %60 = arith.truncf %59 : vector<2x16x16xf32> to vector<2x16x16xbf16>
    "tpu.trace_start"() <{level = 10 : i32, message = "bqk,bkd->bqd"}> : () -> ()
    %cst_18 = arith.constant dense<0.000000e+00> : vector<2x16x128xf32>
    %61 = tpu.matmul %60, %48, %cst_18 {dimension_numbers = #tpu.dot_dimension_numbers<[2], [1], [1], [2], [0, 0, 0, 1, 1, 2], [0], [0]>} : vector<2x16x16xbf16>, vector<2x16x128xbf16>, vector<2x16x128xf32> -> vector<2x16x128xf32>
    "tpu.trace_stop"() : () -> ()
    %62 = vector.shape_cast %61 : vector<2x16x128xf32> to vector<32x128xf32>
    %63 = vector.extract_strided_slice %40 {offsets = [0, 128], sizes = [32, 128], strides = [1, 1]} : vector<32x512xbf16> to vector<32x128xbf16>
    %64 = vector.shape_cast %63 : vector<32x128xbf16> to vector<2x16x128xbf16>
    %65 = vector.extract_strided_slice %41 {offsets = [0, 128], sizes = [32, 128], strides = [1, 1]} : vector<32x512xbf16> to vector<32x128xbf16>
    %66 = vector.shape_cast %65 : vector<32x128xbf16> to vector<2x16x128xbf16>
    %67 = vector.extract_strided_slice %42 {offsets = [0, 128], sizes = [32, 128], strides = [1, 1]} : vector<32x512xbf16> to vector<32x128xbf16>
    %68 = vector.shape_cast %67 : vector<32x128xbf16> to vector<2x16x128xbf16>
    "tpu.trace_start"() <{level = 10 : i32, message = "bqd,bkd->bqk"}> : () -> ()
    %cst_19 = arith.constant dense<0.000000e+00> : vector<2x16x16xf32>
    %69 = tpu.matmul %64, %66, %cst_19 {dimension_numbers = #tpu.dot_dimension_numbers<[2], [2], [1], [1], [0, 0, 0, 1, 1, 1], [0], [0]>} : vector<2x16x128xbf16>, vector<2x16x128xbf16>, vector<2x16x16xf32> -> vector<2x16x16xf32>
    "tpu.trace_stop"() : () -> ()
    %cst_20 = arith.constant dense<0xFF800000> : vector<2x16xf32>
    %70 = vector.multi_reduction <maximumf>, %69, %cst_20 [2] : vector<2x16x16xf32> to vector<2x16xf32>
    %71 = vector.shape_cast %70 : vector<2x16xf32> to vector<2x16x1xf32>
    %72 = vector.broadcast %71 : vector<2x16x1xf32> to vector<2x16x16xf32>
    %73 = arith.subf %69, %72 : vector<2x16x16xf32>
    %74 = math.exp %73 : vector<2x16x16xf32>
    %cst_21 = arith.constant dense<0.000000e+00> : vector<2x16xf32>
    %75 = vector.multi_reduction <add>, %74, %cst_21 [2] : vector<2x16x16xf32> to vector<2x16xf32>
    %76 = vector.shape_cast %75 : vector<2x16xf32> to vector<2x16x1xf32>
    %77 = tpu.reciprocal %76 {approx = true} : vector<2x16x1xf32> -> vector<2x16x1xf32>
    %78 = vector.broadcast %77 : vector<2x16x1xf32> to vector<2x16x16xf32>
    %79 = arith.mulf %74, %78 : vector<2x16x16xf32>
    %80 = arith.truncf %79 : vector<2x16x16xf32> to vector<2x16x16xbf16>
    "tpu.trace_start"() <{level = 10 : i32, message = "bqk,bkd->bqd"}> : () -> ()
    %cst_22 = arith.constant dense<0.000000e+00> : vector<2x16x128xf32>
    %81 = tpu.matmul %80, %68, %cst_22 {dimension_numbers = #tpu.dot_dimension_numbers<[2], [1], [1], [2], [0, 0, 0, 1, 1, 2], [0], [0]>} : vector<2x16x16xbf16>, vector<2x16x128xbf16>, vector<2x16x128xf32> -> vector<2x16x128xf32>
    "tpu.trace_stop"() : () -> ()
    %82 = vector.shape_cast %81 : vector<2x16x128xf32> to vector<32x128xf32>
    %83 = vector.extract_strided_slice %40 {offsets = [0, 256], sizes = [32, 128], strides = [1, 1]} : vector<32x512xbf16> to vector<32x128xbf16>
    %84 = vector.shape_cast %83 : vector<32x128xbf16> to vector<2x16x128xbf16>
    %85 = vector.extract_strided_slice %41 {offsets = [0, 256], sizes = [32, 128], strides = [1, 1]} : vector<32x512xbf16> to vector<32x128xbf16>
    %86 = vector.shape_cast %85 : vector<32x128xbf16> to vector<2x16x128xbf16>
    %87 = vector.extract_strided_slice %42 {offsets = [0, 256], sizes = [32, 128], strides = [1, 1]} : vector<32x512xbf16> to vector<32x128xbf16>
    %88 = vector.shape_cast %87 : vector<32x128xbf16> to vector<2x16x128xbf16>
    "tpu.trace_start"() <{level = 10 : i32, message = "bqd,bkd->bqk"}> : () -> ()
    %cst_23 = arith.constant dense<0.000000e+00> : vector<2x16x16xf32>
    %89 = tpu.matmul %84, %86, %cst_23 {dimension_numbers = #tpu.dot_dimension_numbers<[2], [2], [1], [1], [0, 0, 0, 1, 1, 1], [0], [0]>} : vector<2x16x128xbf16>, vector<2x16x128xbf16>, vector<2x16x16xf32> -> vector<2x16x16xf32>
    "tpu.trace_stop"() : () -> ()
    %cst_24 = arith.constant dense<0xFF800000> : vector<2x16xf32>
    %90 = vector.multi_reduction <maximumf>, %89, %cst_24 [2] : vector<2x16x16xf32> to vector<2x16xf32>
    %91 = vector.shape_cast %90 : vector<2x16xf32> to vector<2x16x1xf32>
    %92 = vector.broadcast %91 : vector<2x16x1xf32> to vector<2x16x16xf32>
    %93 = arith.subf %89, %92 : vector<2x16x16xf32>
    %94 = math.exp %93 : vector<2x16x16xf32>
    %cst_25 = arith.constant dense<0.000000e+00> : vector<2x16xf32>
    %95 = vector.multi_reduction <add>, %94, %cst_25 [2] : vector<2x16x16xf32> to vector<2x16xf32>
    %96 = vector.shape_cast %95 : vector<2x16xf32> to vector<2x16x1xf32>
    %97 = tpu.reciprocal %96 {approx = true} : vector<2x16x1xf32> -> vector<2x16x1xf32>
    %98 = vector.broadcast %97 : vector<2x16x1xf32> to vector<2x16x16xf32>
    %99 = arith.mulf %94, %98 : vector<2x16x16xf32>
    %100 = arith.truncf %99 : vector<2x16x16xf32> to vector<2x16x16xbf16>
    "tpu.trace_start"() <{level = 10 : i32, message = "bqk,bkd->bqd"}> : () -> ()
    %cst_26 = arith.constant dense<0.000000e+00> : vector<2x16x128xf32>
    %101 = tpu.matmul %100, %88, %cst_26 {dimension_numbers = #tpu.dot_dimension_numbers<[2], [1], [1], [2], [0, 0, 0, 1, 1, 2], [0], [0]>} : vector<2x16x16xbf16>, vector<2x16x128xbf16>, vector<2x16x128xf32> -> vector<2x16x128xf32>
    "tpu.trace_stop"() : () -> ()
    %102 = vector.shape_cast %101 : vector<2x16x128xf32> to vector<32x128xf32>
    %103 = vector.extract_strided_slice %40 {offsets = [0, 384], sizes = [32, 128], strides = [1, 1]} : vector<32x512xbf16> to vector<32x128xbf16>
    %104 = vector.shape_cast %103 : vector<32x128xbf16> to vector<2x16x128xbf16>
    %105 = vector.extract_strided_slice %41 {offsets = [0, 384], sizes = [32, 128], strides = [1, 1]} : vector<32x512xbf16> to vector<32x128xbf16>
    %106 = vector.shape_cast %105 : vector<32x128xbf16> to vector<2x16x128xbf16>
    %107 = vector.extract_strided_slice %42 {offsets = [0, 384], sizes = [32, 128], strides = [1, 1]} : vector<32x512xbf16> to vector<32x128xbf16>
    %108 = vector.shape_cast %107 : vector<32x128xbf16> to vector<2x16x128xbf16>
    "tpu.trace_start"() <{level = 10 : i32, message = "bqd,bkd->bqk"}> : () -> ()
    %cst_27 = arith.constant dense<0.000000e+00> : vector<2x16x16xf32>
    %109 = tpu.matmul %104, %106, %cst_27 {dimension_numbers = #tpu.dot_dimension_numbers<[2], [2], [1], [1], [0, 0, 0, 1, 1, 1], [0], [0]>} : vector<2x16x128xbf16>, vector<2x16x128xbf16>, vector<2x16x16xf32> -> vector<2x16x16xf32>
    "tpu.trace_stop"() : () -> ()
    %cst_28 = arith.constant dense<0xFF800000> : vector<2x16xf32>
    %110 = vector.multi_reduction <maximumf>, %109, %cst_28 [2] : vector<2x16x16xf32> to vector<2x16xf32>
    %111 = vector.shape_cast %110 : vector<2x16xf32> to vector<2x16x1xf32>
    %112 = vector.broadcast %111 : vector<2x16x1xf32> to vector<2x16x16xf32>
    %113 = arith.subf %109, %112 : vector<2x16x16xf32>
    %114 = math.exp %113 : vector<2x16x16xf32>
    %cst_29 = arith.constant dense<0.000000e+00> : vector<2x16xf32>
    %115 = vector.multi_reduction <add>, %114, %cst_29 [2] : vector<2x16x16xf32> to vector<2x16xf32>
    %116 = vector.shape_cast %115 : vector<2x16xf32> to vector<2x16x1xf32>
    %117 = tpu.reciprocal %116 {approx = true} : vector<2x16x1xf32> -> vector<2x16x1xf32>
    %118 = vector.broadcast %117 : vector<2x16x1xf32> to vector<2x16x16xf32>
    %119 = arith.mulf %114, %118 : vector<2x16x16xf32>
    %120 = arith.truncf %119 : vector<2x16x16xf32> to vector<2x16x16xbf16>
    "tpu.trace_start"() <{level = 10 : i32, message = "bqk,bkd->bqd"}> : () -> ()
    %cst_30 = arith.constant dense<0.000000e+00> : vector<2x16x128xf32>
    %121 = tpu.matmul %120, %108, %cst_30 {dimension_numbers = #tpu.dot_dimension_numbers<[2], [1], [1], [2], [0, 0, 0, 1, 1, 2], [0], [0]>} : vector<2x16x16xbf16>, vector<2x16x128xbf16>, vector<2x16x128xf32> -> vector<2x16x128xf32>
    "tpu.trace_stop"() : () -> ()
    %122 = vector.shape_cast %121 : vector<2x16x128xf32> to vector<32x128xf32>
    %123 = tpu.concatenate %62, %82, %102, %122 in 1 : vector<32x128xf32>, vector<32x128xf32>, vector<32x128xf32>, vector<32x128xf32> -> vector<32x512xf32>
    %124 = arith.truncf %123 : vector<32x512xf32> to vector<32x512xbf16>
    %c0_31 = arith.constant 0 : index
    %c0_32 = arith.constant 0 : index
    %125 = vector.load %arg6[%c0_31, %c0_32] : memref<512x64xbf16, #tpu.memory_space<vmem>>, vector<512x64xbf16>
    %cst_33 = arith.constant dense<0.000000e+00> : vector<32x64xf32>
    %126 = tpu.matmul %124, %125, %cst_33 {dimension_numbers = #tpu.dot_dimension_numbers<[1], [0], [0], [1], [0, 0, 1, 1], [], []>} : vector<32x512xbf16>, vector<512x64xbf16>, vector<32x64xf32> -> vector<32x64xf32>
    %c0_34 = arith.constant 0 : index
    %c0_35 = arith.constant 0 : index
    %127 = vector.load %arg7[%c0_34, %c0_35] : memref<1x64xf32, #tpu.memory_space<vmem>>, vector<1x64xf32>
    %128 = vector.broadcast %127 : vector<1x64xf32> to vector<32x64xf32>
    %129 = arith.addf %126, %128 : vector<32x64xf32>
    %130 = vector.shape_cast %129 : vector<32x64xf32> to vector<2x16x64xf32>
    %131 = vector.broadcast %2 : vector<2x1x64xf32> to vector<2x16x64xf32>
    %132 = arith.mulf %130, %131 : vector<2x16x64xf32>
    %133 = arith.addf %0, %132 : vector<2x16x64xf32>
    %cst_36 = arith.constant dense<0.000000e+00> : vector<2x16xf32>
    %134 = vector.multi_reduction <add>, %133, %cst_36 [2] : vector<2x16x64xf32> to vector<2x16xf32>
    %135 = vector.shape_cast %134 : vector<2x16xf32> to vector<2x16x1xf32>
    %cst_37 = arith.constant 6.400000e+01 : f32
    %136 = vector.broadcast %cst_37 : f32 to vector<2x16x1xf32>
    %137 = arith.divf %135, %136 : vector<2x16x1xf32>
    %138 = vector.broadcast %137 : vector<2x16x1xf32> to vector<2x16x64xf32>
    %139 = arith.subf %133, %138 : vector<2x16x64xf32>
    %140 = arith.mulf %139, %139 : vector<2x16x64xf32>
    %cst_38 = arith.constant dense<0.000000e+00> : vector<2x16xf32>
    %141 = vector.multi_reduction <add>, %140, %cst_38 [2] : vector<2x16x64xf32> to vector<2x16xf32>
    %142 = vector.shape_cast %141 : vector<2x16xf32> to vector<2x16x1xf32>
    %cst_39 = arith.constant 6.400000e+01 : f32
    %143 = vector.broadcast %cst_39 : f32 to vector<2x16x1xf32>
    %144 = arith.divf %142, %143 : vector<2x16x1xf32>
    %145 = vector.broadcast %137 : vector<2x16x1xf32> to vector<2x16x64xf32>
    %146 = arith.subf %133, %145 : vector<2x16x64xf32>
    %cst_40 = arith.constant 9.99999997E-7 : f32
    %147 = vector.broadcast %cst_40 : f32 to vector<2x16x1xf32>
    %148 = arith.addf %144, %147 : vector<2x16x1xf32>
    %149 = math.rsqrt %148 : vector<2x16x1xf32>
    %150 = vector.broadcast %149 : vector<2x16x1xf32> to vector<2x16x64xf32>
    %151 = arith.mulf %146, %150 : vector<2x16x64xf32>
    %c0_41 = arith.constant 0 : index
    %c0_42 = arith.constant 0 : index
    %152 = vector.load %arg8[%c0_41, %c0_42] : memref<1x64xf32, #tpu.memory_space<vmem>>, vector<1x64xf32>
    %153 = vector.shape_cast %152 : vector<1x64xf32> to vector<1x1x64xf32>
    %154 = vector.broadcast %153 : vector<1x1x64xf32> to vector<2x16x64xf32>
    %155 = arith.mulf %151, %154 : vector<2x16x64xf32>
    %c0_43 = arith.constant 0 : index
    %c0_44 = arith.constant 0 : index
    %156 = vector.load %arg9[%c0_43, %c0_44] : memref<1x64xf32, #tpu.memory_space<vmem>>, vector<1x64xf32>
    %157 = vector.shape_cast %156 : vector<1x64xf32> to vector<1x1x64xf32>
    %158 = vector.broadcast %157 : vector<1x1x64xf32> to vector<2x16x64xf32>
    %159 = arith.addf %155, %158 : vector<2x16x64xf32>
    %160 = vector.shape_cast %159 : vector<2x16x64xf32> to vector<32x64xf32>
    %161 = arith.truncf %160 : vector<32x64xf32> to vector<32x64xbf16>
    %c0_45 = arith.constant 0 : index
    %c0_46 = arith.constant 0 : index
    %162 = vector.load %arg10[%c0_45, %c0_46] : memref<64x512xbf16, #tpu.memory_space<vmem>>, vector<64x512xbf16>
    %cst_47 = arith.constant dense<0.000000e+00> : vector<32x512xf32>
    %163 = tpu.matmul %161, %162, %cst_47 {dimension_numbers = #tpu.dot_dimension_numbers<[1], [0], [0], [1], [0, 0, 1, 1], [], []>} : vector<32x64xbf16>, vector<64x512xbf16>, vector<32x512xf32> -> vector<32x512xf32>
    %c0_48 = arith.constant 0 : index
    %c0_49 = arith.constant 0 : index
    %164 = vector.load %arg11[%c0_48, %c0_49] : memref<1x512xf32, #tpu.memory_space<vmem>>, vector<1x512xf32>
    %165 = vector.broadcast %164 : vector<1x512xf32> to vector<32x512xf32>
    %166 = arith.addf %163, %165 : vector<32x512xf32>
    %167 = arith.truncf %166 : vector<32x512xf32> to vector<32x512xbf16>
    %c0_50 = arith.constant 0 : index
    %c0_51 = arith.constant 0 : index
    %168 = vector.load %arg3[%c0_50, %c0_51] : memref<32x32xf32, #tpu.memory_space<vmem>>, vector<32x32xf32>
    %169 = arith.truncf %168 : vector<32x32xf32> to vector<32x32xbf16>
    %c0_52 = arith.constant 0 : index
    %c0_53 = arith.constant 0 : index
    %170 = vector.load %arg12[%c0_52, %c0_53] : memref<32x1024xbf16, #tpu.memory_space<vmem>>, vector<32x1024xbf16>
    %cst_54 = arith.constant dense<0.000000e+00> : vector<32x1024xf32>
    %171 = tpu.matmul %169, %170, %cst_54 {dimension_numbers = #tpu.dot_dimension_numbers<[1], [0], [0], [1], [0, 0, 1, 1], [], []>} : vector<32x32xbf16>, vector<32x1024xbf16>, vector<32x1024xf32> -> vector<32x1024xf32>
    %c0_55 = arith.constant 0 : index
    %c0_56 = arith.constant 0 : index
    %172 = vector.load %arg13[%c0_55, %c0_56] : memref<1x1024xf32, #tpu.memory_space<vmem>>, vector<1x1024xf32>
    %173 = vector.broadcast %172 : vector<1x1024xf32> to vector<32x1024xf32>
    %174 = arith.addf %171, %173 : vector<32x1024xf32>
    %175 = arith.truncf %174 : vector<32x1024xf32> to vector<32x1024xbf16>
    %176 = vector.extract_strided_slice %175 {offsets = [0, 0], sizes = [32, 512], strides = [1, 1]} : vector<32x1024xbf16> to vector<32x512xbf16>
    %177 = vector.extract_strided_slice %175 {offsets = [0, 512], sizes = [32, 512], strides = [1, 1]} : vector<32x1024xbf16> to vector<32x512xbf16>
    %178 = vector.extract_strided_slice %167 {offsets = [0, 0], sizes = [32, 128], strides = [1, 1]} : vector<32x512xbf16> to vector<32x128xbf16>
    %179 = vector.shape_cast %178 : vector<32x128xbf16> to vector<2x16x128xbf16>
    %180 = vector.extract_strided_slice %176 {offsets = [0, 0], sizes = [32, 128], strides = [1, 1]} : vector<32x512xbf16> to vector<32x128xbf16>
    %181 = vector.shape_cast %180 : vector<32x128xbf16> to vector<2x16x128xbf16>
    %182 = vector.extract_strided_slice %177 {offsets = [0, 0], sizes = [32, 128], strides = [1, 1]} : vector<32x512xbf16> to vector<32x128xbf16>
    %183 = vector.shape_cast %182 : vector<32x128xbf16> to vector<2x16x128xbf16>
    "tpu.trace_start"() <{level = 10 : i32, message = "bqd,bkd->bqk"}> : () -> ()
    %cst_57 = arith.constant dense<0.000000e+00> : vector<2x16x16xf32>
    %184 = tpu.matmul %179, %181, %cst_57 {dimension_numbers = #tpu.dot_dimension_numbers<[2], [2], [1], [1], [0, 0, 0, 1, 1, 1], [0], [0]>} : vector<2x16x128xbf16>, vector<2x16x128xbf16>, vector<2x16x16xf32> -> vector<2x16x16xf32>
    "tpu.trace_stop"() : () -> ()
    %cst_58 = arith.constant dense<0xFF800000> : vector<2x16xf32>
    %185 = vector.multi_reduction <maximumf>, %184, %cst_58 [2] : vector<2x16x16xf32> to vector<2x16xf32>
    %186 = vector.shape_cast %185 : vector<2x16xf32> to vector<2x16x1xf32>
    %187 = vector.broadcast %186 : vector<2x16x1xf32> to vector<2x16x16xf32>
    %188 = arith.subf %184, %187 : vector<2x16x16xf32>
    %189 = math.exp %188 : vector<2x16x16xf32>
    %cst_59 = arith.constant dense<0.000000e+00> : vector<2x16xf32>
    %190 = vector.multi_reduction <add>, %189, %cst_59 [2] : vector<2x16x16xf32> to vector<2x16xf32>
    %191 = vector.shape_cast %190 : vector<2x16xf32> to vector<2x16x1xf32>
    %192 = tpu.reciprocal %191 {approx = true} : vector<2x16x1xf32> -> vector<2x16x1xf32>
    %193 = vector.broadcast %192 : vector<2x16x1xf32> to vector<2x16x16xf32>
    %194 = arith.mulf %189, %193 : vector<2x16x16xf32>
    %195 = arith.truncf %194 : vector<2x16x16xf32> to vector<2x16x16xbf16>
    "tpu.trace_start"() <{level = 10 : i32, message = "bqk,bkd->bqd"}> : () -> ()
    %cst_60 = arith.constant dense<0.000000e+00> : vector<2x16x128xf32>
    %196 = tpu.matmul %195, %183, %cst_60 {dimension_numbers = #tpu.dot_dimension_numbers<[2], [1], [1], [2], [0, 0, 0, 1, 1, 2], [0], [0]>} : vector<2x16x16xbf16>, vector<2x16x128xbf16>, vector<2x16x128xf32> -> vector<2x16x128xf32>
    "tpu.trace_stop"() : () -> ()
    %197 = vector.shape_cast %196 : vector<2x16x128xf32> to vector<32x128xf32>
    %198 = vector.extract_strided_slice %167 {offsets = [0, 128], sizes = [32, 128], strides = [1, 1]} : vector<32x512xbf16> to vector<32x128xbf16>
    %199 = vector.shape_cast %198 : vector<32x128xbf16> to vector<2x16x128xbf16>
    %200 = vector.extract_strided_slice %176 {offsets = [0, 128], sizes = [32, 128], strides = [1, 1]} : vector<32x512xbf16> to vector<32x128xbf16>
    %201 = vector.shape_cast %200 : vector<32x128xbf16> to vector<2x16x128xbf16>
    %202 = vector.extract_strided_slice %177 {offsets = [0, 128], sizes = [32, 128], strides = [1, 1]} : vector<32x512xbf16> to vector<32x128xbf16>
    %203 = vector.shape_cast %202 : vector<32x128xbf16> to vector<2x16x128xbf16>
    "tpu.trace_start"() <{level = 10 : i32, message = "bqd,bkd->bqk"}> : () -> ()
    %cst_61 = arith.constant dense<0.000000e+00> : vector<2x16x16xf32>
    %204 = tpu.matmul %199, %201, %cst_61 {dimension_numbers = #tpu.dot_dimension_numbers<[2], [2], [1], [1], [0, 0, 0, 1, 1, 1], [0], [0]>} : vector<2x16x128xbf16>, vector<2x16x128xbf16>, vector<2x16x16xf32> -> vector<2x16x16xf32>
    "tpu.trace_stop"() : () -> ()
    %cst_62 = arith.constant dense<0xFF800000> : vector<2x16xf32>
    %205 = vector.multi_reduction <maximumf>, %204, %cst_62 [2] : vector<2x16x16xf32> to vector<2x16xf32>
    %206 = vector.shape_cast %205 : vector<2x16xf32> to vector<2x16x1xf32>
    %207 = vector.broadcast %206 : vector<2x16x1xf32> to vector<2x16x16xf32>
    %208 = arith.subf %204, %207 : vector<2x16x16xf32>
    %209 = math.exp %208 : vector<2x16x16xf32>
    %cst_63 = arith.constant dense<0.000000e+00> : vector<2x16xf32>
    %210 = vector.multi_reduction <add>, %209, %cst_63 [2] : vector<2x16x16xf32> to vector<2x16xf32>
    %211 = vector.shape_cast %210 : vector<2x16xf32> to vector<2x16x1xf32>
    %212 = tpu.reciprocal %211 {approx = true} : vector<2x16x1xf32> -> vector<2x16x1xf32>
    %213 = vector.broadcast %212 : vector<2x16x1xf32> to vector<2x16x16xf32>
    %214 = arith.mulf %209, %213 : vector<2x16x16xf32>
    %215 = arith.truncf %214 : vector<2x16x16xf32> to vector<2x16x16xbf16>
    "tpu.trace_start"() <{level = 10 : i32, message = "bqk,bkd->bqd"}> : () -> ()
    %cst_64 = arith.constant dense<0.000000e+00> : vector<2x16x128xf32>
    %216 = tpu.matmul %215, %203, %cst_64 {dimension_numbers = #tpu.dot_dimension_numbers<[2], [1], [1], [2], [0, 0, 0, 1, 1, 2], [0], [0]>} : vector<2x16x16xbf16>, vector<2x16x128xbf16>, vector<2x16x128xf32> -> vector<2x16x128xf32>
    "tpu.trace_stop"() : () -> ()
    %217 = vector.shape_cast %216 : vector<2x16x128xf32> to vector<32x128xf32>
    %218 = vector.extract_strided_slice %167 {offsets = [0, 256], sizes = [32, 128], strides = [1, 1]} : vector<32x512xbf16> to vector<32x128xbf16>
    %219 = vector.shape_cast %218 : vector<32x128xbf16> to vector<2x16x128xbf16>
    %220 = vector.extract_strided_slice %176 {offsets = [0, 256], sizes = [32, 128], strides = [1, 1]} : vector<32x512xbf16> to vector<32x128xbf16>
    %221 = vector.shape_cast %220 : vector<32x128xbf16> to vector<2x16x128xbf16>
    %222 = vector.extract_strided_slice %177 {offsets = [0, 256], sizes = [32, 128], strides = [1, 1]} : vector<32x512xbf16> to vector<32x128xbf16>
    %223 = vector.shape_cast %222 : vector<32x128xbf16> to vector<2x16x128xbf16>
    "tpu.trace_start"() <{level = 10 : i32, message = "bqd,bkd->bqk"}> : () -> ()
    %cst_65 = arith.constant dense<0.000000e+00> : vector<2x16x16xf32>
    %224 = tpu.matmul %219, %221, %cst_65 {dimension_numbers = #tpu.dot_dimension_numbers<[2], [2], [1], [1], [0, 0, 0, 1, 1, 1], [0], [0]>} : vector<2x16x128xbf16>, vector<2x16x128xbf16>, vector<2x16x16xf32> -> vector<2x16x16xf32>
    "tpu.trace_stop"() : () -> ()
    %cst_66 = arith.constant dense<0xFF800000> : vector<2x16xf32>
    %225 = vector.multi_reduction <maximumf>, %224, %cst_66 [2] : vector<2x16x16xf32> to vector<2x16xf32>
    %226 = vector.shape_cast %225 : vector<2x16xf32> to vector<2x16x1xf32>
    %227 = vector.broadcast %226 : vector<2x16x1xf32> to vector<2x16x16xf32>
    %228 = arith.subf %224, %227 : vector<2x16x16xf32>
    %229 = math.exp %228 : vector<2x16x16xf32>
    %cst_67 = arith.constant dense<0.000000e+00> : vector<2x16xf32>
    %230 = vector.multi_reduction <add>, %229, %cst_67 [2] : vector<2x16x16xf32> to vector<2x16xf32>
    %231 = vector.shape_cast %230 : vector<2x16xf32> to vector<2x16x1xf32>
    %232 = tpu.reciprocal %231 {approx = true} : vector<2x16x1xf32> -> vector<2x16x1xf32>
    %233 = vector.broadcast %232 : vector<2x16x1xf32> to vector<2x16x16xf32>
    %234 = arith.mulf %229, %233 : vector<2x16x16xf32>
    %235 = arith.truncf %234 : vector<2x16x16xf32> to vector<2x16x16xbf16>
    "tpu.trace_start"() <{level = 10 : i32, message = "bqk,bkd->bqd"}> : () -> ()
    %cst_68 = arith.constant dense<0.000000e+00> : vector<2x16x128xf32>
    %236 = tpu.matmul %235, %223, %cst_68 {dimension_numbers = #tpu.dot_dimension_numbers<[2], [1], [1], [2], [0, 0, 0, 1, 1, 2], [0], [0]>} : vector<2x16x16xbf16>, vector<2x16x128xbf16>, vector<2x16x128xf32> -> vector<2x16x128xf32>
    "tpu.trace_stop"() : () -> ()
    %237 = vector.shape_cast %236 : vector<2x16x128xf32> to vector<32x128xf32>
    %238 = vector.extract_strided_slice %167 {offsets = [0, 384], sizes = [32, 128], strides = [1, 1]} : vector<32x512xbf16> to vector<32x128xbf16>
    %239 = vector.shape_cast %238 : vector<32x128xbf16> to vector<2x16x128xbf16>
    %240 = vector.extract_strided_slice %176 {offsets = [0, 384], sizes = [32, 128], strides = [1, 1]} : vector<32x512xbf16> to vector<32x128xbf16>
    %241 = vector.shape_cast %240 : vector<32x128xbf16> to vector<2x16x128xbf16>
    %242 = vector.extract_strided_slice %177 {offsets = [0, 384], sizes = [32, 128], strides = [1, 1]} : vector<32x512xbf16> to vector<32x128xbf16>
    %243 = vector.shape_cast %242 : vector<32x128xbf16> to vector<2x16x128xbf16>
    "tpu.trace_start"() <{level = 10 : i32, message = "bqd,bkd->bqk"}> : () -> ()
    %cst_69 = arith.constant dense<0.000000e+00> : vector<2x16x16xf32>
    %244 = tpu.matmul %239, %241, %cst_69 {dimension_numbers = #tpu.dot_dimension_numbers<[2], [2], [1], [1], [0, 0, 0, 1, 1, 1], [0], [0]>} : vector<2x16x128xbf16>, vector<2x16x128xbf16>, vector<2x16x16xf32> -> vector<2x16x16xf32>
    "tpu.trace_stop"() : () -> ()
    %cst_70 = arith.constant dense<0xFF800000> : vector<2x16xf32>
    %245 = vector.multi_reduction <maximumf>, %244, %cst_70 [2] : vector<2x16x16xf32> to vector<2x16xf32>
    %246 = vector.shape_cast %245 : vector<2x16xf32> to vector<2x16x1xf32>
    %247 = vector.broadcast %246 : vector<2x16x1xf32> to vector<2x16x16xf32>
    %248 = arith.subf %244, %247 : vector<2x16x16xf32>
    %249 = math.exp %248 : vector<2x16x16xf32>
    %cst_71 = arith.constant dense<0.000000e+00> : vector<2x16xf32>
    %250 = vector.multi_reduction <add>, %249, %cst_71 [2] : vector<2x16x16xf32> to vector<2x16xf32>
    %251 = vector.shape_cast %250 : vector<2x16xf32> to vector<2x16x1xf32>
    %252 = tpu.reciprocal %251 {approx = true} : vector<2x16x1xf32> -> vector<2x16x1xf32>
    %253 = vector.broadcast %252 : vector<2x16x1xf32> to vector<2x16x16xf32>
    %254 = arith.mulf %249, %253 : vector<2x16x16xf32>
    %255 = arith.truncf %254 : vector<2x16x16xf32> to vector<2x16x16xbf16>
    "tpu.trace_start"() <{level = 10 : i32, message = "bqk,bkd->bqd"}> : () -> ()
    %cst_72 = arith.constant dense<0.000000e+00> : vector<2x16x128xf32>
    %256 = tpu.matmul %255, %243, %cst_72 {dimension_numbers = #tpu.dot_dimension_numbers<[2], [1], [1], [2], [0, 0, 0, 1, 1, 2], [0], [0]>} : vector<2x16x16xbf16>, vector<2x16x128xbf16>, vector<2x16x128xf32> -> vector<2x16x128xf32>
    "tpu.trace_stop"() : () -> ()
    %257 = vector.shape_cast %256 : vector<2x16x128xf32> to vector<32x128xf32>
    %258 = tpu.concatenate %197, %217, %237, %257 in 1 : vector<32x128xf32>, vector<32x128xf32>, vector<32x128xf32>, vector<32x128xf32> -> vector<32x512xf32>
    %259 = arith.truncf %258 : vector<32x512xf32> to vector<32x512xbf16>
    %c0_73 = arith.constant 0 : index
    %c0_74 = arith.constant 0 : index
    %260 = vector.load %arg14[%c0_73, %c0_74] : memref<512x64xbf16, #tpu.memory_space<vmem>>, vector<512x64xbf16>
    %cst_75 = arith.constant dense<0.000000e+00> : vector<32x64xf32>
    %261 = tpu.matmul %259, %260, %cst_75 {dimension_numbers = #tpu.dot_dimension_numbers<[1], [0], [0], [1], [0, 0, 1, 1], [], []>} : vector<32x512xbf16>, vector<512x64xbf16>, vector<32x64xf32> -> vector<32x64xf32>
    %c0_76 = arith.constant 0 : index
    %c0_77 = arith.constant 0 : index
    %262 = vector.load %arg15[%c0_76, %c0_77] : memref<1x64xf32, #tpu.memory_space<vmem>>, vector<1x64xf32>
    %263 = vector.broadcast %262 : vector<1x64xf32> to vector<32x64xf32>
    %264 = arith.addf %261, %263 : vector<32x64xf32>
    %265 = vector.shape_cast %264 : vector<32x64xf32> to vector<2x16x64xf32>
    %c0_78 = arith.constant 0 : index
    %c0_79 = arith.constant 0 : index
    %266 = vector.load %arg16[%c0_78, %c0_79] : memref<1x64xf32, #tpu.memory_space<vmem>>, vector<1x64xf32>
    %267 = vector.shape_cast %266 : vector<1x64xf32> to vector<1x1x64xf32>
    %268 = vector.broadcast %267 : vector<1x1x64xf32> to vector<2x16x64xf32>
    %269 = arith.mulf %265, %268 : vector<2x16x64xf32>
    %270 = arith.addf %133, %269 : vector<2x16x64xf32>
    %cst_80 = arith.constant dense<0.000000e+00> : vector<2x16xf32>
    %271 = vector.multi_reduction <add>, %270, %cst_80 [2] : vector<2x16x64xf32> to vector<2x16xf32>
    %272 = vector.shape_cast %271 : vector<2x16xf32> to vector<2x16x1xf32>
    %cst_81 = arith.constant 6.400000e+01 : f32
    %273 = vector.broadcast %cst_81 : f32 to vector<2x16x1xf32>
    %274 = arith.divf %272, %273 : vector<2x16x1xf32>
    %275 = vector.broadcast %274 : vector<2x16x1xf32> to vector<2x16x64xf32>
    %276 = arith.subf %270, %275 : vector<2x16x64xf32>
    %277 = arith.mulf %276, %276 : vector<2x16x64xf32>
    %cst_82 = arith.constant dense<0.000000e+00> : vector<2x16xf32>
    %278 = vector.multi_reduction <add>, %277, %cst_82 [2] : vector<2x16x64xf32> to vector<2x16xf32>
    %279 = vector.shape_cast %278 : vector<2x16xf32> to vector<2x16x1xf32>
    %cst_83 = arith.constant 6.400000e+01 : f32
    %280 = vector.broadcast %cst_83 : f32 to vector<2x16x1xf32>
    %281 = arith.divf %279, %280 : vector<2x16x1xf32>
    %282 = vector.broadcast %274 : vector<2x16x1xf32> to vector<2x16x64xf32>
    %283 = arith.subf %270, %282 : vector<2x16x64xf32>
    %cst_84 = arith.constant 9.99999997E-7 : f32
    %284 = vector.broadcast %cst_84 : f32 to vector<2x16x1xf32>
    %285 = arith.addf %281, %284 : vector<2x16x1xf32>
    %286 = math.rsqrt %285 : vector<2x16x1xf32>
    %287 = vector.broadcast %286 : vector<2x16x1xf32> to vector<2x16x64xf32>
    %288 = arith.mulf %283, %287 : vector<2x16x64xf32>
    %cst_85 = arith.constant 1.000000e+00 : f32
    %289 = vector.broadcast %cst_85 : f32 to vector<2x1x64xf32>
    %290 = arith.addf %5, %289 : vector<2x1x64xf32>
    %291 = vector.broadcast %290 : vector<2x1x64xf32> to vector<2x16x64xf32>
    %292 = arith.mulf %288, %291 : vector<2x16x64xf32>
    %293 = vector.broadcast %7 : vector<2x1x64xf32> to vector<2x16x64xf32>
    %294 = arith.addf %292, %293 : vector<2x16x64xf32>
    %295 = vector.shape_cast %294 : vector<2x16x64xf32> to vector<32x64xf32>
    %296 = arith.truncf %295 : vector<32x64xf32> to vector<32x64xbf16>
    %c0_86 = arith.constant 0 : index
    %c0_87 = arith.constant 0 : index
    %297 = vector.load %arg17[%c0_86, %c0_87] : memref<64x256xbf16, #tpu.memory_space<vmem>>, vector<64x256xbf16>
    %cst_88 = arith.constant dense<0.000000e+00> : vector<32x256xf32>
    %298 = tpu.matmul %296, %297, %cst_88 {dimension_numbers = #tpu.dot_dimension_numbers<[1], [0], [0], [1], [0, 0, 1, 1], [], []>} : vector<32x64xbf16>, vector<64x256xbf16>, vector<32x256xf32> -> vector<32x256xf32>
    %c0_89 = arith.constant 0 : index
    %c0_90 = arith.constant 0 : index
    %299 = vector.load %arg18[%c0_89, %c0_90] : memref<1x256xf32, #tpu.memory_space<vmem>>, vector<1x256xf32>
    %300 = vector.broadcast %299 : vector<1x256xf32> to vector<32x256xf32>
    %301 = arith.addf %298, %300 : vector<32x256xf32>
    %302 = arith.mulf %301, %301 : vector<32x256xf32>
    %303 = arith.mulf %301, %302 : vector<32x256xf32>
    %cst_91 = arith.constant 4.471500e-02 : f32
    %304 = vector.broadcast %cst_91 : f32 to vector<32x256xf32>
    %305 = arith.mulf %304, %303 : vector<32x256xf32>
    %306 = arith.addf %301, %305 : vector<32x256xf32>
    %cst_92 = arith.constant 0.797884583 : f32
    %307 = vector.broadcast %cst_92 : f32 to vector<32x256xf32>
    %308 = arith.mulf %307, %306 : vector<32x256xf32>
    %309 = math.tanh %308 : vector<32x256xf32>
    %cst_93 = arith.constant 1.000000e+00 : f32
    %310 = vector.broadcast %cst_93 : f32 to vector<32x256xf32>
    %311 = arith.addf %310, %309 : vector<32x256xf32>
    %cst_94 = arith.constant 5.000000e-01 : f32
    %312 = vector.broadcast %cst_94 : f32 to vector<32x256xf32>
    %313 = arith.mulf %312, %311 : vector<32x256xf32>
    %314 = arith.mulf %301, %313 : vector<32x256xf32>
    %315 = arith.truncf %314 : vector<32x256xf32> to vector<32x256xbf16>
    %c0_95 = arith.constant 0 : index
    %c0_96 = arith.constant 0 : index
    %316 = vector.load %arg19[%c0_95, %c0_96] : memref<256x64xbf16, #tpu.memory_space<vmem>>, vector<256x64xbf16>
    %cst_97 = arith.constant dense<0.000000e+00> : vector<32x64xf32>
    %317 = tpu.matmul %315, %316, %cst_97 {dimension_numbers = #tpu.dot_dimension_numbers<[1], [0], [0], [1], [0, 0, 1, 1], [], []>} : vector<32x256xbf16>, vector<256x64xbf16>, vector<32x64xf32> -> vector<32x64xf32>
    %c0_98 = arith.constant 0 : index
    %c0_99 = arith.constant 0 : index
    %318 = vector.load %arg20[%c0_98, %c0_99] : memref<1x64xf32, #tpu.memory_space<vmem>>, vector<1x64xf32>
    %319 = vector.broadcast %318 : vector<1x64xf32> to vector<32x64xf32>
    %320 = arith.addf %317, %319 : vector<32x64xf32>
    %321 = vector.shape_cast %320 : vector<32x64xf32> to vector<2x16x64xf32>
    %322 = vector.broadcast %3 : vector<2x1x64xf32> to vector<2x16x64xf32>
    %323 = arith.mulf %321, %322 : vector<2x16x64xf32>
    %324 = arith.addf %270, %323 : vector<2x16x64xf32>
    %c0_100 = arith.constant 0 : index
    %c0_101 = arith.constant 0 : index
    %c0_102 = arith.constant 0 : index
    %325 = vector.load %arg21[%c0_100, %c0_101, %c0_102] : memref<2x16x64xf32, #tpu.memory_space<vmem>>, vector<2x16x64xf32>
    tpu.vector_store %arg21[%c0_100, %c0_101, %c0_102], %324 {strides = array<i32>} : memref<2x16x64xf32, #tpu.memory_space<vmem>>, vector<2x16x64xf32>,
    return
  }
  func.func @transform_0(%arg0: i32) -> (i32, i32, i32) {
    %c0_i32 = arith.constant 0 : i32
    %c0_i32_0 = arith.constant 0 : i32
    %c0_i32_1 = arith.constant 0 : i32
    return %arg0, %c0_i32, %c0_i32_0 : i32, i32, i32
  }
  func.func @transform_1(%arg0: i32) -> (i32, i32, i32) {
    %c0_i32 = arith.constant 0 : i32
    %c0_i32_0 = arith.constant 0 : i32
    %c0_i32_1 = arith.constant 0 : i32
    return %arg0, %c0_i32, %c0_i32_0 : i32, i32, i32
  }
  func.func @transform_2(%arg0: i32) -> (i32, i32) {
    %c0_i32 = arith.constant 0 : i32
    %c0_i32_0 = arith.constant 0 : i32
    return %arg0, %c0_i32 : i32, i32
  }
  func.func @transform_3(%arg0: i32) -> (i32, i32) {
    %c0_i32 = arith.constant 0 : i32
    %c0_i32_0 = arith.constant 0 : i32
    %c0_i32_1 = arith.constant 0 : i32
    return %c0_i32, %c0_i32_0 : i32, i32
  }
  func.func @transform_4(%arg0: i32) -> (i32, i32) {
    %c0_i32 = arith.constant 0 : i32
    %c0_i32_0 = arith.constant 0 : i32
    %c0_i32_1 = arith.constant 0 : i32
    return %c0_i32, %c0_i32_0 : i32, i32
  }
  func.func @transform_5(%arg0: i32) -> (i32, i32) {
    %c0_i32 = arith.constant 0 : i32
    %c0_i32_0 = arith.constant 0 : i32
    %c0_i32_1 = arith.constant 0 : i32
    return %c0_i32, %c0_i32_0 : i32, i32
  }
  func.func @transform_6(%arg0: i32) -> (i32, i32) {
    %c0_i32 = arith.constant 0 : i32
    %c0_i32_0 = arith.constant 0 : i32
    %c0_i32_1 = arith.constant 0 : i32
    return %c0_i32, %c0_i32_0 : i32, i32
  }
  func.func @transform_7(%arg0: i32) -> (i32, i32) {
    %c0_i32 = arith.constant 0 : i32
    %c0_i32_0 = arith.constant 0 : i32
    %c0_i32_1 = arith.constant 0 : i32
    return %c0_i32, %c0_i32_0 : i32, i32
  }
  func.func @transform_8(%arg0: i32) -> (i32, i32) {
    %c0_i32 = arith.constant 0 : i32
    %c0_i32_0 = arith.constant 0 : i32
    %c0_i32_1 = arith.constant 0 : i32
    return %c0_i32, %c0_i32_0 : i32, i32
  }
  func.func @transform_9(%arg0: i32) -> (i32, i32) {
    %c0_i32 = arith.constant 0 : i32
    %c0_i32_0 = arith.constant 0 : i32
    %c0_i32_1 = arith.constant 0 : i32
    return %c0_i32, %c0_i32_0 : i32, i32
  }
  func.func @transform_10(%arg0: i32) -> (i32, i32) {
    %c0_i32 = arith.constant 0 : i32
    %c0_i32_0 = arith.constant 0 : i32
    %c0_i32_1 = arith.constant 0 : i32
    return %c0_i32, %c0_i32_0 : i32, i32
  }
  func.func @transform_11(%arg0: i32) -> (i32, i32) {
    %c0_i32 = arith.constant 0 : i32
    %c0_i32_0 = arith.constant 0 : i32
    %c0_i32_1 = arith.constant 0 : i32
    return %c0_i32, %c0_i32_0 : i32, i32
  }
  func.func @transform_12(%arg0: i32) -> (i32, i32) {
    %c0_i32 = arith.constant 0 : i32
    %c0_i32_0 = arith.constant 0 : i32
    %c0_i32_1 = arith.constant 0 : i32
    return %c0_i32, %c0_i32_0 : i32, i32
  }
  func.func @transform_13(%arg0: i32) -> (i32, i32) {
    %c0_i32 = arith.constant 0 : i32
    %c0_i32_0 = arith.constant 0 : i32
    %c0_i32_1 = arith.constant 0 : i32
    return %c0_i32, %c0_i32_0 : i32, i32
  }
  func.func @transform_14(%arg0: i32) -> (i32, i32) {
    %c0_i32 = arith.constant 0 : i32
    %c0_i32_0 = arith.constant 0 : i32
    %c0_i32_1 = arith.constant 0 : i32
    return %c0_i32, %c0_i32_0 : i32, i32
  }
  func.func @transform_15(%arg0: i32) -> (i32, i32) {
    %c0_i32 = arith.constant 0 : i32
    %c0_i32_0 = arith.constant 0 : i32
    %c0_i32_1 = arith.constant 0 : i32
    return %c0_i32, %c0_i32_0 : i32, i32
  }
  func.func @transform_16(%arg0: i32) -> (i32, i32) {
    %c0_i32 = arith.constant 0 : i32
    %c0_i32_0 = arith.constant 0 : i32
    %c0_i32_1 = arith.constant 0 : i32
    return %c0_i32, %c0_i32_0 : i32, i32
  }
  func.func @transform_17(%arg0: i32) -> (i32, i32) {
    %c0_i32 = arith.constant 0 : i32
    %c0_i32_0 = arith.constant 0 : i32
    %c0_i32_1 = arith.constant 0 : i32
    return %c0_i32, %c0_i32_0 : i32, i32
  }
  func.func @transform_18(%arg0: i32) -> (i32, i32) {
    %c0_i32 = arith.constant 0 : i32
    %c0_i32_0 = arith.constant 0 : i32
    %c0_i32_1 = arith.constant 0 : i32
    return %c0_i32, %c0_i32_0 : i32, i32
  }
  func.func @transform_19(%arg0: i32) -> (i32, i32) {
    %c0_i32 = arith.constant 0 : i32
    %c0_i32_0 = arith.constant 0 : i32
    %c0_i32_1 = arith.constant 0 : i32
    return %c0_i32, %c0_i32_0 : i32, i32
  }
  func.func @transform_20(%arg0: i32) -> (i32, i32, i32) {
    %c0_i32 = arith.constant 0 : i32
    %c0_i32_0 = arith.constant 0 : i32
    %c0_i32_1 = arith.constant 0 : i32
    return %arg0, %c0_i32, %c0_i32_0 : i32, i32, i32
  }
}

</mosaic_0001>

<llo_original>
// kernel: fastvar_cross_attn_block.1
$region0: #{fastvar_cross_attn_block.1}
  #allocation0 [shape = 'u32[]', space=smem, size = 0x4, offset = 0x4, fixed_abs, tag = 'smem constant byte address 0x4 - core index']
  #allocation1 [shape = 'u32[144,128]{1,0:T(1,128)}', space=vmem, size = 0x12000, scoped, tag = 'internal scratch']
  %s0 = inlined_call_operand.vmem [shape: f32[2,16,64], index: 0, kind: input, shape index: {}]
  %s1 = inlined_call_operand.vmem [shape: f32[2,6,64], index: 1, kind: input, shape index: {}]
  %s2 = inlined_call_operand.hbm [shape: f32[32,32], index: 2, kind: input, shape index: {}]
  %s3 = inlined_call_operand.vmem [shape: bf16[64,1536], index: 3, kind: input, shape index: {}]
  %s4 = inlined_call_operand.hbm [shape: f32[1,1536], index: 4, kind: input, shape index: {}]
  %s5 = inlined_call_operand.vmem [shape: bf16[512,64], index: 5, kind: input, shape index: {}]
  %s6 = inlined_call_operand.hbm [shape: f32[1,64], index: 6, kind: input, shape index: {}]
  %s7 = inlined_call_operand.hbm [shape: f32[1,64], index: 7, kind: input, shape index: {}]
  %s8 = inlined_call_operand.hbm [shape: f32[1,64], index: 8, kind: input, shape index: {}]
  %s9 = inlined_call_operand.vmem [shape: bf16[64,512], index: 9, kind: input, shape index: {}]
  %s10 = inlined_call_operand.hbm [shape: f32[1,512], index: 10, kind: input, shape index: {}]
  %s11 = inlined_call_operand.vmem [shape: bf16[32,1024], index: 11, kind: input, shape index: {}]
  %s12 = inlined_call_operand.hbm [shape: f32[1,1024], index: 12, kind: input, shape index: {}]
  %s13 = inlined_call_operand.vmem [shape: bf16[512,64], index: 13, kind: input, shape index: {}]
  %s14 = inlined_call_operand.hbm [shape: f32[1,64], index: 14, kind: input, shape index: {}]
  %s15 = inlined_call_operand.hbm [shape: f32[1,64], index: 15, kind: input, shape index: {}]
  %s16 = inlined_call_operand.vmem [shape: bf16[64,256], index: 16, kind: input, shape index: {}]
  %s17 = inlined_call_operand.vmem [shape: f32[1,256], index: 17, kind: input, shape index: {}]
  %s18 = inlined_call_operand.vmem [shape: bf16[256,64], index: 18, kind: input, shape index: {}]
  %s19 = inlined_call_operand.hbm [shape: f32[1,64], index: 19, kind: input, shape index: {}]
  %s20 = inlined_call_operand.hbm [shape: f32[2,16,64], index: 20, kind: output, shape index: {}]
  %s21 = sld [smem:[#allocation0]]
  $region130: #{fastvar_cross_attn_block.1} parent=0
    _
  %s23 = ssub.s32 1, %s21
  %s24 = scalar_select 0, %s23, %s21
  $region1: #{fastvar_cross_attn_block.1} parent=0
    #allocation2 [shape = 'u8[16384]{0}', space=vmem, size = 0x4000, scoped, tag = 'input window, operand 2, single buffered']
    #allocation3 [shape = 's32[1]{0}', space=sflag, size = 0x4, scoped, tag = 'scoped memory for fastvar_cross_attn_block.1']
    #allocation4 [shape = 's32[1]{0}', space=sflag, size = 0x4, scoped, tag = 'scoped memory for fastvar_cross_attn_block.1']
    #allocation5 [shape = 'u8[6144]{0}', space=vmem, size = 0x1800, scoped, tag = 'input window, operand 4, single buffered']
    #allocation6 [shape = 's32[1]{0}', space=sflag, size = 0x4, scoped, tag = 'scoped memory for fastvar_cross_attn_block.1']
    #allocation7 [shape = 'u8[512]{0}', space=vmem, size = 0x400, scoped, tag = 'input window, operand 6, single buffered']
    #allocation8 [shape = 'u8[512]{0}', space=vmem, size = 0x400, scoped, tag = 'input window, operand 7, single buffered']
    #allocation9 [shape = 's32[1]{0}', space=sflag, size = 0x4, scoped, tag = 'scoped memory for fastvar_cross_attn_block.1']
    #allocation10 [shape = 'u8[512]{0}', space=vmem, size = 0x400, scoped, tag = 'input window, operand 8, single buffered']
    #allocation11 [shape = 'u8[2048]{0}', space=vmem, size = 0x800, scoped, tag = 'input window, operand 10, single buffered']
    #allocation12 [shape = 's32[1]{0}', space=sflag, size = 0x4, scoped, tag = 'scoped memory for fastvar_cross_attn_block.1']
    #allocation13 [shape = 'u8[4096]{0}', space=vmem, size = 0x1000, scoped, tag = 'input window, operand 12, single buffered']
    #allocation14 [shape = 'u8[512]{0}', space=vmem, size = 0x400, scoped, tag = 'input window, operand 14, single buffered']
    #allocation15 [shape = 's32[1]{0}', space=sflag, size = 0x4, scoped, tag = 'scoped memory for fastvar_cross_attn_block.1']
    #allocation16 [shape = 'u8[512]{0}', space=vmem, size = 0x400, scoped, tag = 'input window, operand 15, single buffered']
    #allocation17 [shape = 'u8[512]{0}', space=vmem, size = 0x400, scoped, tag = 'input window, operand 19, single buffered']
    #allocation18 [shape = 's32[1]{0}', space=sflag, size = 0x4, scoped, tag = 'scoped memory for fastvar_cross_attn_block.1']
    #allocation19 [shape = 'u8[16384]{0}', space=vmem, size = 0x4000, scoped, tag = 'output window, operand 0, single buffered']
    %25 = vsyncpa [#allocation3], 0
    %26 = vsyncpa [#allocation6], 0
    %27 = vsyncpa [#allocation9], 0
    %28 = vsyncpa [#allocation12], 0
    %29 = vsyncpa [#allocation15], 0
    %30 = vsyncpa [#allocation18], 0
    %31 = vsyncpa [#allocation4], 0
    // Predicated region
    $region2: #{fastvar_cross_attn_block.1} parent=1 // pred_check
      _
    $region3: #{fastvar_cross_attn_block.1} parent=1 // pred_check_branch
      %33 = sbr.rel (0) target = $region5
    $region4: #{fastvar_cross_attn_block.1} parent=1 // pred_region
      _
    $region5: #{fastvar_cross_attn_block.1} parent=1 // pred_fallthru
      _
    // Predicated region
    $region6: #{fastvar_cross_attn_block.1} parent=1 // pred_check
      _
    $region7: #{fastvar_cross_attn_block.1} parent=1 // pred_check_branch
      %35 = sbr.rel (0) target = $region9
    $region8: #{fastvar_cross_attn_block.1} parent=1 // pred_region
      _
    $region9: #{fastvar_cross_attn_block.1} parent=1 // pred_fallthru
      _
    // Predicated region
    $region10: #{fastvar_cross_attn_block.1} parent=1 // pred_check
      _
    $region11: #{fastvar_cross_attn_block.1} parent=1 // pred_check_branch
      %37 = sbr.rel (0) target = $region13
    $region12: #{fastvar_cross_attn_block.1} parent=1 // pred_region
      %s39 = ssub.s32 512, 512
      %40 = vsyncadd [#allocation3], %s39
      %s41 = sshll.u32 [#allocation2], 4
      %s42 = int_to_ptr.vmem [resolvable:$true] %s41
      %47 = dma.hbm_to_vmem [thread:$0]  %s2, 512, %s42, [#allocation3], 128, 128, 8
    $region13: #{fastvar_cross_attn_block.1} parent=1 // pred_fallthru
      _
    // Predicated region
    $region14: #{fastvar_cross_attn_block.1} parent=1 // pred_check
      _
    $region15: #{fastvar_cross_attn_block.1} parent=1 // pred_check_branch
      %49 = sbr.rel (0) target = $region17
    $region16: #{fastvar_cross_attn_block.1} parent=1 // pred_region
      _
    $region17: #{fastvar_cross_attn_block.1} parent=1 // pred_fallthru
      _
    // Predicated region
    $region18: #{fastvar_cross_attn_block.1} parent=1 // pred_check
      _
    $region19: #{fastvar_cross_attn_block.1} parent=1 // pred_check_branch
      %51 = sbr.rel (0) target = $region21
    $region20: #{fastvar_cross_attn_block.1} parent=1 // pred_region
      %s53 = ssub.s32 192, 192
      %54 = vsyncadd [#allocation6], %s53
      %s56 = sshll.u32 [#allocation5], 4
      %s57 = int_to_ptr.vmem [resolvable:$true] %s56
      %59 = dma.hbm_to_vmem [thread:$0]  %s4, 192, %s57, [#allocation6]
    $region21: #{fastvar_cross_attn_block.1} parent=1 // pred_fallthru
      _
    // Predicated region
    $region22: #{fastvar_cross_attn_block.1} parent=1 // pred_check
      _
    $region23: #{fastvar_cross_attn_block.1} parent=1 // pred_check_branch
      %61 = sbr.rel (0) target = $region25
    $region24: #{fastvar_cross_attn_block.1} parent=1 // pred_region
      _
    $region25: #{fastvar_cross_attn_block.1} parent=1 // pred_fallthru
      _
    // Predicated region
    $region26: #{fastvar_cross_attn_block.1} parent=1 // pred_check
      _
    $region27: #{fastvar_cross_attn_block.1} parent=1 // pred_check_branch
      %63 = sbr.rel (0) target = $region29
    $region28: #{fastvar_cross_attn_block.1} parent=1 // pred_region
      %s65 = ssub.s32 16, 16
      %66 = vsyncadd [#allocation6], %s65
      %s68 = sshll.u32 [#allocation7], 4
      %s69 = int_to_ptr.vmem [resolvable:$true] %s68
      %71 = dma.hbm_to_vmem [thread:$0]  %s6, 16, %s69, [#allocation6]
    $region29: #{fastvar_cross_attn_block.1} parent=1 // pred_fallthru
      _
    // Predicated region
    $region30: #{fastvar_cross_attn_block.1} parent=1 // pred_check
      _
    $region31: #{fastvar_cross_attn_block.1} parent=1 // pred_check_branch
      %73 = sbr.rel (0) target = $region33
    $region32: #{fastvar_cross_attn_block.1} parent=1 // pred_region
      %s75 = ssub.s32 16, 16
      %76 = vsyncadd [#allocation9], %s75
      %s78 = sshll.u32 [#allocation8], 4
      %s79 = int_to_ptr.vmem [resolvable:$true] %s78
      %81 = dma.hbm_to_vmem [thread:$0]  %s7, 16, %s79, [#allocation9]
    $region33: #{fastvar_cross_attn_block.1} parent=1 // pred_fallthru
      _
    // Predicated region
    $region34: #{fastvar_cross_attn_block.1} parent=1 // pred_check
      _
    $region35: #{fastvar_cross_attn_block.1} parent=1 // pred_check_branch
      %83 = sbr.rel (0) target = $region37
    $region36: #{fastvar_cross_attn_block.1} parent=1 // pred_region
      %s85 = ssub.s32 16, 16
      %86 = vsyncadd [#allocation9], %s85
      %s88 = sshll.u32 [#allocation10], 4
      %s89 = int_to_ptr.vmem [resolvable:$true] %s88
      %91 = dma.hbm_to_vmem [thread:$0]  %s8, 16, %s89, [#allocation9]
    $region37: #{fastvar_cross_attn_block.1} parent=1 // pred_fallthru
      _
    // Predicated region
    $region38: #{fastvar_cross_attn_block.1} parent=1 // pred_check
      _
    $region39: #{fastvar_cross_attn_block.1} parent=1 // pred_check_branch
      %93 = sbr.rel (0) target = $region41
    $region40: #{fastvar_cross_attn_block.1} parent=1 // pred_region
      _
    $region41: #{fastvar_cross_attn_block.1} parent=1 // pred_fallthru
      _
    // Predicated region
    $region42: #{fastvar_cross_attn_block.1} parent=1 // pred_check
      _
    $region43: #{fastvar_cross_attn_block.1} parent=1 // pred_check_branch
      %95 = sbr.rel (0) target = $region45
    $region44: #{fastvar_cross_attn_block.1} parent=1 // pred_region
      %s97 = ssub.s32 64, 64
      %98 = vsyncadd [#allocation12], %s97
      %s100 = sshll.u32 [#allocation11], 4
      %s101 = int_to_ptr.vmem [resolvable:$true] %s100
      %103 = dma.hbm_to_vmem [thread:$0]  %s10, 64, %s101, [#allocation12]
    $region45: #{fastvar_cross_attn_block.1} parent=1 // pred_fallthru
      _
    // Predicated region
    $region46: #{fastvar_cross_attn_block.1} parent=1 // pred_check
      _
    $region47: #{fastvar_cross_attn_block.1} parent=1 // pred_check_branch
      %105 = sbr.rel (0) target = $region49
    $region48: #{fastvar_cross_attn_block.1} parent=1 // pred_region
      _
    $region49: #{fastvar_cross_attn_block.1} parent=1 // pred_fallthru
      _
    // Predicated region
    $region50: #{fastvar_cross_attn_block.1} parent=1 // pred_check
      _
    $region51: #{fastvar_cross_attn_block.1} parent=1 // pred_check_branch
      %107 = sbr.rel (0) target = $region53
    $region52: #{fastvar_cross_attn_block.1} parent=1 // pred_region
      %s109 = ssub.s32 128, 128
      %110 = vsyncadd [#allocation12], %s109
      %s112 = sshll.u32 [#allocation13], 4
      %s113 = int_to_ptr.vmem [resolvable:$true] %s112
      %115 = dma.hbm_to_vmem [thread:$0]  %s12, 128, %s113, [#allocation12]
    $region53: #{fastvar_cross_attn_block.1} parent=1 // pred_fallthru
      _
    // Predicated region
    $region54: #{fastvar_cross_attn_block.1} parent=1 // pred_check
      _
    $region55: #{fastvar_cross_attn_block.1} parent=1 // pred_check_branch
      %117 = sbr.rel (0) target = $region57
    $region56: #{fastvar_cross_attn_block.1} parent=1 // pred_region
      _
    $region57: #{fastvar_cross_attn_block.1} parent=1 // pred_fallthru
      _
    // Predicated region
    $region58: #{fastvar_cross_attn_block.1} parent=1 // pred_check
      _
    $region59: #{fastvar_cross_attn_block.1} parent=1 // pred_check_branch
      %119 = sbr.rel (0) target = $region61
    $region60: #{fastvar_cross_attn_block.1} parent=1 // pred_region
      %s121 = ssub.s32 16, 16
      %122 = vsyncadd [#allocation15], %s121
      %s124 = sshll.u32 [#allocation14], 4
      %s125 = int_to_ptr.vmem [resolvable:$true] %s124
      %127 = dma.hbm_to_vmem [thread:$0]  %s14, 16, %s125, [#allocation15]
    $region61: #{fastvar_cross_attn_block.1} parent=1 // pred_fallthru
      _
    // Predicated region
    $region62: #{fastvar_cross_attn_block.1} parent=1 // pred_check
      _
    $region63: #{fastvar_cross_attn_block.1} parent=1 // pred_check_branch
      %129 = sbr.rel (0) target = $region65
    $region64: #{fastvar_cross_attn_block.1} parent=1 // pred_region
      %s131 = ssub.s32 16, 16
      %132 = vsyncadd [#allocation15], %s131
      %s134 = sshll.u32 [#allocation16], 4
      %s135 = int_to_ptr.vmem [resolvable:$true] %s134
      %137 = dma.hbm_to_vmem [thread:$0]  %s15, 16, %s135, [#allocation15]
    $region65: #{fastvar_cross_attn_block.1} parent=1 // pred_fallthru
      _
    // Predicated region
    $region66: #{fastvar_cross_attn_block.1} parent=1 // pred_check
      _
    $region67: #{fastvar_cross_attn_block.1} parent=1 // pred_check_branch
      %139 = sbr.rel (0) target = $region69
    $region68: #{fastvar_cross_attn_block.1} parent=1 // pred_region
      _
    $region69: #{fastvar_cross_attn_block.1} parent=1 // pred_fallthru
      _
    // Predicated region
    $region70: #{fastvar_cross_attn_block.1} parent=1 // pred_check
      _
    $region71: #{fastvar_cross_attn_block.1} parent=1 // pred_check_branch
      %141 = sbr.rel (0) target = $region73
    $region72: #{fastvar_cross_attn_block.1} parent=1 // pred_region
      _
    $region73: #{fastvar_cross_attn_block.1} parent=1 // pred_fallthru
      _
    // Predicated region
    $region74: #{fastvar_cross_attn_block.1} parent=1 // pred_check
      _
    $region75: #{fastvar_cross_attn_block.1} parent=1 // pred_check_branch
      %143 = sbr.rel (0) target = $region77
    $region76: #{fastvar_cross_attn_block.1} parent=1 // pred_region
      _
    $region77: #{fastvar_cross_attn_block.1} parent=1 // pred_fallthru
      _
    // Predicated region
    $region78: #{fastvar_cross_attn_block.1} parent=1 // pred_check
      _
    $region79: #{fastvar_cross_attn_block.1} parent=1 // pred_check_branch
      %145 = sbr.rel (0) target = $region81
    $region80: #{fastvar_cross_attn_block.1} parent=1 // pred_region
      %s147 = ssub.s32 16, 16
      %148 = vsyncadd [#allocation18], %s147
      %s150 = sshll.u32 [#allocation17], 4
      %s151 = int_to_ptr.vmem [resolvable:$true] %s150
      %153 = dma.hbm_to_vmem [thread:$0]  %s19, 16, %s151, [#allocation18]
    $region81: #{fastvar_cross_attn_block.1} parent=1 // pred_fallthru
      _
    // Predicated region
    $region82: #{fastvar_cross_attn_block.1} parent=1 // pred_check
      _
    $region83: #{fastvar_cross_attn_block.1} parent=1 // pred_check_branch
      %155 = sbr.rel (0) target = $region85
    $region84: #{fastvar_cross_attn_block.1} parent=1 // pred_region
      %156 = dma.done [#allocation3], 512
    $region85: #{fastvar_cross_attn_block.1} parent=1 // pred_fallthru
      _
    // Predicated region
    $region86: #{fastvar_cross_attn_block.1} parent=1 // pred_check
      _
    $region87: #{fastvar_cross_attn_block.1} parent=1 // pred_check_branch
      %158 = sbr.rel (0) target = $region89
    $region88: #{fastvar_cross_attn_block.1} parent=1 // pred_region
      %159 = dma.done [#allocation6], 192
    $region89: #{fastvar_cross_attn_block.1} parent=1 // pred_fallthru
      _
    // Predicated region
    $region90: #{fastvar_cross_attn_block.1} parent=1 // pred_check
      _
    $region91: #{fastvar_cross_attn_block.1} parent=1 // pred_check_branch
      %161 = sbr.rel (0) target = $region93
    $region92: #{fastvar_cross_attn_block.1} parent=1 // pred_region
      %162 = dma.done [#allocation6], 16
    $region93: #{fastvar_cross_attn_block.1} parent=1 // pred_fallthru
      _
    // Predicated region
    $region94: #{fastvar_cross_attn_block.1} parent=1 // pred_check
      _
    $region95: #{fastvar_cross_attn_block.1} parent=1 // pred_check_branch
      %164 = sbr.rel (0) target = $region97
    $region96: #{fastvar_cross_attn_block.1} parent=1 // pred_region
      %165 = dma.done [#allocation9], 16
    $region97: #{fastvar_cross_attn_block.1} parent=1 // pred_fallthru
      _
    // Predicated region
    $region98: #{fastvar_cross_attn_block.1} parent=1 // pred_check
      _
    $region99: #{fastvar_cross_attn_block.1} parent=1 // pred_check_branch
      %167 = sbr.rel (0) target = $region101
    $region100: #{fastvar_cross_attn_block.1} parent=1 // pred_region
      %168 = dma.done [#allocation9], 16
    $region101: #{fastvar_cross_attn_block.1} parent=1 // pred_fallthru
      _
    // Predicated region
    $region102: #{fastvar_cross_attn_block.1} parent=1 // pred_check
      _
    $region103: #{fastvar_cross_attn_block.1} parent=1 // pred_check_branch
      %170 = sbr.rel (0) target = $region105
    $region104: #{fastvar_cross_attn_block.1} parent=1 // pred_region
      %171 = dma.done [#allocation12], 64
    $region105: #{fastvar_cross_attn_block.1} parent=1 // pred_fallthru
      _
    // Predicated region
    $region106: #{fastvar_cross_attn_block.1} parent=1 // pred_check
      _
    $region107: #{fastvar_cross_attn_block.1} parent=1 // pred_check_branch
      %173 = sbr.rel (0) target = $region109
    $region108: #{fastvar_cross_attn_block.1} parent=1 // pred_region
      %174 = dma.done [#allocation12], 128
    $region109: #{fastvar_cross_attn_block.1} parent=1 // pred_fallthru
      _
    // Predicated region
    $region110: #{fastvar_cross_attn_block.1} parent=1 // pred_check
      _
    $region111: #{fastvar_cross_attn_block.1} parent=1 // pred_check_branch
      %176 = sbr.rel (0) target = $region113
    $region112: #{fastvar_cross_attn_block.1} parent=1 // pred_region
      %177 = dma.done [#allocation15], 16
    $region113: #{fastvar_cross_attn_block.1} parent=1 // pred_fallthru
      _
    // Predicated region
    $region114: #{fastvar_cross_attn_block.1} parent=1 // pred_check
      _
    $region115: #{fastvar_cross_attn_block.1} parent=1 // pred_check_branch
      %179 = sbr.rel (0) target = $region117
    $region116: #{fastvar_cross_attn_block.1} parent=1 // pred_region
      %180 = dma.done [#allocation15], 16
    $region117: #{fastvar_cross_attn_block.1} parent=1 // pred_fallthru
      _
    // Predicated region
    $region118: #{fastvar_cross_attn_block.1} parent=1 // pred_check
      _
    $region119: #{fastvar_cross_attn_block.1} parent=1 // pred_check_branch
      %182 = sbr.rel (0) target = $region121
    $region120: #{fastvar_cross_attn_block.1} parent=1 // pred_region
      %183 = dma.done [#allocation18], 16
    $region121: #{fastvar_cross_attn_block.1} parent=1 // pred_fallthru
      _
    %v185 = vld [vmem:[%s0] sm:$0xff]
    %v186 = vld [vmem:[%s0 + $0x8] sm:$0xff]
    %v187 = vld [vmem:[%s0 + $0x10] sm:$0xff]
    %v188 = vld [vmem:[%s0 + $0x18] sm:$0xff]
    %v189 = vld [vmem:[%s1] sm:$0x3f]
    %v190 = vld [vmem:[%s1 + $0x8] sm:$0x3f]
    %vm191 = vcmask 523264
    %v192 = vsel %vm191, %v185, 0.0
    %193 = vadd.xlane.f32.xlu0 %v192
    %v194 = vpop.xlane.xlu0 %193
    %v195 = vsel %vm191, %v186, 0.0
    %196 = vadd.xlane.f32.xlu0 %v195
    %v197 = vpop.xlane.xlu0 %196
    %v198 = vsel %vm191, %v187, 0.0
    %199 = vadd.xlane.f32.xlu0 %v198
    %v200 = vpop.xlane.xlu0 %199
    %v201 = vsel %vm191, %v188, 0.0
    %202 = vadd.xlane.f32.xlu0 %v201
    %v203 = vpop.xlane.xlu0 %202
    %v204 = vrcp.pop 64.0
    %v205 = vmul.f32 %v194, %v204
    %v206 = vmul.f32 %v197, %v204
    %v207 = vmul.f32 %v200, %v204
    %v208 = vmul.f32 %v203, %v204
    %v209 = vsub.f32 %v185, %v205
    %v210 = vsub.f32 %v186, %v206
    %v211 = vsub.f32 %v187, %v207
    %v212 = vsub.f32 %v188, %v208
    %v213 = vmul.f32 %v209, %v209
    %v214 = vmul.f32 %v210, %v210
    %v215 = vmul.f32 %v211, %v211
    %v216 = vmul.f32 %v212, %v212
    %v217 = vsel %vm191, %v213, 0.0
    %218 = vadd.xlane.f32.xlu0 %v217
    %v219 = vpop.xlane.xlu0 %218
    %v220 = vsel %vm191, %v214, 0.0
    %221 = vadd.xlane.f32.xlu0 %v220
    %v222 = vpop.xlane.xlu0 %221
    %v223 = vsel %vm191, %v215, 0.0
    %224 = vadd.xlane.f32.xlu0 %v223
    %v225 = vpop.xlane.xlu0 %224
    %v226 = vsel %vm191, %v216, 0.0
    %227 = vadd.xlane.f32.xlu0 %v226
    %v228 = vpop.xlane.xlu0 %227
    %v229 = vmul.f32 %v219, %v204
    %v230 = vmul.f32 %v222, %v204
    %v231 = vmul.f32 %v225, %v204
    %v232 = vmul.f32 %v228, %v204
    %v233 = vadd.f32 %v229, 1e-06
    %v234 = vadd.f32 %v230, 1e-06
    %v235 = vadd.f32 %v231, 1e-06
    %v236 = vadd.f32 %v232, 1e-06
    %v237 = vrsqrt.pop %v233
    %v238 = vrsqrt.pop %v234
    %v239 = vrsqrt.pop %v235
    %v240 = vrsqrt.pop %v236
    %v241 = vmul.f32 %v209, %v237
    %v242 = vmul.f32 %v210, %v238
    %v243 = vmul.f32 %v211, %v239
    %v244 = vmul.f32 %v212, %v240
    %v245 = vadd.f32 %v189, 1.0
    %v246 = vadd.f32 %v190, 1.0
    %v247 = vlaneseq
    %v248 = vshrl.u32 %v247, 7
    %v249 = vsub.s32 2, %v248
    %v250 = vrot.slane %v245, %v249
    %v251 = vlaneseq
    %v252 = vshrl.u32 %v251, 7
    %v253 = vsub.s32 2, %v252
    %v254 = vrot.slane %v246, %v253
    %v255 = vmul.f32 %v241, %v250
    %v256 = vmul.f32 %v242, %v250
    %v257 = vmul.f32 %v243, %v254
    %v258 = vmul.f32 %v244, %v254
    %v259 = vlaneseq
    %v260 = vshrl.u32 %v259, 7
    %v261 = vsub.s32 4, %v260
    %v262 = vrot.slane %v189, %v261
    %v263 = vlaneseq
    %v264 = vshrl.u32 %v263, 7
    %v265 = vsub.s32 4, %v264
    %v266 = vrot.slane %v190, %v265
    %v267 = vadd.f32 %v255, %v262
    %v268 = vadd.f32 %v256, %v262
    %v269 = vadd.f32 %v257, %v266
    %v270 = vadd.f32 %v258, %v266
    %v271 = vpack.c.bf16 %v268, %v267
    %v272 = vpack.c.bf16 %v270, %v269
    %v273 = vld [vmem:[%s3] sm:$0xff]
    %v274 = vld [vmem:[%s3 + $0x8] sm:$0xff]
    %v275 = vld [vmem:[%s3 + $0x10] sm:$0xff]
    %v276 = vld [vmem:[%s3 + $0x18] sm:$0xff]
    %v277 = vld [vmem:[%s3 + $0x20] sm:$0xff]
    %v278 = vld [vmem:[%s3 + $0x28] sm:$0xff]
    %v279 = vld [vmem:[%s3 + $0x30] sm:$0xff]
    %v280 = vld [vmem:[%s3 + $0x38] sm:$0xff]
    %v281 = vld [vmem:[%s3 + $0x40] sm:$0xff]
    %v282 = vld [vmem:[%s3 + $0x48] sm:$0xff]
    %v283 = vld [vmem:[%s3 + $0x50] sm:$0xff]
    %v284 = vld [vmem:[%s3 + $0x58] sm:$0xff]
    %v285 = vld [vmem:[%s3 + $0x60] sm:$0xff]
    %v286 = vld [vmem:[%s3 + $0x68] sm:$0xff]
    %v287 = vld [vmem:[%s3 + $0x70] sm:$0xff]
    %v288 = vld [vmem:[%s3 + $0x78] sm:$0xff]
    %v289 = vld [vmem:[%s3 + $0x80] sm:$0xff]
    %v290 = vld [vmem:[%s3 + $0x88] sm:$0xff]
    %v291 = vld [vmem:[%s3 + $0x90] sm:$0xff]
    %v292 = vld [vmem:[%s3 + $0x98] sm:$0xff]
    %v293 = vld [vmem:[%s3 + $0xa0] sm:$0xff]
    %v294 = vld [vmem:[%s3 + $0xa8] sm:$0xff]
    %v295 = vld [vmem:[%s3 + $0xb0] sm:$0xff]
    %v296 = vld [vmem:[%s3 + $0xb8] sm:$0xff]
    %v297 = vld [vmem:[%s3 + $0xc0] sm:$0xff]
    %v298 = vld [vmem:[%s3 + $0xc8] sm:$0xff]
    %v299 = vld [vmem:[%s3 + $0xd0] sm:$0xff]
    %v300 = vld [vmem:[%s3 + $0xd8] sm:$0xff]
    %v301 = vld [vmem:[%s3 + $0xe0] sm:$0xff]
    %v302 = vld [vmem:[%s3 + $0xe8] sm:$0xff]
    %v303 = vld [vmem:[%s3 + $0xf0] sm:$0xff]
    %v304 = vld [vmem:[%s3 + $0xf8] sm:$0xff]
    %v305 = vld [vmem:[%s3 + $0x100] sm:$0xff]
    %v306 = vld [vmem:[%s3 + $0x108] sm:$0xff]
    %v307 = vld [vmem:[%s3 + $0x110] sm:$0xff]
    %v308 = vld [vmem:[%s3 + $0x118] sm:$0xff]
    %v309 = vld [vmem:[%s3 + $0x120] sm:$0xff]
    %v310 = vld [vmem:[%s3 + $0x128] sm:$0xff]
    %v311 = vld [vmem:[%s3 + $0x130] sm:$0xff]
    %v312 = vld [vmem:[%s3 + $0x138] sm:$0xff]
    %v313 = vld [vmem:[%s3 + $0x140] sm:$0xff]
    %v314 = vld [vmem:[%s3 + $0x148] sm:$0xff]
    %v315 = vld [vmem:[%s3 + $0x150] sm:$0xff]
    %v316 = vld [vmem:[%s3 + $0x158] sm:$0xff]
    %v317 = vld [vmem:[%s3 + $0x160] sm:$0xff]
    %v318 = vld [vmem:[%s3 + $0x168] sm:$0xff]
    %v319 = vld [vmem:[%s3 + $0x170] sm:$0xff]
    %v320 = vld [vmem:[%s3 + $0x178] sm:$0xff]
    %v321 = vld [vmem:[#allocation5] sm:$0xff]
    %v322 = vld [vmem:[#allocation5 + $0x8] sm:$0xf]
    %v325 = vlaneseq
    %v326 = vshrl.u32 %v325, 7
    %v327 = vsub.s32 0, %v326
    %v328 = vrot.slane %v321, %v327
    %v329 = vlaneseq
    %v330 = vshrl.u32 %v329, 7
    %v331 = vsub.s32 1, %v330
    %v332 = vrot.slane %v321, %v331
    %v333 = vlaneseq
    %v334 = vshrl.u32 %v333, 7
    %v335 = vsub.s32 2, %v334
    %v336 = vrot.slane %v321, %v335
    %v337 = vlaneseq
    %v338 = vshrl.u32 %v337, 7
    %v339 = vsub.s32 3, %v338
    %v340 = vrot.slane %v321, %v339
    %v341 = vlaneseq
    %v342 = vshrl.u32 %v341, 7
    %v343 = vsub.s32 4, %v342
    %v344 = vrot.slane %v321, %v343
    %v345 = vlaneseq
    %v346 = vshrl.u32 %v345, 7
    %v347 = vsub.s32 5, %v346
    %v348 = vrot.slane %v321, %v347
    %v349 = vlaneseq
    %v350 = vshrl.u32 %v349, 7
    %v351 = vsub.s32 6, %v350
    %v352 = vrot.slane %v321, %v351
    %v353 = vlaneseq
    %v354 = vshrl.u32 %v353, 7
    %v355 = vsub.s32 7, %v354
    %v356 = vrot.slane %v321, %v355
    %v357 = vlaneseq
    %v358 = vshrl.u32 %v357, 7
    %v359 = vsub.s32 0, %v358
    %v360 = vrot.slane %v322, %v359
    %v361 = vlaneseq
    %v362 = vshrl.u32 %v361, 7
    %v363 = vsub.s32 1, %v362
    %v364 = vrot.slane %v322, %v363
    %v365 = vlaneseq
    %v366 = vshrl.u32 %v365, 7
    %v367 = vsub.s32 2, %v366
    %v368 = vrot.slane %v322, %v367
    %v369 = vlaneseq
    %v370 = vshrl.u32 %v369, 7
    %v371 = vsub.s32 3, %v370
    %v372 = vrot.slane %v322, %v371
    %v433 = vunpack.c.l.b16 %v273
    %v434 = vunpack.c.h.b16 %v273
    %v435 = vunpack.c.l.b16 %v274
    %v436 = vunpack.c.h.b16 %v274
    %v437 = vunpack.c.l.b16 %v275
    %v438 = vunpack.c.h.b16 %v275
    %v439 = vunpack.c.l.b16 %v276
    %v440 = vunpack.c.h.b16 %v276
    %v441 = vunpack.c.l.b16 %v277
    %v442 = vunpack.c.h.b16 %v277
    %v443 = vunpack.c.l.b16 %v278
    %v444 = vunpack.c.h.b16 %v278
    %v445 = vunpack.c.l.b16 %v279
    %v446 = vunpack.c.h.b16 %v279
    %v447 = vunpack.c.l.b16 %v280
    %v448 = vunpack.c.h.b16 %v280
    %v449 = vunpack.c.l.b16 %v281
    %v450 = vunpack.c.h.b16 %v281
    %v451 = vunpack.c.l.b16 %v282
    %v452 = vunpack.c.h.b16 %v282
    %v453 = vunpack.c.l.b16 %v283
    %v454 = vunpack.c.h.b16 %v283
    %v455 = vunpack.c.l.b16 %v284
    %v456 = vunpack.c.h.b16 %v284
    %v457 = vunpack.c.l.b16 %v285
    %v458 = vunpack.c.h.b16 %v285
    %v459 = vunpack.c.l.b16 %v286
    %v460 = vunpack.c.h.b16 %v286
    %v461 = vunpack.c.l.b16 %v287
    %v462 = vunpack.c.h.b16 %v287
    %v463 = vunpack.c.l.b16 %v288
    %v464 = vunpack.c.h.b16 %v288
    %v465 = vunpack.c.l.b16 %v289
    %v466 = vunpack.c.h.b16 %v289
    %v467 = vunpack.c.l.b16 %v290
    %v468 = vunpack.c.h.b16 %v290
    %v469 = vunpack.c.l.b16 %v291
    %v470 = vunpack.c.h.b16 %v291
    %v471 = vunpack.c.l.b16 %v292
    %v472 = vunpack.c.h.b16 %v292
    %v473 = vunpack.c.l.b16 %v293
    %v474 = vunpack.c.h.b16 %v293
    %v475 = vunpack.c.l.b16 %v294
    %v476 = vunpack.c.h.b16 %v294
    %v477 = vunpack.c.l.b16 %v295
    %v478 = vunpack.c.h.b16 %v295
    %v479 = vunpack.c.l.b16 %v296
    %v480 = vunpack.c.h.b16 %v296
    %v481 = vunpack.c.l.b16 %v297
    %v482 = vunpack.c.h.b16 %v297
    %v483 = vunpack.c.l.b16 %v298
    %v484 = vunpack.c.h.b16 %v298
    %v485 = vunpack.c.l.b16 %v299
    %v486 = vunpack.c.h.b16 %v299
    %v487 = vunpack.c.l.b16 %v300
    %v488 = vunpack.c.h.b16 %v300
    %v489 = vunpack.c.l.b16 %v301
    %v490 = vunpack.c.h.b16 %v301
    %v491 = vunpack.c.l.b16 %v302
    %v492 = vunpack.c.h.b16 %v302
    %v493 = vunpack.c.l.b16 %v303
    %v494 = vunpack.c.h.b16 %v303
    %v495 = vunpack.c.l.b16 %v304
    %v496 = vunpack.c.h.b16 %v304
    %v497 = vunpack.c.l.b16 %v305
    %v498 = vunpack.c.h.b16 %v305
    %v499 = vunpack.c.l.b16 %v306
    %v500 = vunpack.c.h.b16 %v306
    %v501 = vunpack.c.l.b16 %v307
    %v502 = vunpack.c.h.b16 %v307
    %v503 = vunpack.c.l.b16 %v308
    %v504 = vunpack.c.h.b16 %v308
    %v505 = vunpack.c.l.b16 %v309
    %v506 = vunpack.c.h.b16 %v309
    %v507 = vunpack.c.l.b16 %v310
    %v508 = vunpack.c.h.b16 %v310
    %v509 = vunpack.c.l.b16 %v311
    %v510 = vunpack.c.h.b16 %v311
    %v511 = vunpack.c.l.b16 %v312
    %v512 = vunpack.c.h.b16 %v312
    %v513 = vunpack.c.l.b16 %v313
    %v514 = vunpack.c.h.b16 %v313
    %v515 = vunpack.c.l.b16 %v314
    %v516 = vunpack.c.h.b16 %v314
    %v517 = vunpack.c.l.b16 %v315
    %v518 = vunpack.c.h.b16 %v315
    %v519 = vunpack.c.l.b16 %v316
    %v520 = vunpack.c.h.b16 %v316
    %v521 = vunpack.c.l.b16 %v317
    %v522 = vunpack.c.h.b16 %v317
    %v523 = vunpack.c.l.b16 %v318
    %v524 = vunpack.c.h.b16 %v318
    %v525 = vunpack.c.l.b16 %v319
    %v526 = vunpack.c.h.b16 %v319
    %v527 = vunpack.c.l.b16 %v320
    %v528 = vunpack.c.h.b16 %v320
    %v529 = vpack.c.b16 %v445, %v433
    %v530 = vpack.c.b16 %v446, %v434
    %v531 = vpack.c.b16 %v447, %v435
    %v532 = vpack.c.b16 %v448, %v436
    %v533 = vpack.c.b16 %v449, %v437
    %v534 = vpack.c.b16 %v450, %v438
    %v535 = vpack.c.b16 %v451, %v439
    %v536 = vpack.c.b16 %v452, %v440
    %v537 = vpack.c.b16 %v453, %v441
    %v538 = vpack.c.b16 %v454, %v442
    %v539 = vpack.c.b16 %v455, %v443
    %v540 = vpack.c.b16 %v456, %v444
    %v541 = vpack.c.b16 %v469, %v457
    %v542 = vpack.c.b16 %v470, %v458
    %v543 = vpack.c.b16 %v471, %v459
    %v544 = vpack.c.b16 %v472, %v460
    %v545 = vpack.c.b16 %v473, %v461
    %v546 = vpack.c.b16 %v474, %v462
    %v547 = vpack.c.b16 %v475, %v463
    %v548 = vpack.c.b16 %v476, %v464
    %v549 = vpack.c.b16 %v477, %v465
    %v550 = vpack.c.b16 %v478, %v466
    %v551 = vpack.c.b16 %v479, %v467
    %v552 = vpack.c.b16 %v480, %v468
    %v553 = vpack.c.b16 %v493, %v481
    %v554 = vpack.c.b16 %v494, %v482
    %v555 = vpack.c.b16 %v495, %v483
    %v556 = vpack.c.b16 %v496, %v484
    %v557 = vpack.c.b16 %v497, %v485
    %v558 = vpack.c.b16 %v498, %v486
    %v559 = vpack.c.b16 %v499, %v487
    %v560 = vpack.c.b16 %v500, %v488
    %v561 = vpack.c.b16 %v501, %v489
    %v562 = vpack.c.b16 %v502, %v490
    %v563 = vpack.c.b16 %v503, %v491
    %v564 = vpack.c.b16 %v504, %v492
    %v565 = vpack.c.b16 %v517, %v505
    %v566 = vpack.c.b16 %v518, %v506
    %v567 = vpack.c.b16 %v519, %v507
    %v568 = vpack.c.b16 %v520, %v508
    %v569 = vpack.c.b16 %v521, %v509
    %v570 = vpack.c.b16 %v522, %v510
    %v571 = vpack.c.b16 %v523, %v511
    %v572 = vpack.c.b16 %v524, %v512
    %v573 = vpack.c.b16 %v525, %v513
    %v574 = vpack.c.b16 %v526, %v514
    %v575 = vpack.c.b16 %v527, %v515
    %v576 = vpack.c.b16 %v528, %v516
    %v626 = vsel %vm191, %v271, 0
    %v629 = vsel %vm191, %v272, 0
    %631 = vmatprep.subr.bf16.mxu0 %v530
    %632 = vmatpush1.bf16.msra.mxu0 %v529
    %633 = vmatprep.subr.bf16.mxu0 %v542
    %634 = vmatpush1.bf16.msra.mxu0 %v541
    %635 = vmatprep.subr.bf16.mxu0 %v554
    %636 = vmatpush1.bf16.msra.mxu0 %v553
    %637 = vmatprep.subr.bf16.mxu0 %v566
    %638 = vmatpush1.bf16.msra.mxu0 %v565
    %639 = vmatprep.subr.bf16.mxu0 0
    %640 = vmatpush1.bf16.msra.mxu0 0
    %641 = vmatprep.subr.bf16.mxu0 0
    %642 = vmatpush1.bf16.msra.mxu0 0
    %643 = vmatprep.subr.bf16.mxu0 0
    %644 = vmatpush1.bf16.msra.mxu0 0
    %645 = vmatprep.subr.bf16.mxu0 0
    %646 = vmatpush1.bf16.msra.mxu0 0
    %647 = vmatprep.subr.bf16.mxu0 0
    %648 = vmatpush1.bf16.msra.mxu0 0
    %649 = vmatprep.subr.bf16.mxu0 0
    %650 = vmatpush1.bf16.msra.mxu0 0
    %651 = vmatprep.subr.bf16.mxu0 0
    %652 = vmatpush1.bf16.msra.mxu0 0
    %653 = vmatprep.subr.bf16.mxu0 0
    %654 = vmatpush1.bf16.msra.mxu0 0
    %655 = vmatprep.subr.bf16.mxu0 0
    %656 = vmatpush1.bf16.msra.mxu0 0
    %657 = vmatprep.subr.bf16.mxu0 0
    %658 = vmatpush1.bf16.msra.mxu0 0
    %659 = vmatprep.subr.bf16.mxu0 0
    %660 = vmatpush1.bf16.msra.mxu0 0
    %661 = vmatprep.subr.bf16.mxu0 0
    %662 = vmatpush1.bf16.msra.mxu0 0
    %663 = vmatprep.mubr.bf16.mxu0 0
    %664 = vmatmul.mubr.bf16.gmra.mrb[0].mxu0 %v626
    %v665 = vpop.f32.mrb[0].mxu0
    %v666 = vadd.f32 %v328, %v665
    %v667 = vpop.f32.mrb[0].mxu0
    %v668 = vadd.f32 %v332, %v667
    %v669 = vpop.f32.mrb[0].mxu0
    %v670 = vadd.f32 %v328, %v669
    %v671 = vpop.f32.mrb[0].mxu0
    %v672 = vadd.f32 %v332, %v671
    %673 = vmatprep.mubr.bf16.mxu0 0
    %674 = vmatmul.mubr.bf16.gmra.mrb[0].mxu0 %v629
    %v675 = vpop.f32.mrb[0].mxu0
    %v676 = vadd.f32 %v328, %v675
    %v677 = vpop.f32.mrb[0].mxu0
    %v678 = vadd.f32 %v332, %v677
    %v679 = vpop.f32.mrb[0].mxu0
    %v680 = vadd.f32 %v328, %v679
    %v681 = vpop.f32.mrb[0].mxu0
    %v682 = vadd.f32 %v332, %v681
    %683 = vdwg.mxu0
    %684 = vmatprep.subr.bf16.mxu0 %v532
    %685 = vmatpush1.bf16.msra.mxu0 %v531
    %686 = vmatprep.subr.bf16.mxu0 %v544
    %687 = vmatpush1.bf16.msra.mxu0 %v543
    %688 = vmatprep.subr.bf16.mxu0 %v556
    %689 = vmatpush1.bf16.msra.mxu0 %v555
    %690 = vmatprep.subr.bf16.mxu0 %v568
    %691 = vmatpush1.bf16.msra.mxu0 %v567
    %692 = vmatprep.subr.bf16.mxu0 0
    %693 = vmatpush1.bf16.msra.mxu0 0
    %694 = vmatprep.subr.bf16.mxu0 0
    %695 = vmatpush1.bf16.msra.mxu0 0
    %696 = vmatprep.subr.bf16.mxu0 0
    %697 = vmatpush1.bf16.msra.mxu0 0
    %698 = vmatprep.subr.bf16.mxu0 0
    %699 = vmatpush1.bf16.msra.mxu0 0
    %700 = vmatprep.subr.bf16.mxu0 0
    %701 = vmatpush1.bf16.msra.mxu0 0
    %702 = vmatprep.subr.bf16.mxu0 0
    %703 = vmatpush1.bf16.msra.mxu0 0
    %704 = vmatprep.subr.bf16.mxu0 0
    %705 = vmatpush1.bf16.msra.mxu0 0
    %706 = vmatprep.subr.bf16.mxu0 0
    %707 = vmatpush1.bf16.msra.mxu0 0
    %708 = vmatprep.subr.bf16.mxu0 0
    %709 = vmatpush1.bf16.msra.mxu0 0
    %710 = vmatprep.subr.bf16.mxu0 0
    %711 = vmatpush1.bf16.msra.mxu0 0
    %712 = vmatprep.subr.bf16.mxu0 0
    %713 = vmatpush1.bf16.msra.mxu0 0
    %714 = vmatprep.subr.bf16.mxu0 0
    %715 = vmatpush1.bf16.msra.mxu0 0
    %716 = vmatprep.mubr.bf16.mxu0 0
    %717 = vmatmul.mubr.bf16.gmra.mrb[0].mxu0 %v626
    %v718 = vpop.f32.mrb[0].mxu0
    %v719 = vadd.f32 %v336, %v718
    %v720 = vpop.f32.mrb[0].mxu0
    %v721 = vadd.f32 %v340, %v720
    %v722 = vpop.f32.mrb[0].mxu0
    %v723 = vadd.f32 %v336, %v722
    %v724 = vpop.f32.mrb[0].mxu0
    %v725 = vadd.f32 %v340, %v724
    %726 = vmatprep.mubr.bf16.mxu0 0
    %727 = vmatmul.mubr.bf16.gmra.mrb[0].mxu0 %v629
    %v728 = vpop.f32.mrb[0].mxu0
    %v729 = vadd.f32 %v336, %v728
    %v730 = vpop.f32.mrb[0].mxu0
    %v731 = vadd.f32 %v340, %v730
    %v732 = vpop.f32.mrb[0].mxu0
    %v733 = vadd.f32 %v336, %v732
    %v734 = vpop.f32.mrb[0].mxu0
    %v735 = vadd.f32 %v340, %v734
    %736 = vdwg.mxu0
    %737 = vmatprep.subr.bf16.mxu0 %v534
    %738 = vmatpush1.bf16.msra.mxu0 %v533
    %739 = vmatprep.subr.bf16.mxu0 %v546
    %740 = vmatpush1.bf16.msra.mxu0 %v545
    %741 = vmatprep.subr.bf16.mxu0 %v558
    %742 = vmatpush1.bf16.msra.mxu0 %v557
    %743 = vmatprep.subr.bf16.mxu0 %v570
    %744 = vmatpush1.bf16.msra.mxu0 %v569
    %745 = vmatprep.subr.bf16.mxu0 0
    %746 = vmatpush1.bf16.msra.mxu0 0
    %747 = vmatprep.subr.bf16.mxu0 0
    %748 = vmatpush1.bf16.msra.mxu0 0
    %749 = vmatprep.subr.bf16.mxu0 0
    %750 = vmatpush1.bf16.msra.mxu0 0
    %751 = vmatprep.subr.bf16.mxu0 0
    %752 = vmatpush1.bf16.msra.mxu0 0
    %753 = vmatprep.subr.bf16.mxu0 0
    %754 = vmatpush1.bf16.msra.mxu0 0
    %755 = vmatprep.subr.bf16.mxu0 0
    %756 = vmatpush1.bf16.msra.mxu0 0
    %757 = vmatprep.subr.bf16.mxu0 0
    %758 = vmatpush1.bf16.msra.mxu0 0
    %759 = vmatprep.subr.bf16.mxu0 0
    %760 = vmatpush1.bf16.msra.mxu0 0
    %761 = vmatprep.subr.bf16.mxu0 0
    %762 = vmatpush1.bf16.msra.mxu0 0
    %763 = vmatprep.subr.bf16.mxu0 0
    %764 = vmatpush1.bf16.msra.mxu0 0
    %765 = vmatprep.subr.bf16.mxu0 0
    %766 = vmatpush1.bf16.msra.mxu0 0
    %767 = vmatprep.subr.bf16.mxu0 0
    %768 = vmatpush1.bf16.msra.mxu0 0
    %769 = vmatprep.mubr.bf16.mxu0 0
    %770 = vmatmul.mubr.bf16.gmra.mrb[0].mxu0 %v626
    %v771 = vpop.f32.mrb[0].mxu0
    %v772 = vadd.f32 %v344, %v771
    %v773 = vpop.f32.mrb[0].mxu0
    %v774 = vadd.f32 %v348, %v773
    %v775 = vpop.f32.mrb[0].mxu0
    %v776 = vadd.f32 %v344, %v775
    %v777 = vpop.f32.mrb[0].mxu0
    %v778 = vadd.f32 %v348, %v777
    %779 = vmatprep.mubr.bf16.mxu0 0
    %780 = vmatmul.mubr.bf16.gmra.mrb[0].mxu0 %v629
    %v781 = vpop.f32.mrb[0].mxu0
    %v782 = vadd.f32 %v344, %v781
    %v783 = vpop.f32.mrb[0].mxu0
    %v784 = vadd.f32 %v348, %v783
    %v785 = vpop.f32.mrb[0].mxu0
    %v786 = vadd.f32 %v344, %v785
    %v787 = vpop.f32.mrb[0].mxu0
    %v788 = vadd.f32 %v348, %v787
    %789 = vdwg.mxu0
    %790 = vmatprep.subr.bf16.mxu0 %v536
    %791 = vmatpush1.bf16.msra.mxu0 %v535
    %792 = vmatprep.subr.bf16.mxu0 %v548
    %793 = vmatpush1.bf16.msra.mxu0 %v547
    %794 = vmatprep.subr.bf16.mxu0 %v560
    %795 = vmatpush1.bf16.msra.mxu0 %v559
    %796 = vmatprep.subr.bf16.mxu0 %v572
    %797 = vmatpush1.bf16.msra.mxu0 %v571
    %798 = vmatprep.subr.bf16.mxu0 0
    %799 = vmatpush1.bf16.msra.mxu0 0
    %800 = vmatprep.subr.bf16.mxu0 0
    %801 = vmatpush1.bf16.msra.mxu0 0
    %802 = vmatprep.subr.bf16.mxu0 0
    %803 = vmatpush1.bf16.msra.mxu0 0
    %804 = vmatprep.subr.bf16.mxu0 0
    %805 = vmatpush1.bf16.msra.mxu0 0
    %806 = vmatprep.subr.bf16.mxu0 0
    %807 = vmatpush1.bf16.msra.mxu0 0
    %808 = vmatprep.subr.bf16.mxu0 0
    %809 = vmatpush1.bf16.msra.mxu0 0
    %810 = vmatprep.subr.bf16.mxu0 0
    %811 = vmatpush1.bf16.msra.mxu0 0
    %812 = vmatprep.subr.bf16.mxu0 0
    %813 = vmatpush1.bf16.msra.mxu0 0
    %814 = vmatprep.subr.bf16.mxu0 0
    %815 = vmatpush1.bf16.msra.mxu0 0
    %816 = vmatprep.subr.bf16.mxu0 0
    %817 = vmatpush1.bf16.msra.mxu0 0
    %818 = vmatprep.subr.bf16.mxu0 0
    %819 = vmatpush1.bf16.msra.mxu0 0
    %820 = vmatprep.subr.bf16.mxu0 0
    %821 = vmatpush1.bf16.msra.mxu0 0
    %822 = vmatprep.mubr.bf16.mxu0 0
    %823 = vmatmul.mubr.bf16.gmra.mrb[0].mxu0 %v626
    %v824 = vpop.f32.mrb[0].mxu0
    %v825 = vadd.f32 %v352, %v824
    %v826 = vpop.f32.mrb[0].mxu0
    %v827 = vadd.f32 %v356, %v826
    %v828 = vpop.f32.mrb[0].mxu0
    %v829 = vadd.f32 %v352, %v828
    %v830 = vpop.f32.mrb[0].mxu0
    %v831 = vadd.f32 %v356, %v830
    %832 = vmatprep.mubr.bf16.mxu0 0
    %833 = vmatmul.mubr.bf16.gmra.mrb[0].mxu0 %v629
    %v834 = vpop.f32.mrb[0].mxu0
    %v835 = vadd.f32 %v352, %v834
    %v836 = vpop.f32.mrb[0].mxu0
    %v837 = vadd.f32 %v356, %v836
    %v838 = vpop.f32.mrb[0].mxu0
    %v839 = vadd.f32 %v352, %v838
    %v840 = vpop.f32.mrb[0].mxu0
    %v841 = vadd.f32 %v356, %v840
    %842 = vdwg.mxu0
    %843 = vmatprep.subr.bf16.mxu0 %v538
    %844 = vmatpush1.bf16.msra.mxu0 %v537
    %845 = vmatprep.subr.bf16.mxu0 %v550
    %846 = vmatpush1.bf16.msra.mxu0 %v549
    %847 = vmatprep.subr.bf16.mxu0 %v562
    %848 = vmatpush1.bf16.msra.mxu0 %v561
    %849 = vmatprep.subr.bf16.mxu0 %v574
    %850 = vmatpush1.bf16.msra.mxu0 %v573
    %851 = vmatprep.subr.bf16.mxu0 0
    %852 = vmatpush1.bf16.msra.mxu0 0
    %853 = vmatprep.subr.bf16.mxu0 0
    %854 = vmatpush1.bf16.msra.mxu0 0
    %855 = vmatprep.subr.bf16.mxu0 0
    %856 = vmatpush1.bf16.msra.mxu0 0
    %857 = vmatprep.subr.bf16.mxu0 0
    %858 = vmatpush1.bf16.msra.mxu0 0
    %859 = vmatprep.subr.bf16.mxu0 0
    %860 = vmatpush1.bf16.msra.mxu0 0
    %861 = vmatprep.subr.bf16.mxu0 0
    %862 = vmatpush1.bf16.msra.mxu0 0
    %863 = vmatprep.subr.bf16.mxu0 0
    %864 = vmatpush1.bf16.msra.mxu0 0
    %865 = vmatprep.subr.bf16.mxu0 0
    %866 = vmatpush1.bf16.msra.mxu0 0
    %867 = vmatprep.subr.bf16.mxu0 0
    %868 = vmatpush1.bf16.msra.mxu0 0
    %869 = vmatprep.subr.bf16.mxu0 0
    %870 = vmatpush1.bf16.msra.mxu0 0
    %871 = vmatprep.subr.bf16.mxu0 0
    %872 = vmatpush1.bf16.msra.mxu0 0
    %873 = vmatprep.subr.bf16.mxu0 0
    %874 = vmatpush1.bf16.msra.mxu0 0
    %875 = vmatprep.mubr.bf16.mxu0 0
    %876 = vmatmul.mubr.bf16.gmra.mrb[0].mxu0 %v626
    %v877 = vpop.f32.mrb[0].mxu0
    %v878 = vadd.f32 %v360, %v877
    %v879 = vpop.f32.mrb[0].mxu0
    %v880 = vadd.f32 %v364, %v879
    %v881 = vpop.f32.mrb[0].mxu0
    %v882 = vadd.f32 %v360, %v881
    %v883 = vpop.f32.mrb[0].mxu0
    %v884 = vadd.f32 %v364, %v883
    %885 = vmatprep.mubr.bf16.mxu0 0
    %886 = vmatmul.mubr.bf16.gmra.mrb[0].mxu0 %v629
    %v887 = vpop.f32.mrb[0].mxu0
    %v888 = vadd.f32 %v360, %v887
    %v889 = vpop.f32.mrb[0].mxu0
    %v890 = vadd.f32 %v364, %v889
    %v891 = vpop.f32.mrb[0].mxu0
    %v892 = vadd.f32 %v360, %v891
    %v893 = vpop.f32.mrb[0].mxu0
    %v894 = vadd.f32 %v364, %v893
    %895 = vdwg.mxu0
    %896 = vmatprep.subr.bf16.mxu0 %v540
    %897 = vmatpush1.bf16.msra.mxu0 %v539
    %898 = vmatprep.subr.bf16.mxu0 %v552
    %899 = vmatpush1.bf16.msra.mxu0 %v551
    %900 = vmatprep.subr.bf16.mxu0 %v564
    %901 = vmatpush1.bf16.msra.mxu0 %v563
    %902 = vmatprep.subr.bf16.mxu0 %v576
    %903 = vmatpush1.bf16.msra.mxu0 %v575
    %904 = vmatprep.subr.bf16.mxu0 0
    %905 = vmatpush1.bf16.msra.mxu0 0
    %906 = vmatprep.subr.bf16.mxu0 0
    %907 = vmatpush1.bf16.msra.mxu0 0
    %908 = vmatprep.subr.bf16.mxu0 0
    %909 = vmatpush1.bf16.msra.mxu0 0
    %910 = vmatprep.subr.bf16.mxu0 0
    %911 = vmatpush1.bf16.msra.mxu0 0
    %912 = vmatprep.subr.bf16.mxu0 0
    %913 = vmatpush1.bf16.msra.mxu0 0
    %914 = vmatprep.subr.bf16.mxu0 0
    %915 = vmatpush1.bf16.msra.mxu0 0
    %916 = vmatprep.subr.bf16.mxu0 0
    %917 = vmatpush1.bf16.msra.mxu0 0
    %918 = vmatprep.subr.bf16.mxu0 0
    %919 = vmatpush1.bf16.msra.mxu0 0
    %920 = vmatprep.subr.bf16.mxu0 0
    %921 = vmatpush1.bf16.msra.mxu0 0
    %922 = vmatprep.subr.bf16.mxu0 0
    %923 = vmatpush1.bf16.msra.mxu0 0
    %924 = vmatprep.subr.bf16.mxu0 0
    %925 = vmatpush1.bf16.msra.mxu0 0
    %926 = vmatprep.subr.bf16.mxu0 0
    %927 = vmatpush1.bf16.msra.mxu0 0
    %928 = vmatprep.mubr.bf16.mxu0 0
    %929 = vmatmul.mubr.bf16.gmra.mrb[0].mxu0 %v626
    %v930 = vpop.f32.mrb[0].mxu0
    %v931 = vadd.f32 %v368, %v930
    %v932 = vpop.f32.mrb[0].mxu0
    %v933 = vadd.f32 %v372, %v932
    %v934 = vpop.f32.mrb[0].mxu0
    %v935 = vadd.f32 %v368, %v934
    %v936 = vpop.f32.mrb[0].mxu0
    %v937 = vadd.f32 %v372, %v936
    %938 = vmatprep.mubr.bf16.mxu0 0
    %939 = vmatmul.mubr.bf16.gmra.mrb[0].mxu0 %v629
    %v940 = vpop.f32.mrb[0].mxu0
    %v941 = vadd.f32 %v368, %v940
    %v942 = vpop.f32.mrb[0].mxu0
    %v943 = vadd.f32 %v372, %v942
    %v944 = vpop.f32.mrb[0].mxu0
    %v945 = vadd.f32 %v368, %v944
    %v946 = vpop.f32.mrb[0].mxu0
    %v947 = vadd.f32 %v372, %v946
    %948 = vdwg.mxu0
    %v949 = vpack.c.bf16 %v670, %v666
    %v950 = vpack.c.bf16 %v672, %v668
    %v951 = vpack.c.bf16 %v723, %v719
    %v952 = vpack.c.bf16 %v725, %v721
    %v953 = vpack.c.bf16 %v776, %v772
    %v954 = vpack.c.bf16 %v778, %v774
    %v955 = vpack.c.bf16 %v829, %v825
    %v956 = vpack.c.bf16 %v831, %v827
    %v957 = vpack.c.bf16 %v882, %v878
    %v958 = vpack.c.bf16 %v884, %v880
    %v959 = vpack.c.bf16 %v935, %v931
    %v960 = vpack.c.bf16 %v937, %v933
    %v961 = vpack.c.bf16 %v680, %v676
    %v962 = vpack.c.bf16 %v682, %v678
    %v963 = vpack.c.bf16 %v733, %v729
    %v964 = vpack.c.bf16 %v735, %v731
    %v965 = vpack.c.bf16 %v786, %v782
    %v966 = vpack.c.bf16 %v788, %v784
    %v967 = vpack.c.bf16 %v839, %v835
    %v968 = vpack.c.bf16 %v841, %v837
    %v969 = vpack.c.bf16 %v892, %v888
    %v970 = vpack.c.bf16 %v894, %v890
    %v971 = vpack.c.bf16 %v945, %v941
    %v972 = vpack.c.bf16 %v947, %v943
    %973 = vmatprep.subr.bf16.mxu0 0
    %974 = vmatpush1.bf16.xpose.msra.mxu0 %v953
    %975 = vmatprep.subr.bf16.mxu0 0
    %976 = vmatpush1.bf16.xpose.msra.mxu0 0
    %977 = vmatprep.subr.bf16.mxu0 0
    %978 = vmatpush1.bf16.xpose.msra.mxu0 0
    %979 = vmatprep.subr.bf16.mxu0 0
    %980 = vmatpush1.bf16.xpose.msra.mxu0 0
    %981 = vmatprep.subr.bf16.mxu0 0
    %982 = vmatpush1.bf16.xpose.msra.mxu0 0
    %983 = vmatprep.subr.bf16.mxu0 0
    %984 = vmatpush1.bf16.xpose.msra.mxu0 0
    %985 = vmatprep.subr.bf16.mxu0 0
    %986 = vmatpush1.bf16.xpose.msra.mxu0 0
    %987 = vmatprep.subr.bf16.mxu0 0
    %988 = vmatpush1.bf16.xpose.msra.mxu0 0
    %989 = vmatprep.subr.bf16.mxu0 0
    %990 = vmatpush1.bf16.xpose.msra.mxu0 0
    %991 = vmatprep.subr.bf16.mxu0 0
    %992 = vmatpush1.bf16.xpose.msra.mxu0 0
    %993 = vmatprep.subr.bf16.mxu0 0
    %994 = vmatpush1.bf16.xpose.msra.mxu0 0
    %995 = vmatprep.subr.bf16.mxu0 0
    %996 = vmatpush1.bf16.xpose.msra.mxu0 0
    %997 = vmatprep.subr.bf16.mxu0 0
    %998 = vmatpush1.bf16.xpose.msra.mxu0 0
    %999 = vmatprep.subr.bf16.mxu0 0
    %1000 = vmatpush1.bf16.xpose.msra.mxu0 0
    %1001 = vmatprep.subr.bf16.mxu0 0
    %1002 = vmatpush1.bf16.xpose.msra.mxu0 0
    %1003 = vmatprep.subr.bf16.mxu0 0
    %1004 = vmatpush1.bf16.xpose.msra.mxu0 0
    %1005 = vmatprep.mubr.bf16.mxu0 0
    %1006 = vmatmul.mubr.bf16.gmra.mrb[0].mxu0 %v949
    %v1007 = vpop.f32.mrb[0].mxu0
    %v1008 = vadd.f32 0.0, %v1007
    %v1009 = vpop.f32.mrb[0].mxu0
    %v1010 = vpop.f32.mrb[0].mxu0
    %v1011 = vadd.f32 0.0, %v1010
    %v1012 = vpop.f32.mrb[0].mxu0
    %1013 = vdwg.mxu0
    %1014 = vmatprep.subr.bf16.mxu0 0
    %1015 = vmatpush1.bf16.xpose.msra.mxu0 %v965
    %1016 = vmatprep.subr.bf16.mxu0 0
    %1017 = vmatpush1.bf16.xpose.msra.mxu0 0
    %1018 = vmatprep.subr.bf16.mxu0 0
    %1019 = vmatpush1.bf16.xpose.msra.mxu0 0
    %1020 = vmatprep.subr.bf16.mxu0 0
    %1021 = vmatpush1.bf16.xpose.msra.mxu0 0
    %1022 = vmatprep.subr.bf16.mxu0 0
    %1023 = vmatpush1.bf16.xpose.msra.mxu0 0
    %1024 = vmatprep.subr.bf16.mxu0 0
    %1025 = vmatpush1.bf16.xpose.msra.mxu0 0
    %1026 = vmatprep.subr.bf16.mxu0 0
    %1027 = vmatpush1.bf16.xpose.msra.mxu0 0
    %1028 = vmatprep.subr.bf16.mxu0 0
    %1029 = vmatpush1.bf16.xpose.msra.mxu0 0
    %1030 = vmatprep.subr.bf16.mxu0 0
    %1031 = vmatpush1.bf16.xpose.msra.mxu0 0
    %1032 = vmatprep.subr.bf16.mxu0 0
    %1033 = vmatpush1.bf16.xpose.msra.mxu0 0
    %1034 = vmatprep.subr.bf16.mxu0 0
    %1035 = vmatpush1.bf16.xpose.msra.mxu0 0
    %1036 = vmatprep.subr.bf16.mxu0 0
    %1037 = vmatpush1.bf16.xpose.msra.mxu0 0
    %1038 = vmatprep.subr.bf16.mxu0 0
    %1039 = vmatpush1.bf16.xpose.msra.mxu0 0
    %1040 = vmatprep.subr.bf16.mxu0 0
    %1041 = vmatpush1.bf16.xpose.msra.mxu0 0
    %1042 = vmatprep.subr.bf16.mxu0 0
    %1043 = vmatpush1.bf16.xpose.msra.mxu0 0
    %1044 = vmatprep.subr.bf16.mxu0 0
    %1045 = vmatpush1.bf16.xpose.msra.mxu0 0
    %1046 = vmatprep.mubr.bf16.mxu0 0
    %1047 = vmatmul.mubr.bf16.gmra.mrb[0].mxu0 %v961
    %v1048 = vpop.f32.mrb[0].mxu0
    %v1049 = vadd.f32 0.0, %v1048
    %v1050 = vpop.f32.mrb[0].mxu0
    %v1051 = vpop.f32.mrb[0].mxu0
    %v1052 = vadd.f32 0.0, %v1051
    %v1053 = vpop.f32.mrb[0].mxu0
    %1054 = vdwg.mxu0
    %vm1055 = vcmask 130048
    %v1056 = vsel %vm1055, %v1008, -inf
    %1057 = vmax.xlane.f32.xlu0 %v1056
    %v1058 = vpop.xlane.xlu0 %1057
    %v1059 = vsel %vm1055, %v1011, -inf
    %1060 = vmax.xlane.f32.xlu0 %v1059
    %v1061 = vpop.xlane.xlu0 %1060
    %v1062 = vsel %vm1055, %v1049, -inf
    %1063 = vmax.xlane.f32.xlu0 %v1062
    %v1064 = vpop.xlane.xlu0 %1063
    %v1065 = vsel %vm1055, %v1052, -inf
    %1066 = vmax.xlane.f32.xlu0 %v1065
    %v1067 = vpop.xlane.xlu0 %1066
    %v1068 = vsub.f32 %v1008, %v1058
    %v1069 = vsub.f32 %v1011, %v1061
    %v1070 = vsub.f32 %v1049, %v1064
    %v1071 = vsub.f32 %v1052, %v1067
    %v1072 = vmul.f32 %v1068, 1.442695
    %v1073 = vpow.pop %v1072
    %v1074 = vmul.f32 %v1069, 1.442695
    %v1075 = vpow.pop %v1074
    %v1076 = vmul.f32 %v1070, 1.442695
    %v1077 = vpow.pop %v1076
    %v1078 = vmul.f32 %v1071, 1.442695
    %v1079 = vpow.pop %v1078
    %v1080 = vsel %vm1055, %v1073, 0.0
    %1081 = vadd.xlane.f32.xlu0 %v1080
    %v1082 = vpop.xlane.xlu0 %1081
    %v1083 = vsel %vm1055, %v1075, 0.0
    %1084 = vadd.xlane.f32.xlu0 %v1083
    %v1085 = vpop.xlane.xlu0 %1084
    %v1086 = vsel %vm1055, %v1077, 0.0
    %1087 = vadd.xlane.f32.xlu0 %v1086
    %v1088 = vpop.xlane.xlu0 %1087
    %v1089 = vsel %vm1055, %v1079, 0.0
    %1090 = vadd.xlane.f32.xlu0 %v1089
    %v1091 = vpop.xlane.xlu0 %1090
    %v1092 = vrcp.pop %v1082
    %v1093 = vrcp.pop %v1085
    %v1094 = vrcp.pop %v1088
    %v1095 = vrcp.pop %v1091
    %v1096 = vmul.f32 %v1073, %v1092
    %v1097 = vmul.f32 %v1075, %v1093
    %v1098 = vmul.f32 %v1077, %v1094
    %v1099 = vmul.f32 %v1079, %v1095
    %v1100 = vpack.c.bf16 %v1097, %v1096
    %v1101 = vpack.c.bf16 %v1099, %v1098
    %v1103 = vsel %vm1055, %v1100, 0
    %1105 = vmatprep.subr.bf16.mxu0 0
    %1106 = vmatpush1.bf16.msra.mxu0 %v957
    %1107 = vmatprep.subr.bf16.mxu0 0
    %1108 = vmatpush1.bf16.msra.mxu0 0
    %1109 = vmatprep.subr.bf16.mxu0 0
    %1110 = vmatpush1.bf16.msra.mxu0 0
    %1111 = vmatprep.subr.bf16.mxu0 0
    %1112 = vmatpush1.bf16.msra.mxu0 0
    %1113 = vmatprep.subr.bf16.mxu0 0
    %1114 = vmatpush1.bf16.msra.mxu0 0
    %1115 = vmatprep.subr.bf16.mxu0 0
    %1116 = vmatpush1.bf16.msra.mxu0 0
    %1117 = vmatprep.subr.bf16.mxu0 0
    %1118 = vmatpush1.bf16.msra.mxu0 0
    %1119 = vmatprep.subr.bf16.mxu0 0
    %1120 = vmatpush1.bf16.msra.mxu0 0
    %1121 = vmatprep.subr.bf16.mxu0 0
    %1122 = vmatpush1.bf16.msra.mxu0 0
    %1123 = vmatprep.subr.bf16.mxu0 0
    %1124 = vmatpush1.bf16.msra.mxu0 0
    %1125 = vmatprep.subr.bf16.mxu0 0
    %1126 = vmatpush1.bf16.msra.mxu0 0
    %1127 = vmatprep.subr.bf16.mxu0 0
    %1128 = vmatpush1.bf16.msra.mxu0 0
    %1129 = vmatprep.subr.bf16.mxu0 0
    %1130 = vmatpush1.bf16.msra.mxu0 0
    %1131 = vmatprep.subr.bf16.mxu0 0
    %1132 = vmatpush1.bf16.msra.mxu0 0
    %1133 = vmatprep.subr.bf16.mxu0 0
    %1134 = vmatpush1.bf16.msra.mxu0 0
    %1135 = vmatprep.subr.bf16.mxu0 0
    %1136 = vmatpush1.bf16.msra.mxu0 0
    %1137 = vmatprep.mubr.bf16.mxu0 0
    %1138 = vmatmul.mubr.bf16.gmra.mrb[0].mxu0 %v1103
    %v1139 = vpop.f32.mrb[0].mxu0
    %v1140 = vadd.f32 0.0, %v1139
    %v1141 = vpop.f32.mrb[0].mxu0
    %v1142 = vpop.f32.mrb[0].mxu0
    %v1143 = vadd.f32 0.0, %v1142
    %v1144 = vpop.f32.mrb[0].mxu0
    %1145 = vdwg.mxu0
    %v1147 = vsel %vm1055, %v1101, 0
    %1149 = vmatprep.subr.bf16.mxu0 0
    %1150 = vmatpush1.bf16.msra.mxu0 %v969
    %1151 = vmatprep.subr.bf16.mxu0 0
    %1152 = vmatpush1.bf16.msra.mxu0 0
    %1153 = vmatprep.subr.bf16.mxu0 0
    %1154 = vmatpush1.bf16.msra.mxu0 0
    %1155 = vmatprep.subr.bf16.mxu0 0
    %1156 = vmatpush1.bf16.msra.mxu0 0
    %1157 = vmatprep.subr.bf16.mxu0 0
    %1158 = vmatpush1.bf16.msra.mxu0 0
    %1159 = vmatprep.subr.bf16.mxu0 0
    %1160 = vmatpush1.bf16.msra.mxu0 0
    %1161 = vmatprep.subr.bf16.mxu0 0
    %1162 = vmatpush1.bf16.msra.mxu0 0
    %1163 = vmatprep.subr.bf16.mxu0 0
    %1164 = vmatpush1.bf16.msra.mxu0 0
    %1165 = vmatprep.subr.bf16.mxu0 0
    %1166 = vmatpush1.bf16.msra.mxu0 0
    %1167 = vmatprep.subr.bf16.mxu0 0
    %1168 = vmatpush1.bf16.msra.mxu0 0
    %1169 = vmatprep.subr.bf16.mxu0 0
    %1170 = vmatpush1.bf16.msra.mxu0 0
    %1171 = vmatprep.subr.bf16.mxu0 0
    %1172 = vmatpush1.bf16.msra.mxu0 0
    %1173 = vmatprep.subr.bf16.mxu0 0
    %1174 = vmatpush1.bf16.msra.mxu0 0
    %1175 = vmatprep.subr.bf16.mxu0 0
    %1176 = vmatpush1.bf16.msra.mxu0 0
    %1177 = vmatprep.subr.bf16.mxu0 0
    %1178 = vmatpush1.bf16.msra.mxu0 0
    %1179 = vmatprep.subr.bf16.mxu0 0
    %1180 = vmatpush1.bf16.msra.mxu0 0
    %1181 = vmatprep.mubr.bf16.mxu0 0
    %1182 = vmatmul.mubr.bf16.gmra.mrb[0].mxu0 %v1147
    %v1183 = vpop.f32.mrb[0].mxu0
    %v1184 = vadd.f32 0.0, %v1183
    %v1185 = vpop.f32.mrb[0].mxu0
    %v1186 = vpop.f32.mrb[0].mxu0
    %v1187 = vadd.f32 0.0, %v1186
    %v1188 = vpop.f32.mrb[0].mxu0
    %1189 = vdwg.mxu0
    %1190 = vmatprep.subr.bf16.mxu0 0
    %1191 = vmatpush1.bf16.xpose.msra.mxu0 %v954
    %1192 = vmatprep.subr.bf16.mxu0 0
    %1193 = vmatpush1.bf16.xpose.msra.mxu0 0
    %1194 = vmatprep.subr.bf16.mxu0 0
    %1195 = vmatpush1.bf16.xpose.msra.mxu0 0
    %1196 = vmatprep.subr.bf16.mxu0 0
    %1197 = vmatpush1.bf16.xpose.msra.mxu0 0
    %1198 = vmatprep.subr.bf16.mxu0 0
    %1199 = vmatpush1.bf16.xpose.msra.mxu0 0
    %1200 = vmatprep.subr.bf16.mxu0 0
    %1201 = vmatpush1.bf16.xpose.msra.mxu0 0
    %1202 = vmatprep.subr.bf16.mxu0 0
    %1203 = vmatpush1.bf16.xpose.msra.mxu0 0
    %1204 = vmatprep.subr.bf16.mxu0 0
    %1205 = vmatpush1.bf16.xpose.msra.mxu0 0
    %1206 = vmatprep.subr.bf16.mxu0 0
    %1207 = vmatpush1.bf16.xpose.msra.mxu0 0
    %1208 = vmatprep.subr.bf16.mxu0 0
    %1209 = vmatpush1.bf16.xpose.msra.mxu0 0
    %1210 = vmatprep.subr.bf16.mxu0 0
    %1211 = vmatpush1.bf16.xpose.msra.mxu0 0
    %1212 = vmatprep.subr.bf16.mxu0 0
    %1213 = vmatpush1.bf16.xpose.msra.mxu0 0
    %1214 = vmatprep.subr.bf16.mxu0 0
    %1215 = vmatpush1.bf16.xpose.msra.mxu0 0
    %1216 = vmatprep.subr.bf16.mxu0 0
    %1217 = vmatpush1.bf16.xpose.msra.mxu0 0
    %1218 = vmatprep.subr.bf16.mxu0 0
    %1219 = vmatpush1.bf16.xpose.msra.mxu0 0
    %1220 = vmatprep.subr.bf16.mxu0 0
    %1221 = vmatpush1.bf16.xpose.msra.mxu0 0
    %1222 = vmatprep.mubr.bf16.mxu0 0
    %1223 = vmatmul.mubr.bf16.gmra.mrb[0].mxu0 %v950
    %v1224 = vpop.f32.mrb[0].mxu0
    %v1225 = vadd.f32 0.0, %v1224
    %v1226 = vpop.f32.mrb[0].mxu0
    %v1227 = vpop.f32.mrb[0].mxu0
    %v1228 = vadd.f32 0.0, %v1227
    %v1229 = vpop.f32.mrb[0].mxu0
    %1230 = vdwg.mxu0
    %1231 = vmatprep.subr.bf16.mxu0 0
    %1232 = vmatpush1.bf16.xpose.msra.mxu0 %v966
    %1233 = vmatprep.subr.bf16.mxu0 0
    %1234 = vmatpush1.bf16.xpose.msra.mxu0 0
    %1235 = vmatprep.subr.bf16.mxu0 0
    %1236 = vmatpush1.bf16.xpose.msra.mxu0 0
    %1237 = vmatprep.subr.bf16.mxu0 0
    %1238 = vmatpush1.bf16.xpose.msra.mxu0 0
    %1239 = vmatprep.subr.bf16.mxu0 0
    %1240 = vmatpush1.bf16.xpose.msra.mxu0 0
    %1241 = vmatprep.subr.bf16.mxu0 0
    %1242 = vmatpush1.bf16.xpose.msra.mxu0 0
    %1243 = vmatprep.subr.bf16.mxu0 0
    %1244 = vmatpush1.bf16.xpose.msra.mxu0 0
    %1245 = vmatprep.subr.bf16.mxu0 0
    %1246 = vmatpush1.bf16.xpose.msra.mxu0 0
    %1247 = vmatprep.subr.bf16.mxu0 0
    %1248 = vmatpush1.bf16.xpose.msra.mxu0 0
    %1249 = vmatprep.subr.bf16.mxu0 0
    %1250 = vmatpush1.bf16.xpose.msra.mxu0 0
    %1251 = vmatprep.subr.bf16.mxu0 0
    %1252 = vmatpush1.bf16.xpose.msra.mxu0 0
    %1253 = vmatprep.subr.bf16.mxu0 0
    %1254 = vmatpush1.bf16.xpose.msra.mxu0 0
    %1255 = vmatprep.subr.bf16.mxu0 0
    %1256 = vmatpush1.bf16.xpose.msra.mxu0 0
    %1257 = vmatprep.subr.bf16.mxu0 0
    %1258 = vmatpush1.bf16.xpose.msra.mxu0 0
    %1259 = vmatprep.subr.bf16.mxu0 0
    %1260 = vmatpush1.bf16.xpose.msra.mxu0 0
    %1261 = vmatprep.subr.bf16.mxu0 0
    %1262 = vmatpush1.bf16.xpose.msra.mxu0 0
    %1263 = vmatprep.mubr.bf16.mxu0 0
    %1264 = vmatmul.mubr.bf16.gmra.mrb[0].mxu0 %v962
    %v1265 = vpop.f32.mrb[0].mxu0
    %v1266 = vadd.f32 0.0, %v1265
    %v1267 = vpop.f32.mrb[0].mxu0
    %v1268 = vpop.f32.mrb[0].mxu0
    %v1269 = vadd.f32 0.0, %v1268
    %v1270 = vpop.f32.mrb[0].mxu0
    %1271 = vdwg.mxu0
    %v1272 = vsel %vm1055, %v1225, -inf
    %1273 = vmax.xlane.f32.xlu0 %v1272
    %v1274 = vpop.xlane.xlu0 %1273
    %v1275 = vsel %vm1055, %v1228, -inf
    %1276 = vmax.xlane.f32.xlu0 %v1275
    %v1277 = vpop.xlane.xlu0 %1276
    %v1278 = vsel %vm1055, %v1266, -inf
    %1279 = vmax.xlane.f32.xlu0 %v1278
    %v1280 = vpop.xlane.xlu0 %1279
    %v1281 = vsel %vm1055, %v1269, -inf
    %1282 = vmax.xlane.f32.xlu0 %v1281
    %v1283 = vpop.xlane.xlu0 %1282
    %v1284 = vsub.f32 %v1225, %v1274
    %v1285 = vsub.f32 %v1228, %v1277
    %v1286 = vsub.f32 %v1266, %v1280
    %v1287 = vsub.f32 %v1269, %v1283
    %v1288 = vmul.f32 %v1284, 1.442695
    %v1289 = vpow.pop %v1288
    %v1290 = vmul.f32 %v1285, 1.442695
    %v1291 = vpow.pop %v1290
    %v1292 = vmul.f32 %v1286, 1.442695
    %v1293 = vpow.pop %v1292
    %v1294 = vmul.f32 %v1287, 1.442695
    %v1295 = vpow.pop %v1294
    %v1296 = vsel %vm1055, %v1289, 0.0
    %1297 = vadd.xlane.f32.xlu0 %v1296
    %v1298 = vpop.xlane.xlu0 %1297
    %v1299 = vsel %vm1055, %v1291, 0.0
    %1300 = vadd.xlane.f32.xlu0 %v1299
    %v1301 = vpop.xlane.xlu0 %1300
    %v1302 = vsel %vm1055, %v1293, 0.0
    %1303 = vadd.xlane.f32.xlu0 %v1302
    %v1304 = vpop.xlane.xlu0 %1303
    %v1305 = vsel %vm1055, %v1295, 0.0
    %1306 = vadd.xlane.f32.xlu0 %v1305
    %v1307 = vpop.xlane.xlu0 %1306
    %v1308 = vrcp.pop %v1298
    %v1309 = vrcp.pop %v1301
    %v1310 = vrcp.pop %v1304
    %v1311 = vrcp.pop %v1307
    %v1312 = vmul.f32 %v1289, %v1308
    %v1313 = vmul.f32 %v1291, %v1309
    %v1314 = vmul.f32 %v1293, %v1310
    %v1315 = vmul.f32 %v1295, %v1311
    %v1316 = vpack.c.bf16 %v1313, %v1312
    %v1317 = vpack.c.bf16 %v1315, %v1314
    %v1319 = vsel %vm1055, %v1316, 0
    %1321 = vmatprep.subr.bf16.mxu0 0
    %1322 = vmatpush1.bf16.msra.mxu0 %v958
    %1323 = vmatprep.subr.bf16.mxu0 0
    %1324 = vmatpush1.bf16.msra.mxu0 0
    %1325 = vmatprep.subr.bf16.mxu0 0
    %1326 = vmatpush1.bf16.msra.mxu0 0
    %1327 = vmatprep.subr.bf16.mxu0 0
    %1328 = vmatpush1.bf16.msra.mxu0 0
    %1329 = vmatprep.subr.bf16.mxu0 0
    %1330 = vmatpush1.bf16.msra.mxu0 0
    %1331 = vmatprep.subr.bf16.mxu0 0
    %1332 = vmatpush1.bf16.msra.mxu0 0
    %1333 = vmatprep.subr.bf16.mxu0 0
    %1334 = vmatpush1.bf16.msra.mxu0 0
    %1335 = vmatprep.subr.bf16.mxu0 0
    %1336 = vmatpush1.bf16.msra.mxu0 0
    %1337 = vmatprep.subr.bf16.mxu0 0
    %1338 = vmatpush1.bf16.msra.mxu0 0
    %1339 = vmatprep.subr.bf16.mxu0 0
    %1340 = vmatpush1.bf16.msra.mxu0 0
    %1341 = vmatprep.subr.bf16.mxu0 0
    %1342 = vmatpush1.bf16.msra.mxu0 0
    %1343 = vmatprep.subr.bf16.mxu0 0
    %1344 = vmatpush1.bf16.msra.mxu0 0
    %1345 = vmatprep.subr.bf16.mxu0 0
    %1346 = vmatpush1.bf16.msra.mxu0 0
    %1347 = vmatprep.subr.bf16.mxu0 0
    %1348 = vmatpush1.bf16.msra.mxu0 0
    %1349 = vmatprep.subr.bf16.mxu0 0
    %1350 = vmatpush1.bf16.msra.mxu0 0
    %1351 = vmatprep.subr.bf16.mxu0 0
    %1352 = vmatpush1.bf16.msra.mxu0 0
    %1353 = vmatprep.mubr.bf16.mxu0 0
    %1354 = vmatmul.mubr.bf16.gmra.mrb[0].mxu0 %v1319
    %v1355 = vpop.f32.mrb[0].mxu0
    %v1356 = vadd.f32 0.0, %v1355
    %v1357 = vpop.f32.mrb[0].mxu0
    %v1358 = vpop.f32.mrb[0].mxu0
    %v1359 = vadd.f32 0.0, %v1358
    %v1360 = vpop.f32.mrb[0].mxu0
    %1361 = vdwg.mxu0
    %v1363 = vsel %vm1055, %v1317, 0
    %1365 = vmatprep.subr.bf16.mxu0 0
    %1366 = vmatpush1.bf16.msra.mxu0 %v970
    %1367 = vmatprep.subr.bf16.mxu0 0
    %1368 = vmatpush1.bf16.msra.mxu0 0
    %1369 = vmatprep.subr.bf16.mxu0 0
    %1370 = vmatpush1.bf16.msra.mxu0 0
    %1371 = vmatprep.subr.bf16.mxu0 0
    %1372 = vmatpush1.bf16.msra.mxu0 0
    %1373 = vmatprep.subr.bf16.mxu0 0
    %1374 = vmatpush1.bf16.msra.mxu0 0
    %1375 = vmatprep.subr.bf16.mxu0 0
    %1376 = vmatpush1.bf16.msra.mxu0 0
    %1377 = vmatprep.subr.bf16.mxu0 0
    %1378 = vmatpush1.bf16.msra.mxu0 0
    %1379 = vmatprep.subr.bf16.mxu0 0
    %1380 = vmatpush1.bf16.msra.mxu0 0
    %1381 = vmatprep.subr.bf16.mxu0 0
    %1382 = vmatpush1.bf16.msra.mxu0 0
    %1383 = vmatprep.subr.bf16.mxu0 0
    %1384 = vmatpush1.bf16.msra.mxu0 0
    %1385 = vmatprep.subr.bf16.mxu0 0
    %1386 = vmatpush1.bf16.msra.mxu0 0
    %1387 = vmatprep.subr.bf16.mxu0 0
    %1388 = vmatpush1.bf16.msra.mxu0 0
    %1389 = vmatprep.subr.bf16.mxu0 0
    %1390 = vmatpush1.bf16.msra.mxu0 0
    %1391 = vmatprep.subr.bf16.mxu0 0
    %1392 = vmatpush1.bf16.msra.mxu0 0
    %1393 = vmatprep.subr.bf16.mxu0 0
    %1394 = vmatpush1.bf16.msra.mxu0 0
    %1395 = vmatprep.subr.bf16.mxu0 0
    %1396 = vmatpush1.bf16.msra.mxu0 0
    %1397 = vmatprep.mubr.bf16.mxu0 0
    %1398 = vmatmul.mubr.bf16.gmra.mrb[0].mxu0 %v1363
    %v1399 = vpop.f32.mrb[0].mxu0
    %v1400 = vadd.f32 0.0, %v1399
    %v1401 = vpop.f32.mrb[0].mxu0
    %v1402 = vpop.f32.mrb[0].mxu0
    %v1403 = vadd.f32 0.0, %v1402
    %v1404 = vpop.f32.mrb[0].mxu0
    %1405 = vdwg.mxu0
    %1406 = vmatprep.subr.bf16.mxu0 0
    %1407 = vmatpush1.bf16.xpose.msra.mxu0 %v955
    %1408 = vmatprep.subr.bf16.mxu0 0
    %1409 = vmatpush1.bf16.xpose.msra.mxu0 0
    %1410 = vmatprep.subr.bf16.mxu0 0
    %1411 = vmatpush1.bf16.xpose.msra.mxu0 0
    %1412 = vmatprep.subr.bf16.mxu0 0
    %1413 = vmatpush1.bf16.xpose.msra.mxu0 0
    %1414 = vmatprep.subr.bf16.mxu0 0
    %1415 = vmatpush1.bf16.xpose.msra.mxu0 0
    %1416 = vmatprep.subr.bf16.mxu0 0
    %1417 = vmatpush1.bf16.xpose.msra.mxu0 0
    %1418 = vmatprep.subr.bf16.mxu0 0
    %1419 = vmatpush1.bf16.xpose.msra.mxu0 0
    %1420 = vmatprep.subr.bf16.mxu0 0
    %1421 = vmatpush1.bf16.xpose.msra.mxu0 0
    %1422 = vmatprep.subr.bf16.mxu0 0
    %1423 = vmatpush1.bf16.xpose.msra.mxu0 0
    %1424 = vmatprep.subr.bf16.mxu0 0
    %1425 = vmatpush1.bf16.xpose.msra.mxu0 0
    %1426 = vmatprep.subr.bf16.mxu0 0
    %1427 = vmatpush1.bf16.xpose.msra.mxu0 0
    %1428 = vmatprep.subr.bf16.mxu0 0
    %1429 = vmatpush1.bf16.xpose.msra.mxu0 0
    %1430 = vmatprep.subr.bf16.mxu0 0
    %1431 = vmatpush1.bf16.xpose.msra.mxu0 0
    %1432 = vmatprep.subr.bf16.mxu0 0
    %1433 = vmatpush1.bf16.xpose.msra.mxu0 0
    %1434 = vmatprep.subr.bf16.mxu0 0
    %1435 = vmatpush1.bf16.xpose.msra.mxu0 0
    %1436 = vmatprep.subr.bf16.mxu0 0
    %1437 = vmatpush1.bf16.xpose.msra.mxu0 0
    %1438 = vmatprep.mubr.bf16.mxu0 0
    %1439 = vmatmul.mubr.bf16.gmra.mrb[0].mxu0 %v951
    %v1440 = vpop.f32.mrb[0].mxu0
    %v1441 = vadd.f32 0.0, %v1440
    %v1442 = vpop.f32.mrb[0].mxu0
    %v1443 = vpop.f32.mrb[0].mxu0
    %v1444 = vadd.f32 0.0, %v1443
    %v1445 = vpop.f32.mrb[0].mxu0
    %1446 = vdwg.mxu0
    %1447 = vmatprep.subr.bf16.mxu0 0
    %1448 = vmatpush1.bf16.xpose.msra.mxu0 %v967
    %1449 = vmatprep.subr.bf16.mxu0 0
    %1450 = vmatpush1.bf16.xpose.msra.mxu0 0
    %1451 = vmatprep.subr.bf16.mxu0 0
    %1452 = vmatpush1.bf16.xpose.msra.mxu0 0
    %1453 = vmatprep.subr.bf16.mxu0 0
    %1454 = vmatpush1.bf16.xpose.msra.mxu0 0
    %1455 = vmatprep.subr.bf16.mxu0 0
    %1456 = vmatpush1.bf16.xpose.msra.mxu0 0
    %1457 = vmatprep.subr.bf16.mxu0 0
    %1458 = vmatpush1.bf16.xpose.msra.mxu0 0
    %1459 = vmatprep.subr.bf16.mxu0 0
    %1460 = vmatpush1.bf16.xpose.msra.mxu0 0
    %1461 = vmatprep.subr.bf16.mxu0 0
    %1462 = vmatpush1.bf16.xpose.msra.mxu0 0
    %1463 = vmatprep.subr.bf16.mxu0 0
    %1464 = vmatpush1.bf16.xpose.msra.mxu0 0
    %1465 = vmatprep.subr.bf16.mxu0 0
    %1466 = vmatpush1.bf16.xpose.msra.mxu0 0
    %1467 = vmatprep.subr.bf16.mxu0 0
    %1468 = vmatpush1.bf16.xpose.msra.mxu0 0
    %1469 = vmatprep.subr.bf16.mxu0 0
    %1470 = vmatpush1.bf16.xpose.msra.mxu0 0
    %1471 = vmatprep.subr.bf16.mxu0 0
    %1472 = vmatpush1.bf16.xpose.msra.mxu0 0
    %1473 = vmatprep.subr.bf16.mxu0 0
    %1474 = vmatpush1.bf16.xpose.msra.mxu0 0
    %1475 = vmatprep.subr.bf16.mxu0 0
    %1476 = vmatpush1.bf16.xpose.msra.mxu0 0
    %1477 = vmatprep.subr.bf16.mxu0 0
    %1478 = vmatpush1.bf16.xpose.msra.mxu0 0
    %1479 = vmatprep.mubr.bf16.mxu0 0
    %1480 = vmatmul.mubr.bf16.gmra.mrb[0].mxu0 %v963
    %v1481 = vpop.f32.mrb[0].mxu0
    %v1482 = vadd.f32 0.0, %v1481
    %v1483 = vpop.f32.mrb[0].mxu0
    %v1484 = vpop.f32.mrb[0].mxu0
    %v1485 = vadd.f32 0.0, %v1484
    %v1486 = vpop.f32.mrb[0].mxu0
    %1487 = vdwg.mxu0
    %v1488 = vsel %vm1055, %v1441, -inf
    %1489 = vmax.xlane.f32.xlu0 %v1488
    %v1490 = vpop.xlane.xlu0 %1489
    %v1491 = vsel %vm1055, %v1444, -inf
    %1492 = vmax.xlane.f32.xlu0 %v1491
    %v1493 = vpop.xlane.xlu0 %1492
    %v1494 = vsel %vm1055, %v1482, -inf
    %1495 = vmax.xlane.f32.xlu0 %v1494
    %v1496 = vpop.xlane.xlu0 %1495
    %v1497 = vsel %vm1055, %v1485, -inf
    %1498 = vmax.xlane.f32.xlu0 %v1497
    %v1499 = vpop.xlane.xlu0 %1498
    %v1500 = vsub.f32 %v1441, %v1490
    %v1501 = vsub.f32 %v1444, %v1493
    %v1502 = vsub.f32 %v1482, %v1496
    %v1503 = vsub.f32 %v1485, %v1499
    %v1504 = vmul.f32 %v1500, 1.442695
    %v1505 = vpow.pop %v1504
    %v1506 = vmul.f32 %v1501, 1.442695
    %v1507 = vpow.pop %v1506
    %v1508 = vmul.f32 %v1502, 1.442695
    %v1509 = vpow.pop %v1508
    %v1510 = vmul.f32 %v1503, 1.442695
    %v1511 = vpow.pop %v1510
    %v1512 = vsel %vm1055, %v1505, 0.0
    %1513 = vadd.xlane.f32.xlu0 %v1512
    %v1514 = vpop.xlane.xlu0 %1513
    %v1515 = vsel %vm1055, %v1507, 0.0
    %1516 = vadd.xlane.f32.xlu0 %v1515
    %v1517 = vpop.xlane.xlu0 %1516
    %v1518 = vsel %vm1055, %v1509, 0.0
    %1519 = vadd.xlane.f32.xlu0 %v1518
    %v1520 = vpop.xlane.xlu0 %1519
    %v1521 = vsel %vm1055, %v1511, 0.0
    %1522 = vadd.xlane.f32.xlu0 %v1521
    %v1523 = vpop.xlane.xlu0 %1522
    %v1524 = vrcp.pop %v1514
    %v1525 = vrcp.pop %v1517
    %v1526 = vrcp.pop %v1520
    %v1527 = vrcp.pop %v1523
    %v1528 = vmul.f32 %v1505, %v1524
    %v1529 = vmul.f32 %v1507, %v1525
    %v1530 = vmul.f32 %v1509, %v1526
    %v1531 = vmul.f32 %v1511, %v1527
    %v1532 = vpack.c.bf16 %v1529, %v1528
    %v1533 = vpack.c.bf16 %v1531, %v1530
    %v1535 = vsel %vm1055, %v1532, 0
    %1537 = vmatprep.subr.bf16.mxu0 0
    %1538 = vmatpush1.bf16.msra.mxu0 %v959
    %1539 = vmatprep.subr.bf16.mxu0 0
    %1540 = vmatpush1.bf16.msra.mxu0 0
    %1541 = vmatprep.subr.bf16.mxu0 0
    %1542 = vmatpush1.bf16.msra.mxu0 0
    %1543 = vmatprep.subr.bf16.mxu0 0
    %1544 = vmatpush1.bf16.msra.mxu0 0
    %1545 = vmatprep.subr.bf16.mxu0 0
    %1546 = vmatpush1.bf16.msra.mxu0 0
    %1547 = vmatprep.subr.bf16.mxu0 0
    %1548 = vmatpush1.bf16.msra.mxu0 0
    %1549 = vmatprep.subr.bf16.mxu0 0
    %1550 = vmatpush1.bf16.msra.mxu0 0
    %1551 = vmatprep.subr.bf16.mxu0 0
    %1552 = vmatpush1.bf16.msra.mxu0 0
    %1553 = vmatprep.subr.bf16.mxu0 0
    %1554 = vmatpush1.bf16.msra.mxu0 0
    %1555 = vmatprep.subr.bf16.mxu0 0
    %1556 = vmatpush1.bf16.msra.mxu0 0
    %1557 = vmatprep.subr.bf16.mxu0 0
    %1558 = vmatpush1.bf16.msra.mxu0 0
    %1559 = vmatprep.subr.bf16.mxu0 0
    %1560 = vmatpush1.bf16.msra.mxu0 0
    %1561 = vmatprep.subr.bf16.mxu0 0
    %1562 = vmatpush1.bf16.msra.mxu0 0
    %1563 = vmatprep.subr.bf16.mxu0 0
    %1564 = vmatpush1.bf16.msra.mxu0 0
    %1565 = vmatprep.subr.bf16.mxu0 0
    %1566 = vmatpush1.bf16.msra.mxu0 0
    %1567 = vmatprep.subr.bf16.mxu0 0
    %1568 = vmatpush1.bf16.msra.mxu0 0
    %1569 = vmatprep.mubr.bf16.mxu0 0
    %1570 = vmatmul.mubr.bf16.gmra.mrb[0].mxu0 %v1535
    %v1571 = vpop.f32.mrb[0].mxu0
    %v1572 = vadd.f32 0.0, %v1571
    %v1573 = vpop.f32.mrb[0].mxu0
    %v1574 = vpop.f32.mrb[0].mxu0
    %v1575 = vadd.f32 0.0, %v1574
    %v1576 = vpop.f32.mrb[0].mxu0
    %1577 = vdwg.mxu0
    %v1579 = vsel %vm1055, %v1533, 0
    %1581 = vmatprep.subr.bf16.mxu0 0
    %1582 = vmatpush1.bf16.msra.mxu0 %v971
    %1583 = vmatprep.subr.bf16.mxu0 0
    %1584 = vmatpush1.bf16.msra.mxu0 0
    %1585 = vmatprep.subr.bf16.mxu0 0
    %1586 = vmatpush1.bf16.msra.mxu0 0
    %1587 = vmatprep.subr.bf16.mxu0 0
    %1588 = vmatpush1.bf16.msra.mxu0 0
    %1589 = vmatprep.subr.bf16.mxu0 0
    %1590 = vmatpush1.bf16.msra.mxu0 0
    %1591 = vmatprep.subr.bf16.mxu0 0
    %1592 = vmatpush1.bf16.msra.mxu0 0
    %1593 = vmatprep.subr.bf16.mxu0 0
    %1594 = vmatpush1.bf16.msra.mxu0 0
    %1595 = vmatprep.subr.bf16.mxu0 0
    %1596 = vmatpush1.bf16.msra.mxu0 0
    %1597 = vmatprep.subr.bf16.mxu0 0
    %1598 = vmatpush1.bf16.msra.mxu0 0
    %1599 = vmatprep.subr.bf16.mxu0 0
    %1600 = vmatpush1.bf16.msra.mxu0 0
    %1601 = vmatprep.subr.bf16.mxu0 0
    %1602 = vmatpush1.bf16.msra.mxu0 0
    %1603 = vmatprep.subr.bf16.mxu0 0
    %1604 = vmatpush1.bf16.msra.mxu0 0
    %1605 = vmatprep.subr.bf16.mxu0 0
    %1606 = vmatpush1.bf16.msra.mxu0 0
    %1607 = vmatprep.subr.bf16.mxu0 0
    %1608 = vmatpush1.bf16.msra.mxu0 0
    %1609 = vmatprep.subr.bf16.mxu0 0
    %1610 = vmatpush1.bf16.msra.mxu0 0
    %1611 = vmatprep.subr.bf16.mxu0 0
    %1612 = vmatpush1.bf16.msra.mxu0 0
    %1613 = vmatprep.mubr.bf16.mxu0 0
    %1614 = vmatmul.mubr.bf16.gmra.mrb[0].mxu0 %v1579
    %v1615 = vpop.f32.mrb[0].mxu0
    %v1616 = vadd.f32 0.0, %v1615
    %v1617 = vpop.f32.mrb[0].mxu0
    %v1618 = vpop.f32.mrb[0].mxu0
    %v1619 = vadd.f32 0.0, %v1618
    %v1620 = vpop.f32.mrb[0].mxu0
    %1621 = vdwg.mxu0
    %1622 = vmatprep.subr.bf16.mxu0 0
    %1623 = vmatpush1.bf16.xpose.msra.mxu0 %v956
    %1624 = vmatprep.subr.bf16.mxu0 0
    %1625 = vmatpush1.bf16.xpose.msra.mxu0 0
    %1626 = vmatprep.subr.bf16.mxu0 0
    %1627 = vmatpush1.bf16.xpose.msra.mxu0 0
    %1628 = vmatprep.subr.bf16.mxu0 0
    %1629 = vmatpush1.bf16.xpose.msra.mxu0 0
    %1630 = vmatprep.subr.bf16.mxu0 0
    %1631 = vmatpush1.bf16.xpose.msra.mxu0 0
    %1632 = vmatprep.subr.bf16.mxu0 0
    %1633 = vmatpush1.bf16.xpose.msra.mxu0 0
    %1634 = vmatprep.subr.bf16.mxu0 0
    %1635 = vmatpush1.bf16.xpose.msra.mxu0 0
    %1636 = vmatprep.subr.bf16.mxu0 0
    %1637 = vmatpush1.bf16.xpose.msra.mxu0 0
    %1638 = vmatprep.subr.bf16.mxu0 0
    %1639 = vmatpush1.bf16.xpose.msra.mxu0 0
    %1640 = vmatprep.subr.bf16.mxu0 0
    %1641 = vmatpush1.bf16.xpose.msra.mxu0 0
    %1642 = vmatprep.subr.bf16.mxu0 0
    %1643 = vmatpush1.bf16.xpose.msra.mxu0 0
    %1644 = vmatprep.subr.bf16.mxu0 0
    %1645 = vmatpush1.bf16.xpose.msra.mxu0 0
    %1646 = vmatprep.subr.bf16.mxu0 0
    %1647 = vmatpush1.bf16.xpose.msra.mxu0 0
    %1648 = vmatprep.subr.bf16.mxu0 0
    %1649 = vmatpush1.bf16.xpose.msra.mxu0 0
    %1650 = vmatprep.subr.bf16.mxu0 0
    %1651 = vmatpush1.bf16.xpose.msra.mxu0 0
    %1652 = vmatprep.subr.bf16.mxu0 0
    %1653 = vmatpush1.bf16.xpose.msra.mxu0 0
    %1654 = vmatprep.mubr.bf16.mxu0 0
    %1655 = vmatmul.mubr.bf16.gmra.mrb[0].mxu0 %v952
    %v1656 = vpop.f32.mrb[0].mxu0
    %v1657 = vadd.f32 0.0, %v1656
    %v1658 = vpop.f32.mrb[0].mxu0
    %v1659 = vpop.f32.mrb[0].mxu0
    %v1660 = vadd.f32 0.0, %v1659
    %v1661 = vpop.f32.mrb[0].mxu0
    %1662 = vdwg.mxu0
    %1663 = vmatprep.subr.bf16.mxu0 0
    %1664 = vmatpush1.bf16.xpose.msra.mxu0 %v968
    %1665 = vmatprep.subr.bf16.mxu0 0
    %1666 = vmatpush1.bf16.xpose.msra.mxu0 0
    %1667 = vmatprep.subr.bf16.mxu0 0
    %1668 = vmatpush1.bf16.xpose.msra.mxu0 0
    %1669 = vmatprep.subr.bf16.mxu0 0
    %1670 = vmatpush1.bf16.xpose.msra.mxu0 0
    %1671 = vmatprep.subr.bf16.mxu0 0
    %1672 = vmatpush1.bf16.xpose.msra.mxu0 0
    %1673 = vmatprep.subr.bf16.mxu0 0
    %1674 = vmatpush1.bf16.xpose.msra.mxu0 0
    %1675 = vmatprep.subr.bf16.mxu0 0
    %1676 = vmatpush1.bf16.xpose.msra.mxu0 0
    %1677 = vmatprep.subr.bf16.mxu0 0
    %1678 = vmatpush1.bf16.xpose.msra.mxu0 0
    %1679 = vmatprep.subr.bf16.mxu0 0
    %1680 = vmatpush1.bf16.xpose.msra.mxu0 0
    %1681 = vmatprep.subr.bf16.mxu0 0
    %1682 = vmatpush1.bf16.xpose.msra.mxu0 0
    %1683 = vmatprep.subr.bf16.mxu0 0
    %1684 = vmatpush1.bf16.xpose.msra.mxu0 0
    %1685 = vmatprep.subr.bf16.mxu0 0
    %1686 = vmatpush1.bf16.xpose.msra.mxu0 0
    %1687 = vmatprep.subr.bf16.mxu0 0
    %1688 = vmatpush1.bf16.xpose.msra.mxu0 0
    %1689 = vmatprep.subr.bf16.mxu0 0
    %1690 = vmatpush1.bf16.xpose.msra.mxu0 0
    %1691 = vmatprep.subr.bf16.mxu0 0
    %1692 = vmatpush1.bf16.xpose.msra.mxu0 0
    %1693 = vmatprep.subr.bf16.mxu0 0
    %1694 = vmatpush1.bf16.xpose.msra.mxu0 0
    %1695 = vmatprep.mubr.bf16.mxu0 0
    %1696 = vmatmul.mubr.bf16.gmra.mrb[0].mxu0 %v964
    %v1697 = vpop.f32.mrb[0].mxu0
    %v1698 = vadd.f32 0.0, %v1697
    %v1699 = vpop.f32.mrb[0].mxu0
    %v1700 = vpop.f32.mrb[0].mxu0
    %v1701 = vadd.f32 0.0, %v1700
    %v1702 = vpop.f32.mrb[0].mxu0
    %1703 = vdwg.mxu0
    %v1704 = vsel %vm1055, %v1657, -inf
    %1705 = vmax.xlane.f32.xlu0 %v1704
    %v1706 = vpop.xlane.xlu0 %1705
    %v1707 = vsel %vm1055, %v1660, -inf
    %1708 = vmax.xlane.f32.xlu0 %v1707
    %v1709 = vpop.xlane.xlu0 %1708
    %v1710 = vsel %vm1055, %v1698, -inf
    %1711 = vmax.xlane.f32.xlu0 %v1710
    %v1712 = vpop.xlane.xlu0 %1711
    %v1713 = vsel %vm1055, %v1701, -inf
    %1714 = vmax.xlane.f32.xlu0 %v1713
    %v1715 = vpop.xlane.xlu0 %1714
    %v1716 = vsub.f32 %v1657, %v1706
    %v1717 = vsub.f32 %v1660, %v1709
    %v1718 = vsub.f32 %v1698, %v1712
    %v1719 = vsub.f32 %v1701, %v1715
    %v1720 = vmul.f32 %v1716, 1.442695
    %v1721 = vpow.pop %v1720
    %v1722 = vmul.f32 %v1717, 1.442695
    %v1723 = vpow.pop %v1722
    %v1724 = vmul.f32 %v1718, 1.442695
    %v1725 = vpow.pop %v1724
    %v1726 = vmul.f32 %v1719, 1.442695
    %v1727 = vpow.pop %v1726
    %v1728 = vsel %vm1055, %v1721, 0.0
    %1729 = vadd.xlane.f32.xlu0 %v1728
    %v1730 = vpop.xlane.xlu0 %1729
    %v1731 = vsel %vm1055, %v1723, 0.0
    %1732 = vadd.xlane.f32.xlu0 %v1731
    %v1733 = vpop.xlane.xlu0 %1732
    %v1734 = vsel %vm1055, %v1725, 0.0
    %1735 = vadd.xlane.f32.xlu0 %v1734
    %v1736 = vpop.xlane.xlu0 %1735
    %v1737 = vsel %vm1055, %v1727, 0.0
    %1738 = vadd.xlane.f32.xlu0 %v1737
    %v1739 = vpop.xlane.xlu0 %1738
    %v1740 = vrcp.pop %v1730
    %v1741 = vrcp.pop %v1733
    %v1742 = vrcp.pop %v1736
    %v1743 = vrcp.pop %v1739
    %v1744 = vmul.f32 %v1721, %v1740
    %v1745 = vmul.f32 %v1723, %v1741
    %v1746 = vmul.f32 %v1725, %v1742
    %v1747 = vmul.f32 %v1727, %v1743
    %v1748 = vpack.c.bf16 %v1745, %v1744
    %v1749 = vpack.c.bf16 %v1747, %v1746
    %v1751 = vsel %vm1055, %v1748, 0
    %1753 = vmatprep.subr.bf16.mxu0 0
    %1754 = vmatpush1.bf16.msra.mxu0 %v960
    %1755 = vmatprep.subr.bf16.mxu0 0
    %1756 = vmatpush1.bf16.msra.mxu0 0
    %1757 = vmatprep.subr.bf16.mxu0 0
    %1758 = vmatpush1.bf16.msra.mxu0 0
    %1759 = vmatprep.subr.bf16.mxu0 0
    %1760 = vmatpush1.bf16.msra.mxu0 0
    %1761 = vmatprep.subr.bf16.mxu0 0
    %1762 = vmatpush1.bf16.msra.mxu0 0
    %1763 = vmatprep.subr.bf16.mxu0 0
    %1764 = vmatpush1.bf16.msra.mxu0 0
    %1765 = vmatprep.subr.bf16.mxu0 0
    %1766 = vmatpush1.bf16.msra.mxu0 0
    %1767 = vmatprep.subr.bf16.mxu0 0
    %1768 = vmatpush1.bf16.msra.mxu0 0
    %1769 = vmatprep.subr.bf16.mxu0 0
    %1770 = vmatpush1.bf16.msra.mxu0 0
    %1771 = vmatprep.subr.bf16.mxu0 0
    %1772 = vmatpush1.bf16.msra.mxu0 0
    %1773 = vmatprep.subr.bf16.mxu0 0
    %1774 = vmatpush1.bf16.msra.mxu0 0
    %1775 = vmatprep.subr.bf16.mxu0 0
    %1776 = vmatpush1.bf16.msra.mxu0 0
    %1777 = vmatprep.subr.bf16.mxu0 0
    %1778 = vmatpush1.bf16.msra.mxu0 0
    %1779 = vmatprep.subr.bf16.mxu0 0
    %1780 = vmatpush1.bf16.msra.mxu0 0
    %1781 = vmatprep.subr.bf16.mxu0 0
    %1782 = vmatpush1.bf16.msra.mxu0 0
    %1783 = vmatprep.subr.bf16.mxu0 0
    %1784 = vmatpush1.bf16.msra.mxu0 0
    %1785 = vmatprep.mubr.bf16.mxu0 0
    %1786 = vmatmul.mubr.bf16.gmra.mrb[0].mxu0 %v1751
    %v1787 = vpop.f32.mrb[0].mxu0
    %v1788 = vadd.f32 0.0, %v1787
    %v1789 = vpop.f32.mrb[0].mxu0
    %v1790 = vpop.f32.mrb[0].mxu0
    %v1791 = vadd.f32 0.0, %v1790
    %v1792 = vpop.f32.mrb[0].mxu0
    %1793 = vdwg.mxu0
    %v1795 = vsel %vm1055, %v1749, 0
    %1797 = vmatprep.subr.bf16.mxu0 0
    %1798 = vmatpush1.bf16.msra.mxu0 %v972
    %1799 = vmatprep.subr.bf16.mxu0 0
    %1800 = vmatpush1.bf16.msra.mxu0 0
    %1801 = vmatprep.subr.bf16.mxu0 0
    %1802 = vmatpush1.bf16.msra.mxu0 0
    %1803 = vmatprep.subr.bf16.mxu0 0
    %1804 = vmatpush1.bf16.msra.mxu0 0
    %1805 = vmatprep.subr.bf16.mxu0 0
    %1806 = vmatpush1.bf16.msra.mxu0 0
    %1807 = vmatprep.subr.bf16.mxu0 0
    %1808 = vmatpush1.bf16.msra.mxu0 0
    %1809 = vmatprep.subr.bf16.mxu0 0
    %1810 = vmatpush1.bf16.msra.mxu0 0
    %1811 = vmatprep.subr.bf16.mxu0 0
    %1812 = vmatpush1.bf16.msra.mxu0 0
    %1813 = vmatprep.subr.bf16.mxu0 0
    %1814 = vmatpush1.bf16.msra.mxu0 0
    %1815 = vmatprep.subr.bf16.mxu0 0
    %1816 = vmatpush1.bf16.msra.mxu0 0
    %1817 = vmatprep.subr.bf16.mxu0 0
    %1818 = vmatpush1.bf16.msra.mxu0 0
    %1819 = vmatprep.subr.bf16.mxu0 0
    %1820 = vmatpush1.bf16.msra.mxu0 0
    %1821 = vmatprep.subr.bf16.mxu0 0
    %1822 = vmatpush1.bf16.msra.mxu0 0
    %1823 = vmatprep.subr.bf16.mxu0 0
    %1824 = vmatpush1.bf16.msra.mxu0 0
    %1825 = vmatprep.subr.bf16.mxu0 0
    %1826 = vmatpush1.bf16.msra.mxu0 0
    %1827 = vmatprep.subr.bf16.mxu0 0
    %1828 = vmatpush1.bf16.msra.mxu0 0
    %1829 = vmatprep.mubr.bf16.mxu0 0
    %1830 = vmatmul.mubr.bf16.gmra.mrb[0].mxu0 %v1795
    %v1831 = vpop.f32.mrb[0].mxu0
    %v1832 = vadd.f32 0.0, %v1831
    %v1833 = vpop.f32.mrb[0].mxu0
    %v1834 = vpop.f32.mrb[0].mxu0
    %v1835 = vadd.f32 0.0, %v1834
    %v1836 = vpop.f32.mrb[0].mxu0
    %1837 = vdwg.mxu0
    %v1838 = vpack.c.bf16 %v1143, %v1140
    %v1839 = vpack.c.bf16 %v1359, %v1356
    %v1840 = vpack.c.bf16 %v1575, %v1572
    %v1841 = vpack.c.bf16 %v1791, %v1788
    %v1842 = vpack.c.bf16 %v1187, %v1184
    %v1843 = vpack.c.bf16 %v1403, %v1400
    %v1844 = vpack.c.bf16 %v1619, %v1616
    %v1845 = vpack.c.bf16 %v1835, %v1832
    %v1846 = vld [vmem:[%s5] sm:$0xf]
    %v1847 = vld [vmem:[%s5 + $0x4] sm:$0xf]
    %v1848 = vld [vmem:[%s5 + $0x8] sm:$0xf]
    %v1849 = vld [vmem:[%s5 + $0xc] sm:$0xf]
    %v1850 = vld [vmem:[%s5 + $0x10] sm:$0xf]
    %v1851 = vld [vmem:[%s5 + $0x14] sm:$0xf]
    %v1852 = vld [vmem:[%s5 + $0x18] sm:$0xf]
    %v1853 = vld [vmem:[%s5 + $0x1c] sm:$0xf]
    %v1854 = vld [vmem:[%s5 + $0x20] sm:$0xf]
    %v1855 = vld [vmem:[%s5 + $0x24] sm:$0xf]
    %v1856 = vld [vmem:[%s5 + $0x28] sm:$0xf]
    %v1857 = vld [vmem:[%s5 + $0x2c] sm:$0xf]
    %v1858 = vld [vmem:[%s5 + $0x30] sm:$0xf]
    %v1859 = vld [vmem:[%s5 + $0x34] sm:$0xf]
    %v1860 = vld [vmem:[%s5 + $0x38] sm:$0xf]
    %v1861 = vld [vmem:[%s5 + $0x3c] sm:$0xf]
    %v1862 = vld [vmem:[%s5 + $0x40] sm:$0xf]
    %v1863 = vld [vmem:[%s5 + $0x44] sm:$0xf]
    %v1864 = vld [vmem:[%s5 + $0x48] sm:$0xf]
    %v1865 = vld [vmem:[%s5 + $0x4c] sm:$0xf]
    %v1866 = vld [vmem:[%s5 + $0x50] sm:$0xf]
    %v1867 = vld [vmem:[%s5 + $0x54] sm:$0xf]
    %v1868 = vld [vmem:[%s5 + $0x58] sm:$0xf]
    %v1869 = vld [vmem:[%s5 + $0x5c] sm:$0xf]
    %v1870 = vld [vmem:[%s5 + $0x60] sm:$0xf]
    %v1871 = vld [vmem:[%s5 + $0x64] sm:$0xf]
    %v1872 = vld [vmem:[%s5 + $0x68] sm:$0xf]
    %v1873 = vld [vmem:[%s5 + $0x6c] sm:$0xf]
    %v1874 = vld [vmem:[%s5 + $0x70] sm:$0xf]
    %v1875 = vld [vmem:[%s5 + $0x74] sm:$0xf]
    %v1876 = vld [vmem:[%s5 + $0x78] sm:$0xf]
    %v1877 = vld [vmem:[%s5 + $0x7c] sm:$0xf]
    %v1878 = vld [vmem:[%s5 + $0x80] sm:$0xf]
    %v1879 = vld [vmem:[%s5 + $0x84] sm:$0xf]
    %v1880 = vld [vmem:[%s5 + $0x88] sm:$0xf]
    %v1881 = vld [vmem:[%s5 + $0x8c] sm:$0xf]
    %v1882 = vld [vmem:[%s5 + $0x90] sm:$0xf]
    %v1883 = vld [vmem:[%s5 + $0x94] sm:$0xf]
    %v1884 = vld [vmem:[%s5 + $0x98] sm:$0xf]
    %v1885 = vld [vmem:[%s5 + $0x9c] sm:$0xf]
    %v1886 = vld [vmem:[%s5 + $0xa0] sm:$0xf]
    %v1887 = vld [vmem:[%s5 + $0xa4] sm:$0xf]
    %v1888 = vld [vmem:[%s5 + $0xa8] sm:$0xf]
    %v1889 = vld [vmem:[%s5 + $0xac] sm:$0xf]
    %v1890 = vld [vmem:[%s5 + $0xb0] sm:$0xf]
    %v1891 = vld [vmem:[%s5 + $0xb4] sm:$0xf]
    %v1892 = vld [vmem:[%s5 + $0xb8] sm:$0xf]
    %v1893 = vld [vmem:[%s5 + $0xbc] sm:$0xf]
    %v1894 = vld [vmem:[%s5 + $0xc0] sm:$0xf]
    %v1895 = vld [vmem:[%s5 + $0xc4] sm:$0xf]
    %v1896 = vld [vmem:[%s5 + $0xc8] sm:$0xf]
    %v1897 = vld [vmem:[%s5 + $0xcc] sm:$0xf]
    %v1898 = vld [vmem:[%s5 + $0xd0] sm:$0xf]
    %v1899 = vld [vmem:[%s5 + $0xd4] sm:$0xf]
    %v1900 = vld [vmem:[%s5 + $0xd8] sm:$0xf]
    %v1901 = vld [vmem:[%s5 + $0xdc] sm:$0xf]
    %v1902 = vld [vmem:[%s5 + $0xe0] sm:$0xf]
    %v1903 = vld [vmem:[%s5 + $0xe4] sm:$0xf]
    %v1904 = vld [vmem:[%s5 + $0xe8] sm:$0xf]
    %v1905 = vld [vmem:[%s5 + $0xec] sm:$0xf]
    %v1906 = vld [vmem:[%s5 + $0xf0] sm:$0xf]
    %v1907 = vld [vmem:[%s5 + $0xf4] sm:$0xf]
    %v1908 = vld [vmem:[%s5 + $0xf8] sm:$0xf]
    %v1909 = vld [vmem:[%s5 + $0xfc] sm:$0xf]
    %v1910 = vld [vmem:[#allocation7] sm:$0x1]
    %v1912 = vlaneseq
    %v1913 = vshrl.u32 %v1912, 7
    %v1914 = vsub.s32 0, %v1913
    %v1915 = vrot.slane %v1910, %v1914
    %v1981 = vunpack.c.l.b16 %v1846
    %v1982 = vunpack.c.l.b16 %v1847
    %v1983 = vunpack.c.l.b16 %v1848
    %v1984 = vunpack.c.l.b16 %v1849
    %v1985 = vunpack.c.l.b16 %v1850
    %v1986 = vunpack.c.l.b16 %v1851
    %v1987 = vunpack.c.l.b16 %v1852
    %v1988 = vunpack.c.l.b16 %v1853
    %v1989 = vunpack.c.l.b16 %v1854
    %v1990 = vunpack.c.l.b16 %v1855
    %v1991 = vunpack.c.l.b16 %v1856
    %v1992 = vunpack.c.l.b16 %v1857
    %v1993 = vunpack.c.l.b16 %v1858
    %v1994 = vunpack.c.l.b16 %v1859
    %v1995 = vunpack.c.l.b16 %v1860
    %v1996 = vunpack.c.l.b16 %v1861
    %v1997 = vunpack.c.l.b16 %v1862
    %v1998 = vunpack.c.l.b16 %v1863
    %v1999 = vunpack.c.l.b16 %v1864
    %v2000 = vunpack.c.l.b16 %v1865
    %v2001 = vunpack.c.l.b16 %v1866
    %v2002 = vunpack.c.l.b16 %v1867
    %v2003 = vunpack.c.l.b16 %v1868
    %v2004 = vunpack.c.l.b16 %v1869
    %v2005 = vunpack.c.l.b16 %v1870
    %v2006 = vunpack.c.l.b16 %v1871
    %v2007 = vunpack.c.l.b16 %v1872
    %v2008 = vunpack.c.l.b16 %v1873
    %v2009 = vunpack.c.l.b16 %v1874
    %v2010 = vunpack.c.l.b16 %v1875
    %v2011 = vunpack.c.l.b16 %v1876
    %v2012 = vunpack.c.l.b16 %v1877
    %v2013 = vunpack.c.l.b16 %v1878
    %v2014 = vunpack.c.l.b16 %v1879
    %v2015 = vunpack.c.l.b16 %v1880
    %v2016 = vunpack.c.l.b16 %v1881
    %v2017 = vunpack.c.l.b16 %v1882
    %v2018 = vunpack.c.l.b16 %v1883
    %v2019 = vunpack.c.l.b16 %v1884
    %v2020 = vunpack.c.l.b16 %v1885
    %v2021 = vunpack.c.l.b16 %v1886
    %v2022 = vunpack.c.l.b16 %v1887
    %v2023 = vunpack.c.l.b16 %v1888
    %v2024 = vunpack.c.l.b16 %v1889
    %v2025 = vunpack.c.l.b16 %v1890
    %v2026 = vunpack.c.l.b16 %v1891
    %v2027 = vunpack.c.l.b16 %v1892
    %v2028 = vunpack.c.l.b16 %v1893
    %v2029 = vunpack.c.l.b16 %v1894
    %v2030 = vunpack.c.l.b16 %v1895
    %v2031 = vunpack.c.l.b16 %v1896
    %v2032 = vunpack.c.l.b16 %v1897
    %v2033 = vunpack.c.l.b16 %v1898
    %v2034 = vunpack.c.l.b16 %v1899
    %v2035 = vunpack.c.l.b16 %v1900
    %v2036 = vunpack.c.l.b16 %v1901
    %v2037 = vunpack.c.l.b16 %v1902
    %v2038 = vunpack.c.l.b16 %v1903
    %v2039 = vunpack.c.l.b16 %v1904
    %v2040 = vunpack.c.l.b16 %v1905
    %v2041 = vunpack.c.l.b16 %v1906
    %v2042 = vunpack.c.l.b16 %v1907
    %v2043 = vunpack.c.l.b16 %v1908
    %v2044 = vunpack.c.l.b16 %v1909
    %v2045 = vpack.c.b16 %v1982, %v1981
    %v2046 = vpack.c.b16 %v1984, %v1983
    %v2047 = vpack.c.b16 %v1986, %v1985
    %v2048 = vpack.c.b16 %v1988, %v1987
    %v2049 = vpack.c.b16 %v1990, %v1989
    %v2050 = vpack.c.b16 %v1992, %v1991
    %v2051 = vpack.c.b16 %v1994, %v1993
    %v2052 = vpack.c.b16 %v1996, %v1995
    %v2053 = vpack.c.b16 %v1998, %v1997
    %v2054 = vpack.c.b16 %v2000, %v1999
    %v2055 = vpack.c.b16 %v2002, %v2001
    %v2056 = vpack.c.b16 %v2004, %v2003
    %v2057 = vpack.c.b16 %v2006, %v2005
    %v2058 = vpack.c.b16 %v2008, %v2007
    %v2059 = vpack.c.b16 %v2010, %v2009
    %v2060 = vpack.c.b16 %v2012, %v2011
    %v2061 = vpack.c.b16 %v2014, %v2013
    %v2062 = vpack.c.b16 %v2016, %v2015
    %v2063 = vpack.c.b16 %v2018, %v2017
    %v2064 = vpack.c.b16 %v2020, %v2019
    %v2065 = vpack.c.b16 %v2022, %v2021
    %v2066 = vpack.c.b16 %v2024, %v2023
    %v2067 = vpack.c.b16 %v2026, %v2025
    %v2068 = vpack.c.b16 %v2028, %v2027
    %v2069 = vpack.c.b16 %v2030, %v2029
    %v2070 = vpack.c.b16 %v2032, %v2031
    %v2071 = vpack.c.b16 %v2034, %v2033
    %v2072 = vpack.c.b16 %v2036, %v2035
    %v2073 = vpack.c.b16 %v2038, %v2037
    %v2074 = vpack.c.b16 %v2040, %v2039
    %v2075 = vpack.c.b16 %v2042, %v2041
    %v2076 = vpack.c.b16 %v2044, %v2043
    %2109 = vmatprep.subr.bf16.mxu0 0
    %2110 = vmatpush1.bf16.msra.mxu0 %v2045
    %2111 = vmatprep.subr.bf16.mxu0 0
    %2112 = vmatpush1.bf16.msra.mxu0 %v2046
    %2113 = vmatprep.subr.bf16.mxu0 0
    %2114 = vmatpush1.bf16.msra.mxu0 %v2047
    %2115 = vmatprep.subr.bf16.mxu0 0
    %2116 = vmatpush1.bf16.msra.mxu0 %v2048
    %2117 = vmatprep.subr.bf16.mxu0 0
    %2118 = vmatpush1.bf16.msra.mxu0 %v2049
    %2119 = vmatprep.subr.bf16.mxu0 0
    %2120 = vmatpush1.bf16.msra.mxu0 %v2050
    %2121 = vmatprep.subr.bf16.mxu0 0
    %2122 = vmatpush1.bf16.msra.mxu0 %v2051
    %2123 = vmatprep.subr.bf16.mxu0 0
    %2124 = vmatpush1.bf16.msra.mxu0 %v2052
    %2125 = vmatprep.subr.bf16.mxu0 0
    %2126 = vmatpush1.bf16.msra.mxu0 %v2053
    %2127 = vmatprep.subr.bf16.mxu0 0
    %2128 = vmatpush1.bf16.msra.mxu0 %v2054
    %2129 = vmatprep.subr.bf16.mxu0 0
    %2130 = vmatpush1.bf16.msra.mxu0 %v2055
    %2131 = vmatprep.subr.bf16.mxu0 0
    %2132 = vmatpush1.bf16.msra.mxu0 %v2056
    %2133 = vmatprep.subr.bf16.mxu0 0
    %2134 = vmatpush1.bf16.msra.mxu0 %v2057
    %2135 = vmatprep.subr.bf16.mxu0 0
    %2136 = vmatpush1.bf16.msra.mxu0 %v2058
    %2137 = vmatprep.subr.bf16.mxu0 0
    %2138 = vmatpush1.bf16.msra.mxu0 %v2059
    %2139 = vmatprep.subr.bf16.mxu0 0
    %2140 = vmatpush1.bf16.msra.mxu0 %v2060
    %2141 = vmatprep.mubr.bf16.mxu0 %v1839
    %2142 = vmatmul.mubr.bf16.gmra.mrb[0].mxu0 %v1838
    %v2143 = vpop.f32.mrb[0].mxu0
    %v2144 = vadd.f32 %v1915, %v2143
    %v2145 = vpop.f32.mrb[0].mxu0
    %v2146 = vpop.f32.mrb[0].mxu0
    %v2147 = vadd.f32 %v1915, %v2146
    %v2148 = vpop.f32.mrb[0].mxu0
    %2149 = vmatprep.mubr.bf16.mxu0 %v1843
    %2150 = vmatmul.mubr.bf16.gmra.mrb[0].mxu0 %v1842
    %v2151 = vpop.f32.mrb[0].mxu0
    %v2152 = vadd.f32 %v1915, %v2151
    %v2153 = vpop.f32.mrb[0].mxu0
    %v2154 = vpop.f32.mrb[0].mxu0
    %v2155 = vadd.f32 %v1915, %v2154
    %v2156 = vpop.f32.mrb[0].mxu0
    %2157 = vdwg.mxu0
    %2158 = vmatprep.subr.bf16.mxu0 0
    %2159 = vmatpush1.bf16.msra.mxu0 %v2061
    %2160 = vmatprep.subr.bf16.mxu0 0
    %2161 = vmatpush1.bf16.msra.mxu0 %v2062
    %2162 = vmatprep.subr.bf16.mxu0 0
    %2163 = vmatpush1.bf16.msra.mxu0 %v2063
    %2164 = vmatprep.subr.bf16.mxu0 0
    %2165 = vmatpush1.bf16.msra.mxu0 %v2064
    %2166 = vmatprep.subr.bf16.mxu0 0
    %2167 = vmatpush1.bf16.msra.mxu0 %v2065
    %2168 = vmatprep.subr.bf16.mxu0 0
    %2169 = vmatpush1.bf16.msra.mxu0 %v2066
    %2170 = vmatprep.subr.bf16.mxu0 0
    %2171 = vmatpush1.bf16.msra.mxu0 %v2067
    %2172 = vmatprep.subr.bf16.mxu0 0
    %2173 = vmatpush1.bf16.msra.mxu0 %v2068
    %2174 = vmatprep.subr.bf16.mxu0 0
    %2175 = vmatpush1.bf16.msra.mxu0 %v2069
    %2176 = vmatprep.subr.bf16.mxu0 0
    %2177 = vmatpush1.bf16.msra.mxu0 %v2070
    %2178 = vmatprep.subr.bf16.mxu0 0
    %2179 = vmatpush1.bf16.msra.mxu0 %v2071
    %2180 = vmatprep.subr.bf16.mxu0 0
    %2181 = vmatpush1.bf16.msra.mxu0 %v2072
    %2182 = vmatprep.subr.bf16.mxu0 0
    %2183 = vmatpush1.bf16.msra.mxu0 %v2073
    %2184 = vmatprep.subr.bf16.mxu0 0
    %2185 = vmatpush1.bf16.msra.mxu0 %v2074
    %2186 = vmatprep.subr.bf16.mxu0 0
    %2187 = vmatpush1.bf16.msra.mxu0 %v2075
    %2188 = vmatprep.subr.bf16.mxu0 0
    %2189 = vmatpush1.bf16.msra.mxu0 %v2076
    %2190 = vmatprep.mubr.bf16.mxu0 %v1841
    %2191 = vmatmul.mubr.bf16.gmra.mrb[0].mxu0 %v1840
    %v2192 = vpop.f32.mrb[0].mxu0
    %v2193 = vadd.f32 %v2144, %v2192
    %v2194 = vpop.f32.mrb[0].mxu0
    %v2195 = vpop.f32.mrb[0].mxu0
    %v2196 = vadd.f32 %v2147, %v2195
    %v2197 = vpop.f32.mrb[0].mxu0
    %2198 = vmatprep.mubr.bf16.mxu0 %v1845
    %2199 = vmatmul.mubr.bf16.gmra.mrb[0].mxu0 %v1844
    %v2200 = vpop.f32.mrb[0].mxu0
    %v2201 = vadd.f32 %v2152, %v2200
    %v2202 = vpop.f32.mrb[0].mxu0
    %v2203 = vpop.f32.mrb[0].mxu0
    %v2204 = vadd.f32 %v2155, %v2203
    %v2205 = vpop.f32.mrb[0].mxu0
    %2206 = vdwg.mxu0
    %v2207 = vlaneseq
    %v2208 = vshrl.u32 %v2207, 7
    %v2209 = vsub.s32 0, %v2208
    %v2210 = vrot.slane %v189, %v2209
    %v2211 = vlaneseq
    %v2212 = vshrl.u32 %v2211, 7
    %v2213 = vsub.s32 0, %v2212
    %v2214 = vrot.slane %v190, %v2213
    %v2215 = vmul.f32 %v2193, %v2210
    %v2216 = vmul.f32 %v2196, %v2210
    %v2217 = vmul.f32 %v2201, %v2214
    %v2218 = vmul.f32 %v2204, %v2214
    %v2219 = vadd.f32 %v185, %v2215
    %v2220 = vadd.f32 %v186, %v2216
    %v2221 = vadd.f32 %v187, %v2217
    %v2222 = vadd.f32 %v188, %v2218
    %v2223 = vsel %vm191, %v2219, 0.0
    %2224 = vadd.xlane.f32.xlu0 %v2223
    %v2225 = vpop.xlane.xlu0 %2224
    %v2226 = vsel %vm191, %v2220, 0.0
    %2227 = vadd.xlane.f32.xlu0 %v2226
    %v2228 = vpop.xlane.xlu0 %2227
    %v2229 = vsel %vm191, %v2221, 0.0
    %2230 = vadd.xlane.f32.xlu0 %v2229
    %v2231 = vpop.xlane.xlu0 %2230
    %v2232 = vsel %vm191, %v2222, 0.0
    %2233 = vadd.xlane.f32.xlu0 %v2232
    %v2234 = vpop.xlane.xlu0 %2233
    %v2235 = vmul.f32 %v2225, %v204
    %v2236 = vmul.f32 %v2228, %v204
    %v2237 = vmul.f32 %v2231, %v204
    %v2238 = vmul.f32 %v2234, %v204
    %v2239 = vsub.f32 %v2219, %v2235
    %v2240 = vsub.f32 %v2220, %v2236
    %v2241 = vsub.f32 %v2221, %v2237
    %v2242 = vsub.f32 %v2222, %v2238
    %v2243 = vmul.f32 %v2239, %v2239
    %v2244 = vmul.f32 %v2240, %v2240
    %v2245 = vmul.f32 %v2241, %v2241
    %v2246 = vmul.f32 %v2242, %v2242
    %v2247 = vsel %vm191, %v2243, 0.0
    %2248 = vadd.xlane.f32.xlu0 %v2247
    %v2249 = vpop.xlane.xlu0 %2248
    %v2250 = vsel %vm191, %v2244, 0.0
    %2251 = vadd.xlane.f32.xlu0 %v2250
    %v2252 = vpop.xlane.xlu0 %2251
    %v2253 = vsel %vm191, %v2245, 0.0
    %2254 = vadd.xlane.f32.xlu0 %v2253
    %v2255 = vpop.xlane.xlu0 %2254
    %v2256 = vsel %vm191, %v2246, 0.0
    %2257 = vadd.xlane.f32.xlu0 %v2256
    %v2258 = vpop.xlane.xlu0 %2257
    %v2259 = vmul.f32 %v2249, %v204
    %v2260 = vmul.f32 %v2252, %v204
    %v2261 = vmul.f32 %v2255, %v204
    %v2262 = vmul.f32 %v2258, %v204
    %v2263 = vadd.f32 %v2259, 1e-06
    %v2264 = vadd.f32 %v2260, 1e-06
    %v2265 = vadd.f32 %v2261, 1e-06
    %v2266 = vadd.f32 %v2262, 1e-06
    %v2267 = vrsqrt.pop %v2263
    %v2268 = vrsqrt.pop %v2264
    %v2269 = vrsqrt.pop %v2265
    %v2270 = vrsqrt.pop %v2266
    %v2271 = vmul.f32 %v2239, %v2267
    %v2272 = vmul.f32 %v2240, %v2268
    %v2273 = vmul.f32 %v2241, %v2269
    %v2274 = vmul.f32 %v2242, %v2270
    %v2275 = vld [vmem:[#allocation8] sm:$0x1]
    %v2277 = vlaneseq
    %v2278 = vshrl.u32 %v2277, 7
    %v2279 = vsub.s32 0, %v2278
    %v2280 = vrot.slane %v2275, %v2279
    %v2282 = vmul.f32 %v2271, %v2280
    %v2283 = vmul.f32 %v2272, %v2280
    %v2284 = vmul.f32 %v2273, %v2280
    %v2285 = vmul.f32 %v2274, %v2280
    %v2286 = vld [vmem:[#allocation10] sm:$0x1]
    %v2288 = vlaneseq
    %v2289 = vshrl.u32 %v2288, 7
    %v2290 = vsub.s32 0, %v2289
    %v2291 = vrot.slane %v2286, %v2290
    %v2293 = vadd.f32 %v2282, %v2291
    %v2294 = vadd.f32 %v2283, %v2291
    %v2295 = vadd.f32 %v2284, %v2291
    %v2296 = vadd.f32 %v2285, %v2291
    %v2297 = vpack.c.bf16 %v2294, %v2293
    %v2298 = vpack.c.bf16 %v2296, %v2295
    %v2299 = vld [vmem:[%s9] sm:$0xff]
    %v2300 = vld [vmem:[%s9 + $0x8] sm:$0xff]
    %v2301 = vld [vmem:[%s9 + $0x10] sm:$0xff]
    %v2302 = vld [vmem:[%s9 + $0x18] sm:$0xff]
    %v2303 = vld [vmem:[%s9 + $0x20] sm:$0xff]
    %v2304 = vld [vmem:[%s9 + $0x28] sm:$0xff]
    %v2305 = vld [vmem:[%s9 + $0x30] sm:$0xff]
    %v2306 = vld [vmem:[%s9 + $0x38] sm:$0xff]
    %v2307 = vld [vmem:[%s9 + $0x40] sm:$0xff]
    %v2308 = vld [vmem:[%s9 + $0x48] sm:$0xff]
    %v2309 = vld [vmem:[%s9 + $0x50] sm:$0xff]
    %v2310 = vld [vmem:[%s9 + $0x58] sm:$0xff]
    %v2311 = vld [vmem:[%s9 + $0x60] sm:$0xff]
    %v2312 = vld [vmem:[%s9 + $0x68] sm:$0xff]
    %v2313 = vld [vmem:[%s9 + $0x70] sm:$0xff]
    %v2314 = vld [vmem:[%s9 + $0x78] sm:$0xff]
    %v2315 = vld [vmem:[#allocation11] sm:$0xf]
    %v2317 = vlaneseq
    %v2318 = vshrl.u32 %v2317, 7
    %v2319 = vsub.s32 0, %v2318
    %v2320 = vrot.slane %v2315, %v2319
    %v2321 = vlaneseq
    %v2322 = vshrl.u32 %v2321, 7
    %v2323 = vsub.s32 1, %v2322
    %v2324 = vrot.slane %v2315, %v2323
    %v2325 = vlaneseq
    %v2326 = vshrl.u32 %v2325, 7
    %v2327 = vsub.s32 2, %v2326
    %v2328 = vrot.slane %v2315, %v2327
    %v2329 = vlaneseq
    %v2330 = vshrl.u32 %v2329, 7
    %v2331 = vsub.s32 3, %v2330
    %v2332 = vrot.slane %v2315, %v2331
    %v2353 = vunpack.c.l.b16 %v2299
    %v2354 = vunpack.c.h.b16 %v2299
    %v2355 = vunpack.c.l.b16 %v2300
    %v2356 = vunpack.c.h.b16 %v2300
    %v2357 = vunpack.c.l.b16 %v2301
    %v2358 = vunpack.c.h.b16 %v2301
    %v2359 = vunpack.c.l.b16 %v2302
    %v2360 = vunpack.c.h.b16 %v2302
    %v2361 = vunpack.c.l.b16 %v2303
    %v2362 = vunpack.c.h.b16 %v2303
    %v2363 = vunpack.c.l.b16 %v2304
    %v2364 = vunpack.c.h.b16 %v2304
    %v2365 = vunpack.c.l.b16 %v2305
    %v2366 = vunpack.c.h.b16 %v2305
    %v2367 = vunpack.c.l.b16 %v2306
    %v2368 = vunpack.c.h.b16 %v2306
    %v2369 = vunpack.c.l.b16 %v2307
    %v2370 = vunpack.c.h.b16 %v2307
    %v2371 = vunpack.c.l.b16 %v2308
    %v2372 = vunpack.c.h.b16 %v2308
    %v2373 = vunpack.c.l.b16 %v2309
    %v2374 = vunpack.c.h.b16 %v2309
    %v2375 = vunpack.c.l.b16 %v2310
    %v2376 = vunpack.c.h.b16 %v2310
    %v2377 = vunpack.c.l.b16 %v2311
    %v2378 = vunpack.c.h.b16 %v2311
    %v2379 = vunpack.c.l.b16 %v2312
    %v2380 = vunpack.c.h.b16 %v2312
    %v2381 = vunpack.c.l.b16 %v2313
    %v2382 = vunpack.c.h.b16 %v2313
    %v2383 = vunpack.c.l.b16 %v2314
    %v2384 = vunpack.c.h.b16 %v2314
    %v2385 = vpack.c.b16 %v2357, %v2353
    %v2386 = vpack.c.b16 %v2358, %v2354
    %v2387 = vpack.c.b16 %v2359, %v2355
    %v2388 = vpack.c.b16 %v2360, %v2356
    %v2389 = vpack.c.b16 %v2365, %v2361
    %v2390 = vpack.c.b16 %v2366, %v2362
    %v2391 = vpack.c.b16 %v2367, %v2363
    %v2392 = vpack.c.b16 %v2368, %v2364
    %v2393 = vpack.c.b16 %v2373, %v2369
    %v2394 = vpack.c.b16 %v2374, %v2370
    %v2395 = vpack.c.b16 %v2375, %v2371
    %v2396 = vpack.c.b16 %v2376, %v2372
    %v2397 = vpack.c.b16 %v2381, %v2377
    %v2398 = vpack.c.b16 %v2382, %v2378
    %v2399 = vpack.c.b16 %v2383, %v2379
    %v2400 = vpack.c.b16 %v2384, %v2380
    %v2418 = vsel %vm191, %v2297, 0
    %v2421 = vsel %vm191, %v2298, 0
    %2423 = vmatprep.subr.bf16.mxu0 %v2386
    %2424 = vmatpush1.bf16.msra.mxu0 %v2385
    %2425 = vmatprep.subr.bf16.mxu0 %v2390
    %2426 = vmatpush1.bf16.msra.mxu0 %v2389
    %2427 = vmatprep.subr.bf16.mxu0 %v2394
    %2428 = vmatpush1.bf16.msra.mxu0 %v2393
    %2429 = vmatprep.subr.bf16.mxu0 %v2398
    %2430 = vmatpush1.bf16.msra.mxu0 %v2397
    %2431 = vmatprep.subr.bf16.mxu0 0
    %2432 = vmatpush1.bf16.msra.mxu0 0
    %2433 = vmatprep.subr.bf16.mxu0 0
    %2434 = vmatpush1.bf16.msra.mxu0 0
    %2435 = vmatprep.subr.bf16.mxu0 0
    %2436 = vmatpush1.bf16.msra.mxu0 0
    %2437 = vmatprep.subr.bf16.mxu0 0
    %2438 = vmatpush1.bf16.msra.mxu0 0
    %2439 = vmatprep.subr.bf16.mxu0 0
    %2440 = vmatpush1.bf16.msra.mxu0 0
    %2441 = vmatprep.subr.bf16.mxu0 0
    %2442 = vmatpush1.bf16.msra.mxu0 0
    %2443 = vmatprep.subr.bf16.mxu0 0
    %2444 = vmatpush1.bf16.msra.mxu0 0
    %2445 = vmatprep.subr.bf16.mxu0 0
    %2446 = vmatpush1.bf16.msra.mxu0 0
    %2447 = vmatprep.subr.bf16.mxu0 0
    %2448 = vmatpush1.bf16.msra.mxu0 0
    %2449 = vmatprep.subr.bf16.mxu0 0
    %2450 = vmatpush1.bf16.msra.mxu0 0
    %2451 = vmatprep.subr.bf16.mxu0 0
    %2452 = vmatpush1.bf16.msra.mxu0 0
    %2453 = vmatprep.subr.bf16.mxu0 0
    %2454 = vmatpush1.bf16.msra.mxu0 0
    %2455 = vmatprep.mubr.bf16.mxu0 0
    %2456 = vmatmul.mubr.bf16.gmra.mrb[0].mxu0 %v2418
    %v2457 = vpop.f32.mrb[0].mxu0
    %v2458 = vadd.f32 %v2320, %v2457
    %v2459 = vpop.f32.mrb[0].mxu0
    %v2460 = vadd.f32 %v2324, %v2459
    %v2461 = vpop.f32.mrb[0].mxu0
    %v2462 = vadd.f32 %v2320, %v2461
    %v2463 = vpop.f32.mrb[0].mxu0
    %v2464 = vadd.f32 %v2324, %v2463
    %2465 = vmatprep.mubr.bf16.mxu0 0
    %2466 = vmatmul.mubr.bf16.gmra.mrb[0].mxu0 %v2421
    %v2467 = vpop.f32.mrb[0].mxu0
    %v2468 = vadd.f32 %v2320, %v2467
    %v2469 = vpop.f32.mrb[0].mxu0
    %v2470 = vadd.f32 %v2324, %v2469
    %v2471 = vpop.f32.mrb[0].mxu0
    %v2472 = vadd.f32 %v2320, %v2471
    %v2473 = vpop.f32.mrb[0].mxu0
    %v2474 = vadd.f32 %v2324, %v2473
    %2475 = vdwg.mxu0
    %2476 = vmatprep.subr.bf16.mxu0 %v2388
    %2477 = vmatpush1.bf16.msra.mxu0 %v2387
    %2478 = vmatprep.subr.bf16.mxu0 %v2392
    %2479 = vmatpush1.bf16.msra.mxu0 %v2391
    %2480 = vmatprep.subr.bf16.mxu0 %v2396
    %2481 = vmatpush1.bf16.msra.mxu0 %v2395
    %2482 = vmatprep.subr.bf16.mxu0 %v2400
    %2483 = vmatpush1.bf16.msra.mxu0 %v2399
    %2484 = vmatprep.subr.bf16.mxu0 0
    %2485 = vmatpush1.bf16.msra.mxu0 0
    %2486 = vmatprep.subr.bf16.mxu0 0
    %2487 = vmatpush1.bf16.msra.mxu0 0
    %2488 = vmatprep.subr.bf16.mxu0 0
    %2489 = vmatpush1.bf16.msra.mxu0 0
    %2490 = vmatprep.subr.bf16.mxu0 0
    %2491 = vmatpush1.bf16.msra.mxu0 0
    %2492 = vmatprep.subr.bf16.mxu0 0
    %2493 = vmatpush1.bf16.msra.mxu0 0
    %2494 = vmatprep.subr.bf16.mxu0 0
    %2495 = vmatpush1.bf16.msra.mxu0 0
    %2496 = vmatprep.subr.bf16.mxu0 0
    %2497 = vmatpush1.bf16.msra.mxu0 0
    %2498 = vmatprep.subr.bf16.mxu0 0
    %2499 = vmatpush1.bf16.msra.mxu0 0
    %2500 = vmatprep.subr.bf16.mxu0 0
    %2501 = vmatpush1.bf16.msra.mxu0 0
    %2502 = vmatprep.subr.bf16.mxu0 0
    %2503 = vmatpush1.bf16.msra.mxu0 0
    %2504 = vmatprep.subr.bf16.mxu0 0
    %2505 = vmatpush1.bf16.msra.mxu0 0
    %2506 = vmatprep.subr.bf16.mxu0 0
    %2507 = vmatpush1.bf16.msra.mxu0 0
    %2508 = vmatprep.mubr.bf16.mxu0 0
    %2509 = vmatmul.mubr.bf16.gmra.mrb[0].mxu0 %v2418
    %v2510 = vpop.f32.mrb[0].mxu0
    %v2511 = vadd.f32 %v2328, %v2510
    %v2512 = vpop.f32.mrb[0].mxu0
    %v2513 = vadd.f32 %v2332, %v2512
    %v2514 = vpop.f32.mrb[0].mxu0
    %v2515 = vadd.f32 %v2328, %v2514
    %v2516 = vpop.f32.mrb[0].mxu0
    %v2517 = vadd.f32 %v2332, %v2516
    %2518 = vmatprep.mubr.bf16.mxu0 0
    %2519 = vmatmul.mubr.bf16.gmra.mrb[0].mxu0 %v2421
    %v2520 = vpop.f32.mrb[0].mxu0
    %v2521 = vadd.f32 %v2328, %v2520
    %v2522 = vpop.f32.mrb[0].mxu0
    %v2523 = vadd.f32 %v2332, %v2522
    %v2524 = vpop.f32.mrb[0].mxu0
    %v2525 = vadd.f32 %v2328, %v2524
    %v2526 = vpop.f32.mrb[0].mxu0
    %v2527 = vadd.f32 %v2332, %v2526
    %2528 = vdwg.mxu0
    %v2529 = vpack.c.bf16 %v2462, %v2458
    %v2530 = vpack.c.bf16 %v2464, %v2460
    %v2531 = vpack.c.bf16 %v2515, %v2511
    %v2532 = vpack.c.bf16 %v2517, %v2513
    %v2533 = vpack.c.bf16 %v2472, %v2468
    %v2534 = vpack.c.bf16 %v2474, %v2470
    %v2535 = vpack.c.bf16 %v2525, %v2521
    %v2536 = vpack.c.bf16 %v2527, %v2523
    %v2537 = vld [vmem:[#allocation2] sm:$0xff]
    %v2538 = vld [vmem:[#allocation2 + $0x8] sm:$0xff]
    %v2539 = vld [vmem:[#allocation2 + $0x10] sm:$0xff]
    %v2540 = vld [vmem:[#allocation2 + $0x18] sm:$0xff]
    %v2541 = vpack.c.bf16 %v2538, %v2537
    %v2542 = vpack.c.bf16 %v2540, %v2539
    %v2543 = vld [vmem:[%s11] sm:$0xff]
    %v2544 = vld [vmem:[%s11 + $0x8] sm:$0xff]
    %v2545 = vld [vmem:[%s11 + $0x10] sm:$0xff]
    %v2546 = vld [vmem:[%s11 + $0x18] sm:$0xff]
    %v2547 = vld [vmem:[%s11 + $0x20] sm:$0xff]
    %v2548 = vld [vmem:[%s11 + $0x28] sm:$0xff]
    %v2549 = vld [vmem:[%s11 + $0x30] sm:$0xff]
    %v2550 = vld [vmem:[%s11 + $0x38] sm:$0xff]
    %v2551 = vld [vmem:[%s11 + $0x40] sm:$0xff]
    %v2552 = vld [vmem:[%s11 + $0x48] sm:$0xff]
    %v2553 = vld [vmem:[%s11 + $0x50] sm:$0xff]
    %v2554 = vld [vmem:[%s11 + $0x58] sm:$0xff]
    %v2555 = vld [vmem:[%s11 + $0x60] sm:$0xff]
    %v2556 = vld [vmem:[%s11 + $0x68] sm:$0xff]
    %v2557 = vld [vmem:[%s11 + $0x70] sm:$0xff]
    %v2558 = vld [vmem:[%s11 + $0x78] sm:$0xff]
    %v2559 = vld [vmem:[#allocation13] sm:$0xff]
    %v2561 = vlaneseq
    %v2562 = vshrl.u32 %v2561, 7
    %v2563 = vsub.s32 0, %v2562
    %v2564 = vrot.slane %v2559, %v2563
    %v2565 = vlaneseq
    %v2566 = vshrl.u32 %v2565, 7
    %v2567 = vsub.s32 1, %v2566
    %v2568 = vrot.slane %v2559, %v2567
    %v2569 = vlaneseq
    %v2570 = vshrl.u32 %v2569, 7
    %v2571 = vsub.s32 2, %v2570
    %v2572 = vrot.slane %v2559, %v2571
    %v2573 = vlaneseq
    %v2574 = vshrl.u32 %v2573, 7
    %v2575 = vsub.s32 3, %v2574
    %v2576 = vrot.slane %v2559, %v2575
    %v2577 = vlaneseq
    %v2578 = vshrl.u32 %v2577, 7
    %v2579 = vsub.s32 4, %v2578
    %v2580 = vrot.slane %v2559, %v2579
    %v2581 = vlaneseq
    %v2582 = vshrl.u32 %v2581, 7
    %v2583 = vsub.s32 5, %v2582
    %v2584 = vrot.slane %v2559, %v2583
    %v2585 = vlaneseq
    %v2586 = vshrl.u32 %v2585, 7
    %v2587 = vsub.s32 6, %v2586
    %v2588 = vrot.slane %v2559, %v2587
    %v2589 = vlaneseq
    %v2590 = vshrl.u32 %v2589, 7
    %v2591 = vsub.s32 7, %v2590
    %v2592 = vrot.slane %v2559, %v2591
    %v2617 = vunpack.c.l.b16 %v2543
    %v2618 = vunpack.c.h.b16 %v2543
    %v2619 = vunpack.c.l.b16 %v2544
    %v2620 = vunpack.c.h.b16 %v2544
    %v2621 = vunpack.c.l.b16 %v2545
    %v2622 = vunpack.c.h.b16 %v2545
    %v2623 = vunpack.c.l.b16 %v2546
    %v2624 = vunpack.c.h.b16 %v2546
    %v2625 = vunpack.c.l.b16 %v2547
    %v2626 = vunpack.c.h.b16 %v2547
    %v2627 = vunpack.c.l.b16 %v2548
    %v2628 = vunpack.c.h.b16 %v2548
    %v2629 = vunpack.c.l.b16 %v2549
    %v2630 = vunpack.c.h.b16 %v2549
    %v2631 = vunpack.c.l.b16 %v2550
    %v2632 = vunpack.c.h.b16 %v2550
    %v2633 = vunpack.c.l.b16 %v2551
    %v2634 = vunpack.c.h.b16 %v2551
    %v2635 = vunpack.c.l.b16 %v2552
    %v2636 = vunpack.c.h.b16 %v2552
    %v2637 = vunpack.c.l.b16 %v2553
    %v2638 = vunpack.c.h.b16 %v2553
    %v2639 = vunpack.c.l.b16 %v2554
    %v2640 = vunpack.c.h.b16 %v2554
    %v2641 = vunpack.c.l.b16 %v2555
    %v2642 = vunpack.c.h.b16 %v2555
    %v2643 = vunpack.c.l.b16 %v2556
    %v2644 = vunpack.c.h.b16 %v2556
    %v2645 = vunpack.c.l.b16 %v2557
    %v2646 = vunpack.c.h.b16 %v2557
    %v2647 = vunpack.c.l.b16 %v2558
    %v2648 = vunpack.c.h.b16 %v2558
    %v2649 = vpack.c.b16 %v2625, %v2617
    %v2650 = vpack.c.b16 %v2626, %v2618
    %v2651 = vpack.c.b16 %v2627, %v2619
    %v2652 = vpack.c.b16 %v2628, %v2620
    %v2653 = vpack.c.b16 %v2629, %v2621
    %v2654 = vpack.c.b16 %v2630, %v2622
    %v2655 = vpack.c.b16 %v2631, %v2623
    %v2656 = vpack.c.b16 %v2632, %v2624
    %v2657 = vpack.c.b16 %v2641, %v2633
    %v2658 = vpack.c.b16 %v2642, %v2634
    %v2659 = vpack.c.b16 %v2643, %v2635
    %v2660 = vpack.c.b16 %v2644, %v2636
    %v2661 = vpack.c.b16 %v2645, %v2637
    %v2662 = vpack.c.b16 %v2646, %v2638
    %v2663 = vpack.c.b16 %v2647, %v2639
    %v2664 = vpack.c.b16 %v2648, %v2640
    %vm2681 = vcmask 261120
    %v2683 = vsel %vm2681, %v2541, 0
    %v2686 = vsel %vm2681, %v2542, 0
    %2688 = vmatprep.subr.bf16.mxu0 %v2650
    %2689 = vmatpush1.bf16.msra.mxu0 %v2649
    %2690 = vmatprep.subr.bf16.mxu0 %v2658
    %2691 = vmatpush1.bf16.msra.mxu0 %v2657
    %2692 = vmatprep.subr.bf16.mxu0 0
    %2693 = vmatpush1.bf16.msra.mxu0 0
    %2694 = vmatprep.subr.bf16.mxu0 0
    %2695 = vmatpush1.bf16.msra.mxu0 0
    %2696 = vmatprep.subr.bf16.mxu0 0
    %2697 = vmatpush1.bf16.msra.mxu0 0
    %2698 = vmatprep.subr.bf16.mxu0 0
    %2699 = vmatpush1.bf16.msra.mxu0 0
    %2700 = vmatprep.subr.bf16.mxu0 0
    %2701 = vmatpush1.bf16.msra.mxu0 0
    %2702 = vmatprep.subr.bf16.mxu0 0
    %2703 = vmatpush1.bf16.msra.mxu0 0
    %2704 = vmatprep.subr.bf16.mxu0 0
    %2705 = vmatpush1.bf16.msra.mxu0 0
    %2706 = vmatprep.subr.bf16.mxu0 0
    %2707 = vmatpush1.bf16.msra.mxu0 0
    %2708 = vmatprep.subr.bf16.mxu0 0
    %2709 = vmatpush1.bf16.msra.mxu0 0
    %2710 = vmatprep.subr.bf16.mxu0 0
    %2711 = vmatpush1.bf16.msra.mxu0 0
    %2712 = vmatprep.subr.bf16.mxu0 0
    %2713 = vmatpush1.bf16.msra.mxu0 0
    %2714 = vmatprep.subr.bf16.mxu0 0
    %2715 = vmatpush1.bf16.msra.mxu0 0
    %2716 = vmatprep.subr.bf16.mxu0 0
    %2717 = vmatpush1.bf16.msra.mxu0 0
    %2718 = vmatprep.subr.bf16.mxu0 0
    %2719 = vmatpush1.bf16.msra.mxu0 0
    %2720 = vmatprep.mubr.bf16.mxu0 0
    %2721 = vmatmul.mubr.bf16.gmra.mrb[0].mxu0 %v2683
    %v2722 = vpop.f32.mrb[0].mxu0
    %v2723 = vadd.f32 %v2564, %v2722
    %v2724 = vpop.f32.mrb[0].mxu0
    %v2725 = vadd.f32 %v2568, %v2724
    %v2726 = vpop.f32.mrb[0].mxu0
    %v2727 = vadd.f32 %v2564, %v2726
    %v2728 = vpop.f32.mrb[0].mxu0
    %v2729 = vadd.f32 %v2568, %v2728
    %2730 = vmatprep.mubr.bf16.mxu0 0
    %2731 = vmatmul.mubr.bf16.gmra.mrb[0].mxu0 %v2686
    %v2732 = vpop.f32.mrb[0].mxu0
    %v2733 = vadd.f32 %v2564, %v2732
    %v2734 = vpop.f32.mrb[0].mxu0
    %v2735 = vadd.f32 %v2568, %v2734
    %v2736 = vpop.f32.mrb[0].mxu0
    %v2737 = vadd.f32 %v2564, %v2736
    %v2738 = vpop.f32.mrb[0].mxu0
    %v2739 = vadd.f32 %v2568, %v2738
    %2740 = vdwg.mxu0
    %2741 = vmatprep.subr.bf16.mxu0 %v2652
    %2742 = vmatpush1.bf16.msra.mxu0 %v2651
    %2743 = vmatprep.subr.bf16.mxu0 %v2660
    %2744 = vmatpush1.bf16.msra.mxu0 %v2659
    %2745 = vmatprep.subr.bf16.mxu0 0
    %2746 = vmatpush1.bf16.msra.mxu0 0
    %2747 = vmatprep.subr.bf16.mxu0 0
    %2748 = vmatpush1.bf16.msra.mxu0 0
    %2749 = vmatprep.subr.bf16.mxu0 0
    %2750 = vmatpush1.bf16.msra.mxu0 0
    %2751 = vmatprep.subr.bf16.mxu0 0
    %2752 = vmatpush1.bf16.msra.mxu0 0
    %2753 = vmatprep.subr.bf16.mxu0 0
    %2754 = vmatpush1.bf16.msra.mxu0 0
    %2755 = vmatprep.subr.bf16.mxu0 0
    %2756 = vmatpush1.bf16.msra.mxu0 0
    %2757 = vmatprep.subr.bf16.mxu0 0
    %2758 = vmatpush1.bf16.msra.mxu0 0
    %2759 = vmatprep.subr.bf16.mxu0 0
    %2760 = vmatpush1.bf16.msra.mxu0 0
    %2761 = vmatprep.subr.bf16.mxu0 0
    %2762 = vmatpush1.bf16.msra.mxu0 0
    %2763 = vmatprep.subr.bf16.mxu0 0
    %2764 = vmatpush1.bf16.msra.mxu0 0
    %2765 = vmatprep.subr.bf16.mxu0 0
    %2766 = vmatpush1.bf16.msra.mxu0 0
    %2767 = vmatprep.subr.bf16.mxu0 0
    %2768 = vmatpush1.bf16.msra.mxu0 0
    %2769 = vmatprep.subr.bf16.mxu0 0
    %2770 = vmatpush1.bf16.msra.mxu0 0
    %2771 = vmatprep.subr.bf16.mxu0 0
    %2772 = vmatpush1.bf16.msra.mxu0 0
    %2773 = vmatprep.mubr.bf16.mxu0 0
    %2774 = vmatmul.mubr.bf16.gmra.mrb[0].mxu0 %v2683
    %v2775 = vpop.f32.mrb[0].mxu0
    %v2776 = vadd.f32 %v2572, %v2775
    %v2777 = vpop.f32.mrb[0].mxu0
    %v2778 = vadd.f32 %v2576, %v2777
    %v2779 = vpop.f32.mrb[0].mxu0
    %v2780 = vadd.f32 %v2572, %v2779
    %v2781 = vpop.f32.mrb[0].mxu0
    %v2782 = vadd.f32 %v2576, %v2781
    %2783 = vmatprep.mubr.bf16.mxu0 0
    %2784 = vmatmul.mubr.bf16.gmra.mrb[0].mxu0 %v2686
    %v2785 = vpop.f32.mrb[0].mxu0
    %v2786 = vadd.f32 %v2572, %v2785
    %v2787 = vpop.f32.mrb[0].mxu0
    %v2788 = vadd.f32 %v2576, %v2787
    %v2789 = vpop.f32.mrb[0].mxu0
    %v2790 = vadd.f32 %v2572, %v2789
    %v2791 = vpop.f32.mrb[0].mxu0
    %v2792 = vadd.f32 %v2576, %v2791
    %2793 = vdwg.mxu0
    %2794 = vmatprep.subr.bf16.mxu0 %v2654
    %2795 = vmatpush1.bf16.msra.mxu0 %v2653
    %2796 = vmatprep.subr.bf16.mxu0 %v2662
    %2797 = vmatpush1.bf16.msra.mxu0 %v2661
    %2798 = vmatprep.subr.bf16.mxu0 0
    %2799 = vmatpush1.bf16.msra.mxu0 0
    %2800 = vmatprep.subr.bf16.mxu0 0
    %2801 = vmatpush1.bf16.msra.mxu0 0
    %2802 = vmatprep.subr.bf16.mxu0 0
    %2803 = vmatpush1.bf16.msra.mxu0 0
    %2804 = vmatprep.subr.bf16.mxu0 0
    %2805 = vmatpush1.bf16.msra.mxu0 0
    %2806 = vmatprep.subr.bf16.mxu0 0
    %2807 = vmatpush1.bf16.msra.mxu0 0
    %2808 = vmatprep.subr.bf16.mxu0 0
    %2809 = vmatpush1.bf16.msra.mxu0 0
    %2810 = vmatprep.subr.bf16.mxu0 0
    %2811 = vmatpush1.bf16.msra.mxu0 0
    %2812 = vmatprep.subr.bf16.mxu0 0
    %2813 = vmatpush1.bf16.msra.mxu0 0
    %2814 = vmatprep.subr.bf16.mxu0 0
    %2815 = vmatpush1.bf16.msra.mxu0 0
    %2816 = vmatprep.subr.bf16.mxu0 0
    %2817 = vmatpush1.bf16.msra.mxu0 0
    %2818 = vmatprep.subr.bf16.mxu0 0
    %2819 = vmatpush1.bf16.msra.mxu0 0
    %2820 = vmatprep.subr.bf16.mxu0 0
    %2821 = vmatpush1.bf16.msra.mxu0 0
    %2822 = vmatprep.subr.bf16.mxu0 0
    %2823 = vmatpush1.bf16.msra.mxu0 0
    %2824 = vmatprep.subr.bf16.mxu0 0
    %2825 = vmatpush1.bf16.msra.mxu0 0
    %2826 = vmatprep.mubr.bf16.mxu0 0
    %2827 = vmatmul.mubr.bf16.gmra.mrb[0].mxu0 %v2683
    %v2828 = vpop.f32.mrb[0].mxu0
    %v2829 = vadd.f32 %v2580, %v2828
    %v2830 = vpop.f32.mrb[0].mxu0
    %v2831 = vadd.f32 %v2584, %v2830
    %v2832 = vpop.f32.mrb[0].mxu0
    %v2833 = vadd.f32 %v2580, %v2832
    %v2834 = vpop.f32.mrb[0].mxu0
    %v2835 = vadd.f32 %v2584, %v2834
    %2836 = vmatprep.mubr.bf16.mxu0 0
    %2837 = vmatmul.mubr.bf16.gmra.mrb[0].mxu0 %v2686
    %v2838 = vpop.f32.mrb[0].mxu0
    %v2839 = vadd.f32 %v2580, %v2838
    %v2840 = vpop.f32.mrb[0].mxu0
    %v2841 = vadd.f32 %v2584, %v2840
    %v2842 = vpop.f32.mrb[0].mxu0
    %v2843 = vadd.f32 %v2580, %v2842
    %v2844 = vpop.f32.mrb[0].mxu0
    %v2845 = vadd.f32 %v2584, %v2844
    %2846 = vdwg.mxu0
    %2847 = vmatprep.subr.bf16.mxu0 %v2656
    %2848 = vmatpush1.bf16.msra.mxu0 %v2655
    %2849 = vmatprep.subr.bf16.mxu0 %v2664
    %2850 = vmatpush1.bf16.msra.mxu0 %v2663
    %2851 = vmatprep.subr.bf16.mxu0 0
    %2852 = vmatpush1.bf16.msra.mxu0 0
    %2853 = vmatprep.subr.bf16.mxu0 0
    %2854 = vmatpush1.bf16.msra.mxu0 0
    %2855 = vmatprep.subr.bf16.mxu0 0
    %2856 = vmatpush1.bf16.msra.mxu0 0
    %2857 = vmatprep.subr.bf16.mxu0 0
    %2858 = vmatpush1.bf16.msra.mxu0 0
    %2859 = vmatprep.subr.bf16.mxu0 0
    %2860 = vmatpush1.bf16.msra.mxu0 0
    %2861 = vmatprep.subr.bf16.mxu0 0
    %2862 = vmatpush1.bf16.msra.mxu0 0
    %2863 = vmatprep.subr.bf16.mxu0 0
    %2864 = vmatpush1.bf16.msra.mxu0 0
    %2865 = vmatprep.subr.bf16.mxu0 0
    %2866 = vmatpush1.bf16.msra.mxu0 0
    %2867 = vmatprep.subr.bf16.mxu0 0
    %2868 = vmatpush1.bf16.msra.mxu0 0
    %2869 = vmatprep.subr.bf16.mxu0 0
    %2870 = vmatpush1.bf16.msra.mxu0 0
    %2871 = vmatprep.subr.bf16.mxu0 0
    %2872 = vmatpush1.bf16.msra.mxu0 0
    %2873 = vmatprep.subr.bf16.mxu0 0
    %2874 = vmatpush1.bf16.msra.mxu0 0
    %2875 = vmatprep.subr.bf16.mxu0 0
    %2876 = vmatpush1.bf16.msra.mxu0 0
    %2877 = vmatprep.subr.bf16.mxu0 0
    %2878 = vmatpush1.bf16.msra.mxu0 0
    %2879 = vmatprep.mubr.bf16.mxu0 0
    %2880 = vmatmul.mubr.bf16.gmra.mrb[0].mxu0 %v2683
    %v2881 = vpop.f32.mrb[0].mxu0
    %v2882 = vadd.f32 %v2588, %v2881
    %v2883 = vpop.f32.mrb[0].mxu0
    %v2884 = vadd.f32 %v2592, %v2883
    %v2885 = vpop.f32.mrb[0].mxu0
    %v2886 = vadd.f32 %v2588, %v2885
    %v2887 = vpop.f32.mrb[0].mxu0
    %v2888 = vadd.f32 %v2592, %v2887
    %2889 = vmatprep.mubr.bf16.mxu0 0
    %2890 = vmatmul.mubr.bf16.gmra.mrb[0].mxu0 %v2686
    %v2891 = vpop.f32.mrb[0].mxu0
    %v2892 = vadd.f32 %v2588, %v2891
    %v2893 = vpop.f32.mrb[0].mxu0
    %v2894 = vadd.f32 %v2592, %v2893
    %v2895 = vpop.f32.mrb[0].mxu0
    %v2896 = vadd.f32 %v2588, %v2895
    %v2897 = vpop.f32.mrb[0].mxu0
    %v2898 = vadd.f32 %v2592, %v2897
    %2899 = vdwg.mxu0
    %v2900 = vpack.c.bf16 %v2727, %v2723
    %v2901 = vpack.c.bf16 %v2729, %v2725
    %v2902 = vpack.c.bf16 %v2780, %v2776
    %v2903 = vpack.c.bf16 %v2782, %v2778
    %v2904 = vpack.c.bf16 %v2833, %v2829
    %v2905 = vpack.c.bf16 %v2835, %v2831
    %v2906 = vpack.c.bf16 %v2886, %v2882
    %v2907 = vpack.c.bf16 %v2888, %v2884
    %v2908 = vpack.c.bf16 %v2737, %v2733
    %v2909 = vpack.c.bf16 %v2739, %v2735
    %v2910 = vpack.c.bf16 %v2790, %v2786
    %v2911 = vpack.c.bf16 %v2792, %v2788
    %v2912 = vpack.c.bf16 %v2843, %v2839
    %v2913 = vpack.c.bf16 %v2845, %v2841
    %v2914 = vpack.c.bf16 %v2896, %v2892
    %v2915 = vpack.c.bf16 %v2898, %v2894
    %2916 = vmatprep.subr.bf16.mxu0 0
    %2917 = vmatpush1.bf16.xpose.msra.mxu0 %v2900
    %2918 = vmatprep.subr.bf16.mxu0 0
    %2919 = vmatpush1.bf16.xpose.msra.mxu0 0
    %2920 = vmatprep.subr.bf16.mxu0 0
    %2921 = vmatpush1.bf16.xpose.msra.mxu0 0
    %2922 = vmatprep.subr.bf16.mxu0 0
    %2923 = vmatpush1.bf16.xpose.msra.mxu0 0
    %2924 = vmatprep.subr.bf16.mxu0 0
    %2925 = vmatpush1.bf16.xpose.msra.mxu0 0
    %2926 = vmatprep.subr.bf16.mxu0 0
    %2927 = vmatpush1.bf16.xpose.msra.mxu0 0
    %2928 = vmatprep.subr.bf16.mxu0 0
    %2929 = vmatpush1.bf16.xpose.msra.mxu0 0
    %2930 = vmatprep.subr.bf16.mxu0 0
    %2931 = vmatpush1.bf16.xpose.msra.mxu0 0
    %2932 = vmatprep.subr.bf16.mxu0 0
    %2933 = vmatpush1.bf16.xpose.msra.mxu0 0
    %2934 = vmatprep.subr.bf16.mxu0 0
    %2935 = vmatpush1.bf16.xpose.msra.mxu0 0
    %2936 = vmatprep.subr.bf16.mxu0 0
    %2937 = vmatpush1.bf16.xpose.msra.mxu0 0
    %2938 = vmatprep.subr.bf16.mxu0 0
    %2939 = vmatpush1.bf16.xpose.msra.mxu0 0
    %2940 = vmatprep.subr.bf16.mxu0 0
    %2941 = vmatpush1.bf16.xpose.msra.mxu0 0
    %2942 = vmatprep.subr.bf16.mxu0 0
    %2943 = vmatpush1.bf16.xpose.msra.mxu0 0
    %2944 = vmatprep.subr.bf16.mxu0 0
    %2945 = vmatpush1.bf16.xpose.msra.mxu0 0
    %2946 = vmatprep.subr.bf16.mxu0 0
    %2947 = vmatpush1.bf16.xpose.msra.mxu0 0
    %2948 = vmatprep.mubr.bf16.mxu0 0
    %2949 = vmatmul.mubr.bf16.gmra.mrb[0].mxu0 %v2529
    %v2950 = vpop.f32.mrb[0].mxu0
    %v2951 = vadd.f32 0.0, %v2950
    %v2952 = vpop.f32.mrb[0].mxu0
    %v2953 = vpop.f32.mrb[0].mxu0
    %v2954 = vadd.f32 0.0, %v2953
    %v2955 = vpop.f32.mrb[0].mxu0
    %2956 = vdwg.mxu0
    %2957 = vmatprep.subr.bf16.mxu0 0
    %2958 = vmatpush1.bf16.xpose.msra.mxu0 %v2908
    %2959 = vmatprep.subr.bf16.mxu0 0
    %2960 = vmatpush1.bf16.xpose.msra.mxu0 0
    %2961 = vmatprep.subr.bf16.mxu0 0
    %2962 = vmatpush1.bf16.xpose.msra.mxu0 0
    %2963 = vmatprep.subr.bf16.mxu0 0
    %2964 = vmatpush1.bf16.xpose.msra.mxu0 0
    %2965 = vmatprep.subr.bf16.mxu0 0
    %2966 = vmatpush1.bf16.xpose.msra.mxu0 0
    %2967 = vmatprep.subr.bf16.mxu0 0
    %2968 = vmatpush1.bf16.xpose.msra.mxu0 0
    %2969 = vmatprep.subr.bf16.mxu0 0
    %2970 = vmatpush1.bf16.xpose.msra.mxu0 0
    %2971 = vmatprep.subr.bf16.mxu0 0
    %2972 = vmatpush1.bf16.xpose.msra.mxu0 0
    %2973 = vmatprep.subr.bf16.mxu0 0
    %2974 = vmatpush1.bf16.xpose.msra.mxu0 0
    %2975 = vmatprep.subr.bf16.mxu0 0
    %2976 = vmatpush1.bf16.xpose.msra.mxu0 0
    %2977 = vmatprep.subr.bf16.mxu0 0
    %2978 = vmatpush1.bf16.xpose.msra.mxu0 0
    %2979 = vmatprep.subr.bf16.mxu0 0
    %2980 = vmatpush1.bf16.xpose.msra.mxu0 0
    %2981 = vmatprep.subr.bf16.mxu0 0
    %2982 = vmatpush1.bf16.xpose.msra.mxu0 0
    %2983 = vmatprep.subr.bf16.mxu0 0
    %2984 = vmatpush1.bf16.xpose.msra.mxu0 0
    %2985 = vmatprep.subr.bf16.mxu0 0
    %2986 = vmatpush1.bf16.xpose.msra.mxu0 0
    %2987 = vmatprep.subr.bf16.mxu0 0
    %2988 = vmatpush1.bf16.xpose.msra.mxu0 0
    %2989 = vmatprep.mubr.bf16.mxu0 0
    %2990 = vmatmul.mubr.bf16.gmra.mrb[0].mxu0 %v2533
    %v2991 = vpop.f32.mrb[0].mxu0
    %v2992 = vadd.f32 0.0, %v2991
    %v2993 = vpop.f32.mrb[0].mxu0
    %v2994 = vpop.f32.mrb[0].mxu0
    %v2995 = vadd.f32 0.0, %v2994
    %v2996 = vpop.f32.mrb[0].mxu0
    %2997 = vdwg.mxu0
    %v2998 = vsel %vm1055, %v2951, -inf
    %2999 = vmax.xlane.f32.xlu0 %v2998
    %v3000 = vpop.xlane.xlu0 %2999
    %v3001 = vsel %vm1055, %v2954, -inf
    %3002 = vmax.xlane.f32.xlu0 %v3001
    %v3003 = vpop.xlane.xlu0 %3002
    %v3004 = vsel %vm1055, %v2992, -inf
    %3005 = vmax.xlane.f32.xlu0 %v3004
    %v3006 = vpop.xlane.xlu0 %3005
    %v3007 = vsel %vm1055, %v2995, -inf
    %3008 = vmax.xlane.f32.xlu0 %v3007
    %v3009 = vpop.xlane.xlu0 %3008
    %v3010 = vsub.f32 %v2951, %v3000
    %v3011 = vsub.f32 %v2954, %v3003
    %v3012 = vsub.f32 %v2992, %v3006
    %v3013 = vsub.f32 %v2995, %v3009
    %v3014 = vmul.f32 %v3010, 1.442695
    %v3015 = vpow.pop %v3014
    %v3016 = vmul.f32 %v3011, 1.442695
    %v3017 = vpow.pop %v3016
    %v3018 = vmul.f32 %v3012, 1.442695
    %v3019 = vpow.pop %v3018
    %v3020 = vmul.f32 %v3013, 1.442695
    %v3021 = vpow.pop %v3020
    %v3022 = vsel %vm1055, %v3015, 0.0
    %3023 = vadd.xlane.f32.xlu0 %v3022
    %v3024 = vpop.xlane.xlu0 %3023
    %v3025 = vsel %vm1055, %v3017, 0.0
    %3026 = vadd.xlane.f32.xlu0 %v3025
    %v3027 = vpop.xlane.xlu0 %3026
    %v3028 = vsel %vm1055, %v3019, 0.0
    %3029 = vadd.xlane.f32.xlu0 %v3028
    %v3030 = vpop.xlane.xlu0 %3029
    %v3031 = vsel %vm1055, %v3021, 0.0
    %3032 = vadd.xlane.f32.xlu0 %v3031
    %v3033 = vpop.xlane.xlu0 %3032
    %v3034 = vrcp.pop %v3024
    %v3035 = vrcp.pop %v3027
    %v3036 = vrcp.pop %v3030
    %v3037 = vrcp.pop %v3033
    %v3038 = vmul.f32 %v3015, %v3034
    %v3039 = vmul.f32 %v3017, %v3035
    %v3040 = vmul.f32 %v3019, %v3036
    %v3041 = vmul.f32 %v3021, %v3037
    %v3042 = vpack.c.bf16 %v3039, %v3038
    %v3043 = vpack.c.bf16 %v3041, %v3040
    %v3045 = vsel %vm1055, %v3042, 0
    %3047 = vmatprep.subr.bf16.mxu0 0
    %3048 = vmatpush1.bf16.msra.mxu0 %v2904
    %3049 = vmatprep.subr.bf16.mxu0 0
    %3050 = vmatpush1.bf16.msra.mxu0 0
    %3051 = vmatprep.subr.bf16.mxu0 0
    %3052 = vmatpush1.bf16.msra.mxu0 0
    %3053 = vmatprep.subr.bf16.mxu0 0
    %3054 = vmatpush1.bf16.msra.mxu0 0
    %3055 = vmatprep.subr.bf16.mxu0 0
    %3056 = vmatpush1.bf16.msra.mxu0 0
    %3057 = vmatprep.subr.bf16.mxu0 0
    %3058 = vmatpush1.bf16.msra.mxu0 0
    %3059 = vmatprep.subr.bf16.mxu0 0
    %3060 = vmatpush1.bf16.msra.mxu0 0
    %3061 = vmatprep.subr.bf16.mxu0 0
    %3062 = vmatpush1.bf16.msra.mxu0 0
    %3063 = vmatprep.subr.bf16.mxu0 0
    %3064 = vmatpush1.bf16.msra.mxu0 0
    %3065 = vmatprep.subr.bf16.mxu0 0
    %3066 = vmatpush1.bf16.msra.mxu0 0
    %3067 = vmatprep.subr.bf16.mxu0 0
    %3068 = vmatpush1.bf16.msra.mxu0 0
    %3069 = vmatprep.subr.bf16.mxu0 0
    %3070 = vmatpush1.bf16.msra.mxu0 0
    %3071 = vmatprep.subr.bf16.mxu0 0
    %3072 = vmatpush1.bf16.msra.mxu0 0
    %3073 = vmatprep.subr.bf16.mxu0 0
    %3074 = vmatpush1.bf16.msra.mxu0 0
    %3075 = vmatprep.subr.bf16.mxu0 0
    %3076 = vmatpush1.bf16.msra.mxu0 0
    %3077 = vmatprep.subr.bf16.mxu0 0
    %3078 = vmatpush1.bf16.msra.mxu0 0
    %3079 = vmatprep.mubr.bf16.mxu0 0
    %3080 = vmatmul.mubr.bf16.gmra.mrb[0].mxu0 %v3045
    %v3081 = vpop.f32.mrb[0].mxu0
    %v3082 = vadd.f32 0.0, %v3081
    %v3083 = vpop.f32.mrb[0].mxu0
    %v3084 = vpop.f32.mrb[0].mxu0
    %v3085 = vadd.f32 0.0, %v3084
    %v3086 = vpop.f32.mrb[0].mxu0
    %3087 = vdwg.mxu0
    %v3089 = vsel %vm1055, %v3043, 0
    %3091 = vmatprep.subr.bf16.mxu0 0
    %3092 = vmatpush1.bf16.msra.mxu0 %v2912
    %3093 = vmatprep.subr.bf16.mxu0 0
    %3094 = vmatpush1.bf16.msra.mxu0 0
    %3095 = vmatprep.subr.bf16.mxu0 0
    %3096 = vmatpush1.bf16.msra.mxu0 0
    %3097 = vmatprep.subr.bf16.mxu0 0
    %3098 = vmatpush1.bf16.msra.mxu0 0
    %3099 = vmatprep.subr.bf16.mxu0 0
    %3100 = vmatpush1.bf16.msra.mxu0 0
    %3101 = vmatprep.subr.bf16.mxu0 0
    %3102 = vmatpush1.bf16.msra.mxu0 0
    %3103 = vmatprep.subr.bf16.mxu0 0
    %3104 = vmatpush1.bf16.msra.mxu0 0
    %3105 = vmatprep.subr.bf16.mxu0 0
    %3106 = vmatpush1.bf16.msra.mxu0 0
    %3107 = vmatprep.subr.bf16.mxu0 0
    %3108 = vmatpush1.bf16.msra.mxu0 0
    %3109 = vmatprep.subr.bf16.mxu0 0
    %3110 = vmatpush1.bf16.msra.mxu0 0
    %3111 = vmatprep.subr.bf16.mxu0 0
    %3112 = vmatpush1.bf16.msra.mxu0 0
    %3113 = vmatprep.subr.bf16.mxu0 0
    %3114 = vmatpush1.bf16.msra.mxu0 0
    %3115 = vmatprep.subr.bf16.mxu0 0
    %3116 = vmatpush1.bf16.msra.mxu0 0
    %3117 = vmatprep.subr.bf16.mxu0 0
    %3118 = vmatpush1.bf16.msra.mxu0 0
    %3119 = vmatprep.subr.bf16.mxu0 0
    %3120 = vmatpush1.bf16.msra.mxu0 0
    %3121 = vmatprep.subr.bf16.mxu0 0
    %3122 = vmatpush1.bf16.msra.mxu0 0
    %3123 = vmatprep.mubr.bf16.mxu0 0
    %3124 = vmatmul.mubr.bf16.gmra.mrb[0].mxu0 %v3089
    %v3125 = vpop.f32.mrb[0].mxu0
    %v3126 = vadd.f32 0.0, %v3125
    %v3127 = vpop.f32.mrb[0].mxu0
    %v3128 = vpop.f32.mrb[0].mxu0
    %v3129 = vadd.f32 0.0, %v3128
    %v3130 = vpop.f32.mrb[0].mxu0
    %3131 = vdwg.mxu0
    %3132 = vmatprep.subr.bf16.mxu0 0
    %3133 = vmatpush1.bf16.xpose.msra.mxu0 %v2901
    %3134 = vmatprep.subr.bf16.mxu0 0
    %3135 = vmatpush1.bf16.xpose.msra.mxu0 0
    %3136 = vmatprep.subr.bf16.mxu0 0
    %3137 = vmatpush1.bf16.xpose.msra.mxu0 0
    %3138 = vmatprep.subr.bf16.mxu0 0
    %3139 = vmatpush1.bf16.xpose.msra.mxu0 0
    %3140 = vmatprep.subr.bf16.mxu0 0
    %3141 = vmatpush1.bf16.xpose.msra.mxu0 0
    %3142 = vmatprep.subr.bf16.mxu0 0
    %3143 = vmatpush1.bf16.xpose.msra.mxu0 0
    %3144 = vmatprep.subr.bf16.mxu0 0
    %3145 = vmatpush1.bf16.xpose.msra.mxu0 0
    %3146 = vmatprep.subr.bf16.mxu0 0
    %3147 = vmatpush1.bf16.xpose.msra.mxu0 0
    %3148 = vmatprep.subr.bf16.mxu0 0
    %3149 = vmatpush1.bf16.xpose.msra.mxu0 0
    %3150 = vmatprep.subr.bf16.mxu0 0
    %3151 = vmatpush1.bf16.xpose.msra.mxu0 0
    %3152 = vmatprep.subr.bf16.mxu0 0
    %3153 = vmatpush1.bf16.xpose.msra.mxu0 0
    %3154 = vmatprep.subr.bf16.mxu0 0
    %3155 = vmatpush1.bf16.xpose.msra.mxu0 0
    %3156 = vmatprep.subr.bf16.mxu0 0
    %3157 = vmatpush1.bf16.xpose.msra.mxu0 0
    %3158 = vmatprep.subr.bf16.mxu0 0
    %3159 = vmatpush1.bf16.xpose.msra.mxu0 0
    %3160 = vmatprep.subr.bf16.mxu0 0
    %3161 = vmatpush1.bf16.xpose.msra.mxu0 0
    %3162 = vmatprep.subr.bf16.mxu0 0
    %3163 = vmatpush1.bf16.xpose.msra.mxu0 0
    %3164 = vmatprep.mubr.bf16.mxu0 0
    %3165 = vmatmul.mubr.bf16.gmra.mrb[0].mxu0 %v2530
    %v3166 = vpop.f32.mrb[0].mxu0
    %v3167 = vadd.f32 0.0, %v3166
    %v3168 = vpop.f32.mrb[0].mxu0
    %v3169 = vpop.f32.mrb[0].mxu0
    %v3170 = vadd.f32 0.0, %v3169
    %v3171 = vpop.f32.mrb[0].mxu0
    %3172 = vdwg.mxu0
    %3173 = vmatprep.subr.bf16.mxu0 0
    %3174 = vmatpush1.bf16.xpose.msra.mxu0 %v2909
    %3175 = vmatprep.subr.bf16.mxu0 0
    %3176 = vmatpush1.bf16.xpose.msra.mxu0 0
    %3177 = vmatprep.subr.bf16.mxu0 0
    %3178 = vmatpush1.bf16.xpose.msra.mxu0 0
    %3179 = vmatprep.subr.bf16.mxu0 0
    %3180 = vmatpush1.bf16.xpose.msra.mxu0 0
    %3181 = vmatprep.subr.bf16.mxu0 0
    %3182 = vmatpush1.bf16.xpose.msra.mxu0 0
    %3183 = vmatprep.subr.bf16.mxu0 0
    %3184 = vmatpush1.bf16.xpose.msra.mxu0 0
    %3185 = vmatprep.subr.bf16.mxu0 0
    %3186 = vmatpush1.bf16.xpose.msra.mxu0 0
    %3187 = vmatprep.subr.bf16.mxu0 0
    %3188 = vmatpush1.bf16.xpose.msra.mxu0 0
    %3189 = vmatprep.subr.bf16.mxu0 0
    %3190 = vmatpush1.bf16.xpose.msra.mxu0 0
    %3191 = vmatprep.subr.bf16.mxu0 0
    %3192 = vmatpush1.bf16.xpose.msra.mxu0 0
    %3193 = vmatprep.subr.bf16.mxu0 0
    %3194 = vmatpush1.bf16.xpose.msra.mxu0 0
    %3195 = vmatprep.subr.bf16.mxu0 0
    %3196 = vmatpush1.bf16.xpose.msra.mxu0 0
    %3197 = vmatprep.subr.bf16.mxu0 0
    %3198 = vmatpush1.bf16.xpose.msra.mxu0 0
    %3199 = vmatprep.subr.bf16.mxu0 0
    %3200 = vmatpush1.bf16.xpose.msra.mxu0 0
    %3201 = vmatprep.subr.bf16.mxu0 0
    %3202 = vmatpush1.bf16.xpose.msra.mxu0 0
    %3203 = vmatprep.subr.bf16.mxu0 0
    %3204 = vmatpush1.bf16.xpose.msra.mxu0 0
    %3205 = vmatprep.mubr.bf16.mxu0 0
    %3206 = vmatmul.mubr.bf16.gmra.mrb[0].mxu0 %v2534
    %v3207 = vpop.f32.mrb[0].mxu0
    %v3208 = vadd.f32 0.0, %v3207
    %v3209 = vpop.f32.mrb[0].mxu0
    %v3210 = vpop.f32.mrb[0].mxu0
    %v3211 = vadd.f32 0.0, %v3210
    %v3212 = vpop.f32.mrb[0].mxu0
    %3213 = vdwg.mxu0
    %v3214 = vsel %vm1055, %v3167, -inf
    %3215 = vmax.xlane.f32.xlu0 %v3214
    %v3216 = vpop.xlane.xlu0 %3215
    %v3217 = vsel %vm1055, %v3170, -inf
    %3218 = vmax.xlane.f32.xlu0 %v3217
    %v3219 = vpop.xlane.xlu0 %3218
    %v3220 = vsel %vm1055, %v3208, -inf
    %3221 = vmax.xlane.f32.xlu0 %v3220
    %v3222 = vpop.xlane.xlu0 %3221
    %v3223 = vsel %vm1055, %v3211, -inf
    %3224 = vmax.xlane.f32.xlu0 %v3223
    %v3225 = vpop.xlane.xlu0 %3224
    %v3226 = vsub.f32 %v3167, %v3216
    %v3227 = vsub.f32 %v3170, %v3219
    %v3228 = vsub.f32 %v3208, %v3222
    %v3229 = vsub.f32 %v3211, %v3225
    %v3230 = vmul.f32 %v3226, 1.442695
    %v3231 = vpow.pop %v3230
    %v3232 = vmul.f32 %v3227, 1.442695
    %v3233 = vpow.pop %v3232
    %v3234 = vmul.f32 %v3228, 1.442695
    %v3235 = vpow.pop %v3234
    %v3236 = vmul.f32 %v3229, 1.442695
    %v3237 = vpow.pop %v3236
    %v3238 = vsel %vm1055, %v3231, 0.0
    %3239 = vadd.xlane.f32.xlu0 %v3238
    %v3240 = vpop.xlane.xlu0 %3239
    %v3241 = vsel %vm1055, %v3233, 0.0
    %3242 = vadd.xlane.f32.xlu0 %v3241
    %v3243 = vpop.xlane.xlu0 %3242
    %v3244 = vsel %vm1055, %v3235, 0.0
    %3245 = vadd.xlane.f32.xlu0 %v3244
    %v3246 = vpop.xlane.xlu0 %3245
    %v3247 = vsel %vm1055, %v3237, 0.0
    %3248 = vadd.xlane.f32.xlu0 %v3247
    %v3249 = vpop.xlane.xlu0 %3248
    %v3250 = vrcp.pop %v3240
    %v3251 = vrcp.pop %v3243
    %v3252 = vrcp.pop %v3246
    %v3253 = vrcp.pop %v3249
    %v3254 = vmul.f32 %v3231, %v3250
    %v3255 = vmul.f32 %v3233, %v3251
    %v3256 = vmul.f32 %v3235, %v3252
    %v3257 = vmul.f32 %v3237, %v3253
    %v3258 = vpack.c.bf16 %v3255, %v3254
    %v3259 = vpack.c.bf16 %v3257, %v3256
    %v3261 = vsel %vm1055, %v3258, 0
    %3263 = vmatprep.subr.bf16.mxu0 0
    %3264 = vmatpush1.bf16.msra.mxu0 %v2905
    %3265 = vmatprep.subr.bf16.mxu0 0
    %3266 = vmatpush1.bf16.msra.mxu0 0
    %3267 = vmatprep.subr.bf16.mxu0 0
    %3268 = vmatpush1.bf16.msra.mxu0 0
    %3269 = vmatprep.subr.bf16.mxu0 0
    %3270 = vmatpush1.bf16.msra.mxu0 0
    %3271 = vmatprep.subr.bf16.mxu0 0
    %3272 = vmatpush1.bf16.msra.mxu0 0
    %3273 = vmatprep.subr.bf16.mxu0 0
    %3274 = vmatpush1.bf16.msra.mxu0 0
    %3275 = vmatprep.subr.bf16.mxu0 0
    %3276 = vmatpush1.bf16.msra.mxu0 0
    %3277 = vmatprep.subr.bf16.mxu0 0
    %3278 = vmatpush1.bf16.msra.mxu0 0
    %3279 = vmatprep.subr.bf16.mxu0 0
    %3280 = vmatpush1.bf16.msra.mxu0 0
    %3281 = vmatprep.subr.bf16.mxu0 0
    %3282 = vmatpush1.bf16.msra.mxu0 0
    %3283 = vmatprep.subr.bf16.mxu0 0
    %3284 = vmatpush1.bf16.msra.mxu0 0
    %3285 = vmatprep.subr.bf16.mxu0 0
    %3286 = vmatpush1.bf16.msra.mxu0 0
    %3287 = vmatprep.subr.bf16.mxu0 0
    %3288 = vmatpush1.bf16.msra.mxu0 0
    %3289 = vmatprep.subr.bf16.mxu0 0
    %3290 = vmatpush1.bf16.msra.mxu0 0
    %3291 = vmatprep.subr.bf16.mxu0 0
    %3292 = vmatpush1.bf16.msra.mxu0 0
    %3293 = vmatprep.subr.bf16.mxu0 0
    %3294 = vmatpush1.bf16.msra.mxu0 0
    %3295 = vmatprep.mubr.bf16.mxu0 0
    %3296 = vmatmul.mubr.bf16.gmra.mrb[0].mxu0 %v3261
    %v3297 = vpop.f32.mrb[0].mxu0
    %v3298 = vadd.f32 0.0, %v3297
    %v3299 = vpop.f32.mrb[0].mxu0
    %v3300 = vpop.f32.mrb[0].mxu0
    %v3301 = vadd.f32 0.0, %v3300
    %v3302 = vpop.f32.mrb[0].mxu0
    %3303 = vdwg.mxu0
    %v3305 = vsel %vm1055, %v3259, 0
    %3307 = vmatprep.subr.bf16.mxu0 0
    %3308 = vmatpush1.bf16.msra.mxu0 %v2913
    %3309 = vmatprep.subr.bf16.mxu0 0
    %3310 = vmatpush1.bf16.msra.mxu0 0
    %3311 = vmatprep.subr.bf16.mxu0 0
    %3312 = vmatpush1.bf16.msra.mxu0 0
    %3313 = vmatprep.subr.bf16.mxu0 0
    %3314 = vmatpush1.bf16.msra.mxu0 0
    %3315 = vmatprep.subr.bf16.mxu0 0
    %3316 = vmatpush1.bf16.msra.mxu0 0
    %3317 = vmatprep.subr.bf16.mxu0 0
    %3318 = vmatpush1.bf16.msra.mxu0 0
    %3319 = vmatprep.subr.bf16.mxu0 0
    %3320 = vmatpush1.bf16.msra.mxu0 0
    %3321 = vmatprep.subr.bf16.mxu0 0
    %3322 = vmatpush1.bf16.msra.mxu0 0
    %3323 = vmatprep.subr.bf16.mxu0 0
    %3324 = vmatpush1.bf16.msra.mxu0 0
    %3325 = vmatprep.subr.bf16.mxu0 0
    %3326 = vmatpush1.bf16.msra.mxu0 0
    %3327 = vmatprep.subr.bf16.mxu0 0
    %3328 = vmatpush1.bf16.msra.mxu0 0
    %3329 = vmatprep.subr.bf16.mxu0 0
    %3330 = vmatpush1.bf16.msra.mxu0 0
    %3331 = vmatprep.subr.bf16.mxu0 0
    %3332 = vmatpush1.bf16.msra.mxu0 0
    %3333 = vmatprep.subr.bf16.mxu0 0
    %3334 = vmatpush1.bf16.msra.mxu0 0
    %3335 = vmatprep.subr.bf16.mxu0 0
    %3336 = vmatpush1.bf16.msra.mxu0 0
    %3337 = vmatprep.subr.bf16.mxu0 0
    %3338 = vmatpush1.bf16.msra.mxu0 0
    %3339 = vmatprep.mubr.bf16.mxu0 0
    %3340 = vmatmul.mubr.bf16.gmra.mrb[0].mxu0 %v3305
    %v3341 = vpop.f32.mrb[0].mxu0
    %v3342 = vadd.f32 0.0, %v3341
    %v3343 = vpop.f32.mrb[0].mxu0
    %v3344 = vpop.f32.mrb[0].mxu0
    %v3345 = vadd.f32 0.0, %v3344
    %v3346 = vpop.f32.mrb[0].mxu0
    %3347 = vdwg.mxu0
    %3348 = vmatprep.subr.bf16.mxu0 0
    %3349 = vmatpush1.bf16.xpose.msra.mxu0 %v2902
    %3350 = vmatprep.subr.bf16.mxu0 0
    %3351 = vmatpush1.bf16.xpose.msra.mxu0 0
    %3352 = vmatprep.subr.bf16.mxu0 0
    %3353 = vmatpush1.bf16.xpose.msra.mxu0 0
    %3354 = vmatprep.subr.bf16.mxu0 0
    %3355 = vmatpush1.bf16.xpose.msra.mxu0 0
    %3356 = vmatprep.subr.bf16.mxu0 0
    %3357 = vmatpush1.bf16.xpose.msra.mxu0 0
    %3358 = vmatprep.subr.bf16.mxu0 0
    %3359 = vmatpush1.bf16.xpose.msra.mxu0 0
    %3360 = vmatprep.subr.bf16.mxu0 0
    %3361 = vmatpush1.bf16.xpose.msra.mxu0 0
    %3362 = vmatprep.subr.bf16.mxu0 0
    %3363 = vmatpush1.bf16.xpose.msra.mxu0 0
    %3364 = vmatprep.subr.bf16.mxu0 0
    %3365 = vmatpush1.bf16.xpose.msra.mxu0 0
    %3366 = vmatprep.subr.bf16.mxu0 0
    %3367 = vmatpush1.bf16.xpose.msra.mxu0 0
    %3368 = vmatprep.subr.bf16.mxu0 0
    %3369 = vmatpush1.bf16.xpose.msra.mxu0 0
    %3370 = vmatprep.subr.bf16.mxu0 0
    %3371 = vmatpush1.bf16.xpose.msra.mxu0 0
    %3372 = vmatprep.subr.bf16.mxu0 0
    %3373 = vmatpush1.bf16.xpose.msra.mxu0 0
    %3374 = vmatprep.subr.bf16.mxu0 0
    %3375 = vmatpush1.bf16.xpose.msra.mxu0 0
    %3376 = vmatprep.subr.bf16.mxu0 0
    %3377 = vmatpush1.bf16.xpose.msra.mxu0 0
    %3378 = vmatprep.subr.bf16.mxu0 0
    %3379 = vmatpush1.bf16.xpose.msra.mxu0 0
    %3380 = vmatprep.mubr.bf16.mxu0 0
    %3381 = vmatmul.mubr.bf16.gmra.mrb[0].mxu0 %v2531
    %v3382 = vpop.f32.mrb[0].mxu0
    %v3383 = vadd.f32 0.0, %v3382
    %v3384 = vpop.f32.mrb[0].mxu0
    %v3385 = vpop.f32.mrb[0].mxu0
    %v3386 = vadd.f32 0.0, %v3385
    %v3387 = vpop.f32.mrb[0].mxu0
    %3388 = vdwg.mxu0
    %3389 = vmatprep.subr.bf16.mxu0 0
    %3390 = vmatpush1.bf16.xpose.msra.mxu0 %v2910
    %3391 = vmatprep.subr.bf16.mxu0 0
    %3392 = vmatpush1.bf16.xpose.msra.mxu0 0
    %3393 = vmatprep.subr.bf16.mxu0 0
    %3394 = vmatpush1.bf16.xpose.msra.mxu0 0
    %3395 = vmatprep.subr.bf16.mxu0 0
    %3396 = vmatpush1.bf16.xpose.msra.mxu0 0
    %3397 = vmatprep.subr.bf16.mxu0 0
    %3398 = vmatpush1.bf16.xpose.msra.mxu0 0
    %3399 = vmatprep.subr.bf16.mxu0 0
    %3400 = vmatpush1.bf16.xpose.msra.mxu0 0
    %3401 = vmatprep.subr.bf16.mxu0 0
    %3402 = vmatpush1.bf16.xpose.msra.mxu0 0
    %3403 = vmatprep.subr.bf16.mxu0 0
    %3404 = vmatpush1.bf16.xpose.msra.mxu0 0
    %3405 = vmatprep.subr.bf16.mxu0 0
    %3406 = vmatpush1.bf16.xpose.msra.mxu0 0
    %3407 = vmatprep.subr.bf16.mxu0 0
    %3408 = vmatpush1.bf16.xpose.msra.mxu0 0
    %3409 = vmatprep.subr.bf16.mxu0 0
    %3410 = vmatpush1.bf16.xpose.msra.mxu0 0
    %3411 = vmatprep.subr.bf16.mxu0 0
    %3412 = vmatpush1.bf16.xpose.msra.mxu0 0
    %3413 = vmatprep.subr.bf16.mxu0 0
    %3414 = vmatpush1.bf16.xpose.msra.mxu0 0
    %3415 = vmatprep.subr.bf16.mxu0 0
    %3416 = vmatpush1.bf16.xpose.msra.mxu0 0
    %3417 = vmatprep.subr.bf16.mxu0 0
    %3418 = vmatpush1.bf16.xpose.msra.mxu0 0
    %3419 = vmatprep.subr.bf16.mxu0 0
    %3420 = vmatpush1.bf16.xpose.msra.mxu0 0
    %3421 = vmatprep.mubr.bf16.mxu0 0
    %3422 = vmatmul.mubr.bf16.gmra.mrb[0].mxu0 %v2535
    %v3423 = vpop.f32.mrb[0].mxu0
    %v3424 = vadd.f32 0.0, %v3423
    %v3425 = vpop.f32.mrb[0].mxu0
    %v3426 = vpop.f32.mrb[0].mxu0
    %v3427 = vadd.f32 0.0, %v3426
    %v3428 = vpop.f32.mrb[0].mxu0
    %3429 = vdwg.mxu0
    %v3430 = vsel %vm1055, %v3383, -inf
    %3431 = vmax.xlane.f32.xlu0 %v3430
    %v3432 = vpop.xlane.xlu0 %3431
    %v3433 = vsel %vm1055, %v3386, -inf
    %3434 = vmax.xlane.f32.xlu0 %v3433
    %v3435 = vpop.xlane.xlu0 %3434
    %v3436 = vsel %vm1055, %v3424, -inf
    %3437 = vmax.xlane.f32.xlu0 %v3436
    %v3438 = vpop.xlane.xlu0 %3437
    %v3439 = vsel %vm1055, %v3427, -inf
    %3440 = vmax.xlane.f32.xlu0 %v3439
    %v3441 = vpop.xlane.xlu0 %3440
    %v3442 = vsub.f32 %v3383, %v3432
    %v3443 = vsub.f32 %v3386, %v3435
    %v3444 = vsub.f32 %v3424, %v3438
    %v3445 = vsub.f32 %v3427, %v3441
    %v3446 = vmul.f32 %v3442, 1.442695
    %v3447 = vpow.pop %v3446
    %v3448 = vmul.f32 %v3443, 1.442695
    %v3449 = vpow.pop %v3448
    %v3450 = vmul.f32 %v3444, 1.442695
    %v3451 = vpow.pop %v3450
    %v3452 = vmul.f32 %v3445, 1.442695
    %v3453 = vpow.pop %v3452
    %v3454 = vsel %vm1055, %v3447, 0.0
    %3455 = vadd.xlane.f32.xlu0 %v3454
    %v3456 = vpop.xlane.xlu0 %3455
    %v3457 = vsel %vm1055, %v3449, 0.0
    %3458 = vadd.xlane.f32.xlu0 %v3457
    %v3459 = vpop.xlane.xlu0 %3458
    %v3460 = vsel %vm1055, %v3451, 0.0
    %3461 = vadd.xlane.f32.xlu0 %v3460
    %v3462 = vpop.xlane.xlu0 %3461
    %v3463 = vsel %vm1055, %v3453, 0.0
    %3464 = vadd.xlane.f32.xlu0 %v3463
    %v3465 = vpop.xlane.xlu0 %3464
    %v3466 = vrcp.pop %v3456
    %v3467 = vrcp.pop %v3459
    %v3468 = vrcp.pop %v3462
    %v3469 = vrcp.pop %v3465
    %v3470 = vmul.f32 %v3447, %v3466
    %v3471 = vmul.f32 %v3449, %v3467
    %v3472 = vmul.f32 %v3451, %v3468
    %v3473 = vmul.f32 %v3453, %v3469
    %v3474 = vpack.c.bf16 %v3471, %v3470
    %v3475 = vpack.c.bf16 %v3473, %v3472
    %v3477 = vsel %vm1055, %v3474, 0
    %3479 = vmatprep.subr.bf16.mxu0 0
    %3480 = vmatpush1.bf16.msra.mxu0 %v2906
    %3481 = vmatprep.subr.bf16.mxu0 0
    %3482 = vmatpush1.bf16.msra.mxu0 0
    %3483 = vmatprep.subr.bf16.mxu0 0
    %3484 = vmatpush1.bf16.msra.mxu0 0
    %3485 = vmatprep.subr.bf16.mxu0 0
    %3486 = vmatpush1.bf16.msra.mxu0 0
    %3487 = vmatprep.subr.bf16.mxu0 0
    %3488 = vmatpush1.bf16.msra.mxu0 0
    %3489 = vmatprep.subr.bf16.mxu0 0
    %3490 = vmatpush1.bf16.msra.mxu0 0
    %3491 = vmatprep.subr.bf16.mxu0 0
    %3492 = vmatpush1.bf16.msra.mxu0 0
    %3493 = vmatprep.subr.bf16.mxu0 0
    %3494 = vmatpush1.bf16.msra.mxu0 0
    %3495 = vmatprep.subr.bf16.mxu0 0
    %3496 = vmatpush1.bf16.msra.mxu0 0
    %3497 = vmatprep.subr.bf16.mxu0 0
    %3498 = vmatpush1.bf16.msra.mxu0 0
    %3499 = vmatprep.subr.bf16.mxu0 0
    %3500 = vmatpush1.bf16.msra.mxu0 0
    %3501 = vmatprep.subr.bf16.mxu0 0
    %3502 = vmatpush1.bf16.msra.mxu0 0
    %3503 = vmatprep.subr.bf16.mxu0 0
    %3504 = vmatpush1.bf16.msra.mxu0 0
    %3505 = vmatprep.subr.bf16.mxu0 0
    %3506 = vmatpush1.bf16.msra.mxu0 0
    %3507 = vmatprep.subr.bf16.mxu0 0
    %3508 = vmatpush1.bf16.msra.mxu0 0
    %3509 = vmatprep.subr.bf16.mxu0 0
    %3510 = vmatpush1.bf16.msra.mxu0 0
    %3511 = vmatprep.mubr.bf16.mxu0 0
    %3512 = vmatmul.mubr.bf16.gmra.mrb[0].mxu0 %v3477
    %v3513 = vpop.f32.mrb[0].mxu0
    %v3514 = vadd.f32 0.0, %v3513
    %v3515 = vpop.f32.mrb[0].mxu0
    %v3516 = vpop.f32.mrb[0].mxu0
    %v3517 = vadd.f32 0.0, %v3516
    %v3518 = vpop.f32.mrb[0].mxu0
    %3519 = vdwg.mxu0
    %v3521 = vsel %vm1055, %v3475, 0
    %3523 = vmatprep.subr.bf16.mxu0 0
    %3524 = vmatpush1.bf16.msra.mxu0 %v2914
    %3525 = vmatprep.subr.bf16.mxu0 0
    %3526 = vmatpush1.bf16.msra.mxu0 0
    %3527 = vmatprep.subr.bf16.mxu0 0
    %3528 = vmatpush1.bf16.msra.mxu0 0
    %3529 = vmatprep.subr.bf16.mxu0 0
    %3530 = vmatpush1.bf16.msra.mxu0 0
    %3531 = vmatprep.subr.bf16.mxu0 0
    %3532 = vmatpush1.bf16.msra.mxu0 0
    %3533 = vmatprep.subr.bf16.mxu0 0
    %3534 = vmatpush1.bf16.msra.mxu0 0
    %3535 = vmatprep.subr.bf16.mxu0 0
    %3536 = vmatpush1.bf16.msra.mxu0 0
    %3537 = vmatprep.subr.bf16.mxu0 0
    %3538 = vmatpush1.bf16.msra.mxu0 0
    %3539 = vmatprep.subr.bf16.mxu0 0
    %3540 = vmatpush1.bf16.msra.mxu0 0
    %3541 = vmatprep.subr.bf16.mxu0 0
    %3542 = vmatpush1.bf16.msra.mxu0 0
    %3543 = vmatprep.subr.bf16.mxu0 0
    %3544 = vmatpush1.bf16.msra.mxu0 0
    %3545 = vmatprep.subr.bf16.mxu0 0
    %3546 = vmatpush1.bf16.msra.mxu0 0
    %3547 = vmatprep.subr.bf16.mxu0 0
    %3548 = vmatpush1.bf16.msra.mxu0 0
    %3549 = vmatprep.subr.bf16.mxu0 0
    %3550 = vmatpush1.bf16.msra.mxu0 0
    %3551 = vmatprep.subr.bf16.mxu0 0
    %3552 = vmatpush1.bf16.msra.mxu0 0
    %3553 = vmatprep.subr.bf16.mxu0 0
    %3554 = vmatpush1.bf16.msra.mxu0 0
    %3555 = vmatprep.mubr.bf16.mxu0 0
    %3556 = vmatmul.mubr.bf16.gmra.mrb[0].mxu0 %v3521
    %v3557 = vpop.f32.mrb[0].mxu0
    %v3558 = vadd.f32 0.0, %v3557
    %v3559 = vpop.f32.mrb[0].mxu0
    %v3560 = vpop.f32.mrb[0].mxu0
    %v3561 = vadd.f32 0.0, %v3560
    %v3562 = vpop.f32.mrb[0].mxu0
    %3563 = vdwg.mxu0
    %3564 = vmatprep.subr.bf16.mxu0 0
    %3565 = vmatpush1.bf16.xpose.msra.mxu0 %v2903
    %3566 = vmatprep.subr.bf16.mxu0 0
    %3567 = vmatpush1.bf16.xpose.msra.mxu0 0
    %3568 = vmatprep.subr.bf16.mxu0 0
    %3569 = vmatpush1.bf16.xpose.msra.mxu0 0
    %3570 = vmatprep.subr.bf16.mxu0 0
    %3571 = vmatpush1.bf16.xpose.msra.mxu0 0
    %3572 = vmatprep.subr.bf16.mxu0 0
    %3573 = vmatpush1.bf16.xpose.msra.mxu0 0
    %3574 = vmatprep.subr.bf16.mxu0 0
    %3575 = vmatpush1.bf16.xpose.msra.mxu0 0
    %3576 = vmatprep.subr.bf16.mxu0 0
    %3577 = vmatpush1.bf16.xpose.msra.mxu0 0
    %3578 = vmatprep.subr.bf16.mxu0 0
    %3579 = vmatpush1.bf16.xpose.msra.mxu0 0
    %3580 = vmatprep.subr.bf16.mxu0 0
    %3581 = vmatpush1.bf16.xpose.msra.mxu0 0
    %3582 = vmatprep.subr.bf16.mxu0 0
    %3583 = vmatpush1.bf16.xpose.msra.mxu0 0
    %3584 = vmatprep.subr.bf16.mxu0 0
    %3585 = vmatpush1.bf16.xpose.msra.mxu0 0
    %3586 = vmatprep.subr.bf16.mxu0 0
    %3587 = vmatpush1.bf16.xpose.msra.mxu0 0
    %3588 = vmatprep.subr.bf16.mxu0 0
    %3589 = vmatpush1.bf16.xpose.msra.mxu0 0
    %3590 = vmatprep.subr.bf16.mxu0 0
    %3591 = vmatpush1.bf16.xpose.msra.mxu0 0
    %3592 = vmatprep.subr.bf16.mxu0 0
    %3593 = vmatpush1.bf16.xpose.msra.mxu0 0
    %3594 = vmatprep.subr.bf16.mxu0 0
    %3595 = vmatpush1.bf16.xpose.msra.mxu0 0
    %3596 = vmatprep.mubr.bf16.mxu0 0
    %3597 = vmatmul.mubr.bf16.gmra.mrb[0].mxu0 %v2532
    %v3598 = vpop.f32.mrb[0].mxu0
    %v3599 = vadd.f32 0.0, %v3598
    %v3600 = vpop.f32.mrb[0].mxu0
    %v3601 = vpop.f32.mrb[0].mxu0
    %v3602 = vadd.f32 0.0, %v3601
    %v3603 = vpop.f32.mrb[0].mxu0
    %3604 = vdwg.mxu0
    %3605 = vmatprep.subr.bf16.mxu0 0
    %3606 = vmatpush1.bf16.xpose.msra.mxu0 %v2911
    %3607 = vmatprep.subr.bf16.mxu0 0
    %3608 = vmatpush1.bf16.xpose.msra.mxu0 0
    %3609 = vmatprep.subr.bf16.mxu0 0
    %3610 = vmatpush1.bf16.xpose.msra.mxu0 0
    %3611 = vmatprep.subr.bf16.mxu0 0
    %3612 = vmatpush1.bf16.xpose.msra.mxu0 0
    %3613 = vmatprep.subr.bf16.mxu0 0
    %3614 = vmatpush1.bf16.xpose.msra.mxu0 0
    %3615 = vmatprep.subr.bf16.mxu0 0
    %3616 = vmatpush1.bf16.xpose.msra.mxu0 0
    %3617 = vmatprep.subr.bf16.mxu0 0
    %3618 = vmatpush1.bf16.xpose.msra.mxu0 0
    %3619 = vmatprep.subr.bf16.mxu0 0
    %3620 = vmatpush1.bf16.xpose.msra.mxu0 0
    %3621 = vmatprep.subr.bf16.mxu0 0
    %3622 = vmatpush1.bf16.xpose.msra.mxu0 0
    %3623 = vmatprep.subr.bf16.mxu0 0
    %3624 = vmatpush1.bf16.xpose.msra.mxu0 0
    %3625 = vmatprep.subr.bf16.mxu0 0
    %3626 = vmatpush1.bf16.xpose.msra.mxu0 0
    %3627 = vmatprep.subr.bf16.mxu0 0
    %3628 = vmatpush1.bf16.xpose.msra.mxu0 0
    %3629 = vmatprep.subr.bf16.mxu0 0
    %3630 = vmatpush1.bf16.xpose.msra.mxu0 0
    %3631 = vmatprep.subr.bf16.mxu0 0
    %3632 = vmatpush1.bf16.xpose.msra.mxu0 0
    %3633 = vmatprep.subr.bf16.mxu0 0
    %3634 = vmatpush1.bf16.xpose.msra.mxu0 0
    %3635 = vmatprep.subr.bf16.mxu0 0
    %3636 = vmatpush1.bf16.xpose.msra.mxu0 0
    %3637 = vmatprep.mubr.bf16.mxu0 0
    %3638 = vmatmul.mubr.bf16.gmra.mrb[0].mxu0 %v2536
    %v3639 = vpop.f32.mrb[0].mxu0
    %v3640 = vadd.f32 0.0, %v3639
    %v3641 = vpop.f32.mrb[0].mxu0
    %v3642 = vpop.f32.mrb[0].mxu0
    %v3643 = vadd.f32 0.0, %v3642
    %v3644 = vpop.f32.mrb[0].mxu0
    %3645 = vdwg.mxu0
    %v3646 = vsel %vm1055, %v3599, -inf
    %3647 = vmax.xlane.f32.xlu0 %v3646
    %v3648 = vpop.xlane.xlu0 %3647
    %v3649 = vsel %vm1055, %v3602, -inf
    %3650 = vmax.xlane.f32.xlu0 %v3649
    %v3651 = vpop.xlane.xlu0 %3650
    %v3652 = vsel %vm1055, %v3640, -inf
    %3653 = vmax.xlane.f32.xlu0 %v3652
    %v3654 = vpop.xlane.xlu0 %3653
    %v3655 = vsel %vm1055, %v3643, -inf
    %3656 = vmax.xlane.f32.xlu0 %v3655
    %v3657 = vpop.xlane.xlu0 %3656
    %v3658 = vsub.f32 %v3599, %v3648
    %v3659 = vsub.f32 %v3602, %v3651
    %v3660 = vsub.f32 %v3640, %v3654
    %v3661 = vsub.f32 %v3643, %v3657
    %v3662 = vmul.f32 %v3658, 1.442695
    %v3663 = vpow.pop %v3662
    %v3664 = vmul.f32 %v3659, 1.442695
    %v3665 = vpow.pop %v3664
    %v3666 = vmul.f32 %v3660, 1.442695
    %v3667 = vpow.pop %v3666
    %v3668 = vmul.f32 %v3661, 1.442695
    %v3669 = vpow.pop %v3668
    %v3670 = vsel %vm1055, %v3663, 0.0
    %3671 = vadd.xlane.f32.xlu0 %v3670
    %v3672 = vpop.xlane.xlu0 %3671
    %v3673 = vsel %vm1055, %v3665, 0.0
    %3674 = vadd.xlane.f32.xlu0 %v3673
    %v3675 = vpop.xlane.xlu0 %3674
    %v3676 = vsel %vm1055, %v3667, 0.0
    %3677 = vadd.xlane.f32.xlu0 %v3676
    %v3678 = vpop.xlane.xlu0 %3677
    %v3679 = vsel %vm1055, %v3669, 0.0
    %3680 = vadd.xlane.f32.xlu0 %v3679
    %v3681 = vpop.xlane.xlu0 %3680
    %v3682 = vrcp.pop %v3672
    %v3683 = vrcp.pop %v3675
    %v3684 = vrcp.pop %v3678
    %v3685 = vrcp.pop %v3681
    %v3686 = vmul.f32 %v3663, %v3682
    %v3687 = vmul.f32 %v3665, %v3683
    %v3688 = vmul.f32 %v3667, %v3684
    %v3689 = vmul.f32 %v3669, %v3685
    %v3690 = vpack.c.bf16 %v3687, %v3686
    %v3691 = vpack.c.bf16 %v3689, %v3688
    %v3693 = vsel %vm1055, %v3690, 0
    %3695 = vmatprep.subr.bf16.mxu0 0
    %3696 = vmatpush1.bf16.msra.mxu0 %v2907
    %3697 = vmatprep.subr.bf16.mxu0 0
    %3698 = vmatpush1.bf16.msra.mxu0 0
    %3699 = vmatprep.subr.bf16.mxu0 0
    %3700 = vmatpush1.bf16.msra.mxu0 0
    %3701 = vmatprep.subr.bf16.mxu0 0
    %3702 = vmatpush1.bf16.msra.mxu0 0
    %3703 = vmatprep.subr.bf16.mxu0 0
    %3704 = vmatpush1.bf16.msra.mxu0 0
    %3705 = vmatprep.subr.bf16.mxu0 0
    %3706 = vmatpush1.bf16.msra.mxu0 0
    %3707 = vmatprep.subr.bf16.mxu0 0
    %3708 = vmatpush1.bf16.msra.mxu0 0
    %3709 = vmatprep.subr.bf16.mxu0 0
    %3710 = vmatpush1.bf16.msra.mxu0 0
    %3711 = vmatprep.subr.bf16.mxu0 0
    %3712 = vmatpush1.bf16.msra.mxu0 0
    %3713 = vmatprep.subr.bf16.mxu0 0
    %3714 = vmatpush1.bf16.msra.mxu0 0
    %3715 = vmatprep.subr.bf16.mxu0 0
    %3716 = vmatpush1.bf16.msra.mxu0 0
    %3717 = vmatprep.subr.bf16.mxu0 0
    %3718 = vmatpush1.bf16.msra.mxu0 0
    %3719 = vmatprep.subr.bf16.mxu0 0
    %3720 = vmatpush1.bf16.msra.mxu0 0
    %3721 = vmatprep.subr.bf16.mxu0 0
    %3722 = vmatpush1.bf16.msra.mxu0 0
    %3723 = vmatprep.subr.bf16.mxu0 0
    %3724 = vmatpush1.bf16.msra.mxu0 0
    %3725 = vmatprep.subr.bf16.mxu0 0
    %3726 = vmatpush1.bf16.msra.mxu0 0
    %3727 = vmatprep.mubr.bf16.mxu0 0
    %3728 = vmatmul.mubr.bf16.gmra.mrb[0].mxu0 %v3693
    %v3729 = vpop.f32.mrb[0].mxu0
    %v3730 = vadd.f32 0.0, %v3729
    %v3731 = vpop.f32.mrb[0].mxu0
    %v3732 = vpop.f32.mrb[0].mxu0
    %v3733 = vadd.f32 0.0, %v3732
    %v3734 = vpop.f32.mrb[0].mxu0
    %3735 = vdwg.mxu0
    %v3737 = vsel %vm1055, %v3691, 0
    %3739 = vmatprep.subr.bf16.mxu0 0
    %3740 = vmatpush1.bf16.msra.mxu0 %v2915
    %3741 = vmatprep.subr.bf16.mxu0 0
    %3742 = vmatpush1.bf16.msra.mxu0 0
    %3743 = vmatprep.subr.bf16.mxu0 0
    %3744 = vmatpush1.bf16.msra.mxu0 0
    %3745 = vmatprep.subr.bf16.mxu0 0
    %3746 = vmatpush1.bf16.msra.mxu0 0
    %3747 = vmatprep.subr.bf16.mxu0 0
    %3748 = vmatpush1.bf16.msra.mxu0 0
    %3749 = vmatprep.subr.bf16.mxu0 0
    %3750 = vmatpush1.bf16.msra.mxu0 0
    %3751 = vmatprep.subr.bf16.mxu0 0
    %3752 = vmatpush1.bf16.msra.mxu0 0
    %3753 = vmatprep.subr.bf16.mxu0 0
    %3754 = vmatpush1.bf16.msra.mxu0 0
    %3755 = vmatprep.subr.bf16.mxu0 0
    %3756 = vmatpush1.bf16.msra.mxu0 0
    %3757 = vmatprep.subr.bf16.mxu0 0
    %3758 = vmatpush1.bf16.msra.mxu0 0
    %3759 = vmatprep.subr.bf16.mxu0 0
    %3760 = vmatpush1.bf16.msra.mxu0 0
    %3761 = vmatprep.subr.bf16.mxu0 0
    %3762 = vmatpush1.bf16.msra.mxu0 0
    %3763 = vmatprep.subr.bf16.mxu0 0
    %3764 = vmatpush1.bf16.msra.mxu0 0
    %3765 = vmatprep.subr.bf16.mxu0 0
    %3766 = vmatpush1.bf16.msra.mxu0 0
    %3767 = vmatprep.subr.bf16.mxu0 0
    %3768 = vmatpush1.bf16.msra.mxu0 0
    %3769 = vmatprep.subr.bf16.mxu0 0
    %3770 = vmatpush1.bf16.msra.mxu0 0
    %3771 = vmatprep.mubr.bf16.mxu0 0
    %3772 = vmatmul.mubr.bf16.gmra.mrb[0].mxu0 %v3737
    %v3773 = vpop.f32.mrb[0].mxu0
    %v3774 = vadd.f32 0.0, %v3773
    %v3775 = vpop.f32.mrb[0].mxu0
    %v3776 = vpop.f32.mrb[0].mxu0
    %v3777 = vadd.f32 0.0, %v3776
    %v3778 = vpop.f32.mrb[0].mxu0
    %3779 = vdwg.mxu0
    %v3780 = vpack.c.bf16 %v3085, %v3082
    %v3781 = vpack.c.bf16 %v3301, %v3298
    %v3782 = vpack.c.bf16 %v3517, %v3514
    %v3783 = vpack.c.bf16 %v3733, %v3730
    %v3784 = vpack.c.bf16 %v3129, %v3126
    %v3785 = vpack.c.bf16 %v3345, %v3342
    %v3786 = vpack.c.bf16 %v3561, %v3558
    %v3787 = vpack.c.bf16 %v3777, %v3774
    %v3788 = vld [vmem:[%s13] sm:$0xf]
    %v3789 = vld [vmem:[%s13 + $0x4] sm:$0xf]
    %v3790 = vld [vmem:[%s13 + $0x8] sm:$0xf]
    %v3791 = vld [vmem:[%s13 + $0xc] sm:$0xf]
    %v3792 = vld [vmem:[%s13 + $0x10] sm:$0xf]
    %v3793 = vld [vmem:[%s13 + $0x14] sm:$0xf]
    %v3794 = vld [vmem:[%s13 + $0x18] sm:$0xf]
    %v3795 = vld [vmem:[%s13 + $0x1c] sm:$0xf]
    %v3796 = vld [vmem:[%s13 + $0x20] sm:$0xf]
    %v3797 = vld [vmem:[%s13 + $0x24] sm:$0xf]
    %v3798 = vld [vmem:[%s13 + $0x28] sm:$0xf]
    %v3799 = vld [vmem:[%s13 + $0x2c] sm:$0xf]
    %v3800 = vld [vmem:[%s13 + $0x30] sm:$0xf]
    %v3801 = vld [vmem:[%s13 + $0x34] sm:$0xf]
    %v3802 = vld [vmem:[%s13 + $0x38] sm:$0xf]
    %v3803 = vld [vmem:[%s13 + $0x3c] sm:$0xf]
    %v3804 = vld [vmem:[%s13 + $0x40] sm:$0xf]
    %v3805 = vld [vmem:[%s13 + $0x44] sm:$0xf]
    %v3806 = vld [vmem:[%s13 + $0x48] sm:$0xf]
    %v3807 = vld [vmem:[%s13 + $0x4c] sm:$0xf]
    %v3808 = vld [vmem:[%s13 + $0x50] sm:$0xf]
    %v3809 = vld [vmem:[%s13 + $0x54] sm:$0xf]
    %v3810 = vld [vmem:[%s13 + $0x58] sm:$0xf]
    %v3811 = vld [vmem:[%s13 + $0x5c] sm:$0xf]
    %v3812 = vld [vmem:[%s13 + $0x60] sm:$0xf]
    %v3813 = vld [vmem:[%s13 + $0x64] sm:$0xf]
    %v3814 = vld [vmem:[%s13 + $0x68] sm:$0xf]
    %v3815 = vld [vmem:[%s13 + $0x6c] sm:$0xf]
    %v3816 = vld [vmem:[%s13 + $0x70] sm:$0xf]
    %v3817 = vld [vmem:[%s13 + $0x74] sm:$0xf]
    %v3818 = vld [vmem:[%s13 + $0x78] sm:$0xf]
    %v3819 = vld [vmem:[%s13 + $0x7c] sm:$0xf]
    %v3820 = vld [vmem:[%s13 + $0x80] sm:$0xf]
    %v3821 = vld [vmem:[%s13 + $0x84] sm:$0xf]
    %v3822 = vld [vmem:[%s13 + $0x88] sm:$0xf]
    %v3823 = vld [vmem:[%s13 + $0x8c] sm:$0xf]
    %v3824 = vld [vmem:[%s13 + $0x90] sm:$0xf]
    %v3825 = vld [vmem:[%s13 + $0x94] sm:$0xf]
    %v3826 = vld [vmem:[%s13 + $0x98] sm:$0xf]
    %v3827 = vld [vmem:[%s13 + $0x9c] sm:$0xf]
    %v3828 = vld [vmem:[%s13 + $0xa0] sm:$0xf]
    %v3829 = vld [vmem:[%s13 + $0xa4] sm:$0xf]
    %v3830 = vld [vmem:[%s13 + $0xa8] sm:$0xf]
    %v3831 = vld [vmem:[%s13 + $0xac] sm:$0xf]
    %v3832 = vld [vmem:[%s13 + $0xb0] sm:$0xf]
    %v3833 = vld [vmem:[%s13 + $0xb4] sm:$0xf]
    %v3834 = vld [vmem:[%s13 + $0xb8] sm:$0xf]
    %v3835 = vld [vmem:[%s13 + $0xbc] sm:$0xf]
    %v3836 = vld [vmem:[%s13 + $0xc0] sm:$0xf]
    %v3837 = vld [vmem:[%s13 + $0xc4] sm:$0xf]
    %v3838 = vld [vmem:[%s13 + $0xc8] sm:$0xf]
    %v3839 = vld [vmem:[%s13 + $0xcc] sm:$0xf]
    %v3840 = vld [vmem:[%s13 + $0xd0] sm:$0xf]
    %v3841 = vld [vmem:[%s13 + $0xd4] sm:$0xf]
    %v3842 = vld [vmem:[%s13 + $0xd8] sm:$0xf]
    %v3843 = vld [vmem:[%s13 + $0xdc] sm:$0xf]
    %v3844 = vld [vmem:[%s13 + $0xe0] sm:$0xf]
    %v3845 = vld [vmem:[%s13 + $0xe4] sm:$0xf]
    %v3846 = vld [vmem:[%s13 + $0xe8] sm:$0xf]
    %v3847 = vld [vmem:[%s13 + $0xec] sm:$0xf]
    %v3848 = vld [vmem:[%s13 + $0xf0] sm:$0xf]
    %v3849 = vld [vmem:[%s13 + $0xf4] sm:$0xf]
    %v3850 = vld [vmem:[%s13 + $0xf8] sm:$0xf]
    %v3851 = vld [vmem:[%s13 + $0xfc] sm:$0xf]
    %v3852 = vld [vmem:[#allocation14] sm:$0x1]
    %v3854 = vlaneseq
    %v3855 = vshrl.u32 %v3854, 7
    %v3856 = vsub.s32 0, %v3855
    %v3857 = vrot.slane %v3852, %v3856
    %v3923 = vunpack.c.l.b16 %v3788
    %v3924 = vunpack.c.l.b16 %v3789
    %v3925 = vunpack.c.l.b16 %v3790
    %v3926 = vunpack.c.l.b16 %v3791
    %v3927 = vunpack.c.l.b16 %v3792
    %v3928 = vunpack.c.l.b16 %v3793
    %v3929 = vunpack.c.l.b16 %v3794
    %v3930 = vunpack.c.l.b16 %v3795
    %v3931 = vunpack.c.l.b16 %v3796
    %v3932 = vunpack.c.l.b16 %v3797
    %v3933 = vunpack.c.l.b16 %v3798
    %v3934 = vunpack.c.l.b16 %v3799
    %v3935 = vunpack.c.l.b16 %v3800
    %v3936 = vunpack.c.l.b16 %v3801
    %v3937 = vunpack.c.l.b16 %v3802
    %v3938 = vunpack.c.l.b16 %v3803
    %v3939 = vunpack.c.l.b16 %v3804
    %v3940 = vunpack.c.l.b16 %v3805
    %v3941 = vunpack.c.l.b16 %v3806
    %v3942 = vunpack.c.l.b16 %v3807
    %v3943 = vunpack.c.l.b16 %v3808
    %v3944 = vunpack.c.l.b16 %v3809
    %v3945 = vunpack.c.l.b16 %v3810
    %v3946 = vunpack.c.l.b16 %v3811
    %v3947 = vunpack.c.l.b16 %v3812
    %v3948 = vunpack.c.l.b16 %v3813
    %v3949 = vunpack.c.l.b16 %v3814
    %v3950 = vunpack.c.l.b16 %v3815
    %v3951 = vunpack.c.l.b16 %v3816
    %v3952 = vunpack.c.l.b16 %v3817
    %v3953 = vunpack.c.l.b16 %v3818
    %v3954 = vunpack.c.l.b16 %v3819
    %v3955 = vunpack.c.l.b16 %v3820
    %v3956 = vunpack.c.l.b16 %v3821
    %v3957 = vunpack.c.l.b16 %v3822
    %v3958 = vunpack.c.l.b16 %v3823
    %v3959 = vunpack.c.l.b16 %v3824
    %v3960 = vunpack.c.l.b16 %v3825
    %v3961 = vunpack.c.l.b16 %v3826
    %v3962 = vunpack.c.l.b16 %v3827
    %v3963 = vunpack.c.l.b16 %v3828
    %v3964 = vunpack.c.l.b16 %v3829
    %v3965 = vunpack.c.l.b16 %v3830
    %v3966 = vunpack.c.l.b16 %v3831
    %v3967 = vunpack.c.l.b16 %v3832
    %v3968 = vunpack.c.l.b16 %v3833
    %v3969 = vunpack.c.l.b16 %v3834
    %v3970 = vunpack.c.l.b16 %v3835
    %v3971 = vunpack.c.l.b16 %v3836
    %v3972 = vunpack.c.l.b16 %v3837
    %v3973 = vunpack.c.l.b16 %v3838
    %v3974 = vunpack.c.l.b16 %v3839
    %v3975 = vunpack.c.l.b16 %v3840
    %v3976 = vunpack.c.l.b16 %v3841
    %v3977 = vunpack.c.l.b16 %v3842
    %v3978 = vunpack.c.l.b16 %v3843
    %v3979 = vunpack.c.l.b16 %v3844
    %v3980 = vunpack.c.l.b16 %v3845
    %v3981 = vunpack.c.l.b16 %v3846
    %v3982 = vunpack.c.l.b16 %v3847
    %v3983 = vunpack.c.l.b16 %v3848
    %v3984 = vunpack.c.l.b16 %v3849
    %v3985 = vunpack.c.l.b16 %v3850
    %v3986 = vunpack.c.l.b16 %v3851
    %v3987 = vpack.c.b16 %v3924, %v3923
    %v3988 = vpack.c.b16 %v3926, %v3925
    %v3989 = vpack.c.b16 %v3928, %v3927
    %v3990 = vpack.c.b16 %v3930, %v3929
    %v3991 = vpack.c.b16 %v3932, %v3931
    %v3992 = vpack.c.b16 %v3934, %v3933
    %v3993 = vpack.c.b16 %v3936, %v3935
    %v3994 = vpack.c.b16 %v3938, %v3937
    %v3995 = vpack.c.b16 %v3940, %v3939
    %v3996 = vpack.c.b16 %v3942, %v3941
    %v3997 = vpack.c.b16 %v3944, %v3943
    %v3998 = vpack.c.b16 %v3946, %v3945
    %v3999 = vpack.c.b16 %v3948, %v3947
    %v4000 = vpack.c.b16 %v3950, %v3949
    %v4001 = vpack.c.b16 %v3952, %v3951
    %v4002 = vpack.c.b16 %v3954, %v3953
    %v4003 = vpack.c.b16 %v3956, %v3955
    %v4004 = vpack.c.b16 %v3958, %v3957
    %v4005 = vpack.c.b16 %v3960, %v3959
    %v4006 = vpack.c.b16 %v3962, %v3961
    %v4007 = vpack.c.b16 %v3964, %v3963
    %v4008 = vpack.c.b16 %v3966, %v3965
    %v4009 = vpack.c.b16 %v3968, %v3967
    %v4010 = vpack.c.b16 %v3970, %v3969
    %v4011 = vpack.c.b16 %v3972, %v3971
    %v4012 = vpack.c.b16 %v3974, %v3973
    %v4013 = vpack.c.b16 %v3976, %v3975
    %v4014 = vpack.c.b16 %v3978, %v3977
    %v4015 = vpack.c.b16 %v3980, %v3979
    %v4016 = vpack.c.b16 %v3982, %v3981
    %v4017 = vpack.c.b16 %v3984, %v3983
    %v4018 = vpack.c.b16 %v3986, %v3985
    %4051 = vmatprep.subr.bf16.mxu0 0
    %4052 = vmatpush1.bf16.msra.mxu0 %v3987
    %4053 = vmatprep.subr.bf16.mxu0 0
    %4054 = vmatpush1.bf16.msra.mxu0 %v3988
    %4055 = vmatprep.subr.bf16.mxu0 0
    %4056 = vmatpush1.bf16.msra.mxu0 %v3989
    %4057 = vmatprep.subr.bf16.mxu0 0
    %4058 = vmatpush1.bf16.msra.mxu0 %v3990
    %4059 = vmatprep.subr.bf16.mxu0 0
    %4060 = vmatpush1.bf16.msra.mxu0 %v3991
    %4061 = vmatprep.subr.bf16.mxu0 0
    %4062 = vmatpush1.bf16.msra.mxu0 %v3992
    %4063 = vmatprep.subr.bf16.mxu0 0
    %4064 = vmatpush1.bf16.msra.mxu0 %v3993
    %4065 = vmatprep.subr.bf16.mxu0 0
    %4066 = vmatpush1.bf16.msra.mxu0 %v3994
    %4067 = vmatprep.subr.bf16.mxu0 0
    %4068 = vmatpush1.bf16.msra.mxu0 %v3995
    %4069 = vmatprep.subr.bf16.mxu0 0
    %4070 = vmatpush1.bf16.msra.mxu0 %v3996
    %4071 = vmatprep.subr.bf16.mxu0 0
    %4072 = vmatpush1.bf16.msra.mxu0 %v3997
    %4073 = vmatprep.subr.bf16.mxu0 0
    %4074 = vmatpush1.bf16.msra.mxu0 %v3998
    %4075 = vmatprep.subr.bf16.mxu0 0
    %4076 = vmatpush1.bf16.msra.mxu0 %v3999
    %4077 = vmatprep.subr.bf16.mxu0 0
    %4078 = vmatpush1.bf16.msra.mxu0 %v4000
    %4079 = vmatprep.subr.bf16.mxu0 0
    %4080 = vmatpush1.bf16.msra.mxu0 %v4001
    %4081 = vmatprep.subr.bf16.mxu0 0
    %4082 = vmatpush1.bf16.msra.mxu0 %v4002
    %4083 = vmatprep.mubr.bf16.mxu0 %v3781
    %4084 = vmatmul.mubr.bf16.gmra.mrb[0].mxu0 %v3780
    %v4085 = vpop.f32.mrb[0].mxu0
    %v4086 = vadd.f32 %v3857, %v4085
    %v4087 = vpop.f32.mrb[0].mxu0
    %v4088 = vpop.f32.mrb[0].mxu0
    %v4089 = vadd.f32 %v3857, %v4088
    %v4090 = vpop.f32.mrb[0].mxu0
    %4091 = vmatprep.mubr.bf16.mxu0 %v3785
    %4092 = vmatmul.mubr.bf16.gmra.mrb[0].mxu0 %v3784
    %v4093 = vpop.f32.mrb[0].mxu0
    %v4094 = vadd.f32 %v3857, %v4093
    %v4095 = vpop.f32.mrb[0].mxu0
    %v4096 = vpop.f32.mrb[0].mxu0
    %v4097 = vadd.f32 %v3857, %v4096
    %v4098 = vpop.f32.mrb[0].mxu0
    %4099 = vdwg.mxu0
    %4100 = vmatprep.subr.bf16.mxu0 0
    %4101 = vmatpush1.bf16.msra.mxu0 %v4003
    %4102 = vmatprep.subr.bf16.mxu0 0
    %4103 = vmatpush1.bf16.msra.mxu0 %v4004
    %4104 = vmatprep.subr.bf16.mxu0 0
    %4105 = vmatpush1.bf16.msra.mxu0 %v4005
    %4106 = vmatprep.subr.bf16.mxu0 0
    %4107 = vmatpush1.bf16.msra.mxu0 %v4006
    %4108 = vmatprep.subr.bf16.mxu0 0
    %4109 = vmatpush1.bf16.msra.mxu0 %v4007
    %4110 = vmatprep.subr.bf16.mxu0 0
    %4111 = vmatpush1.bf16.msra.mxu0 %v4008
    %4112 = vmatprep.subr.bf16.mxu0 0
    %4113 = vmatpush1.bf16.msra.mxu0 %v4009
    %4114 = vmatprep.subr.bf16.mxu0 0
    %4115 = vmatpush1.bf16.msra.mxu0 %v4010
    %4116 = vmatprep.subr.bf16.mxu0 0
    %4117 = vmatpush1.bf16.msra.mxu0 %v4011
    %4118 = vmatprep.subr.bf16.mxu0 0
    %4119 = vmatpush1.bf16.msra.mxu0 %v4012
    %4120 = vmatprep.subr.bf16.mxu0 0
    %4121 = vmatpush1.bf16.msra.mxu0 %v4013
    %4122 = vmatprep.subr.bf16.mxu0 0
    %4123 = vmatpush1.bf16.msra.mxu0 %v4014
    %4124 = vmatprep.subr.bf16.mxu0 0
    %4125 = vmatpush1.bf16.msra.mxu0 %v4015
    %4126 = vmatprep.subr.bf16.mxu0 0
    %4127 = vmatpush1.bf16.msra.mxu0 %v4016
    %4128 = vmatprep.subr.bf16.mxu0 0
    %4129 = vmatpush1.bf16.msra.mxu0 %v4017
    %4130 = vmatprep.subr.bf16.mxu0 0
    %4131 = vmatpush1.bf16.msra.mxu0 %v4018
    %4132 = vmatprep.mubr.bf16.mxu0 %v3783
    %4133 = vmatmul.mubr.bf16.gmra.mrb[0].mxu0 %v3782
    %v4134 = vpop.f32.mrb[0].mxu0
    %v4135 = vadd.f32 %v4086, %v4134
    %v4136 = vpop.f32.mrb[0].mxu0
    %v4137 = vpop.f32.mrb[0].mxu0
    %v4138 = vadd.f32 %v4089, %v4137
    %v4139 = vpop.f32.mrb[0].mxu0
    %4140 = vmatprep.mubr.bf16.mxu0 %v3787
    %4141 = vmatmul.mubr.bf16.gmra.mrb[0].mxu0 %v3786
    %v4142 = vpop.f32.mrb[0].mxu0
    %v4143 = vadd.f32 %v4094, %v4142
    %v4144 = vpop.f32.mrb[0].mxu0
    %v4145 = vpop.f32.mrb[0].mxu0
    %v4146 = vadd.f32 %v4097, %v4145
    %v4147 = vpop.f32.mrb[0].mxu0
    %4148 = vdwg.mxu0
    %v4149 = vld [vmem:[#allocation16] sm:$0x1]
    %v4151 = vlaneseq
    %v4152 = vshrl.u32 %v4151, 7
    %v4153 = vsub.s32 0, %v4152
    %v4154 = vrot.slane %v4149, %v4153
    %v4156 = vmul.f32 %v4135, %v4154
    %v4157 = vmul.f32 %v4138, %v4154
    %v4158 = vmul.f32 %v4143, %v4154
    %v4159 = vmul.f32 %v4146, %v4154
    %v4160 = vadd.f32 %v2219, %v4156
    %v4161 = vadd.f32 %v2220, %v4157
    %v4162 = vadd.f32 %v2221, %v4158
    %v4163 = vadd.f32 %v2222, %v4159
    %v4164 = vsel %vm191, %v4160, 0.0
    %4165 = vadd.xlane.f32.xlu0 %v4164
    %v4166 = vpop.xlane.xlu0 %4165
    %v4167 = vsel %vm191, %v4161, 0.0
    %4168 = vadd.xlane.f32.xlu0 %v4167
    %v4169 = vpop.xlane.xlu0 %4168
    %v4170 = vsel %vm191, %v4162, 0.0
    %4171 = vadd.xlane.f32.xlu0 %v4170
    %v4172 = vpop.xlane.xlu0 %4171
    %v4173 = vsel %vm191, %v4163, 0.0
    %4174 = vadd.xlane.f32.xlu0 %v4173
    %v4175 = vpop.xlane.xlu0 %4174
    %v4176 = vmul.f32 %v4166, %v204
    %v4177 = vmul.f32 %v4169, %v204
    %v4178 = vmul.f32 %v4172, %v204
    %v4179 = vmul.f32 %v4175, %v204
    %v4180 = vsub.f32 %v4160, %v4176
    %v4181 = vsub.f32 %v4161, %v4177
    %v4182 = vsub.f32 %v4162, %v4178
    %v4183 = vsub.f32 %v4163, %v4179
    %v4184 = vmul.f32 %v4180, %v4180
    %v4185 = vmul.f32 %v4181, %v4181
    %v4186 = vmul.f32 %v4182, %v4182
    %v4187 = vmul.f32 %v4183, %v4183
    %v4188 = vsel %vm191, %v4184, 0.0
    %4189 = vadd.xlane.f32.xlu0 %v4188
    %v4190 = vpop.xlane.xlu0 %4189
    %v4191 = vsel %vm191, %v4185, 0.0
    %4192 = vadd.xlane.f32.xlu0 %v4191
    %v4193 = vpop.xlane.xlu0 %4192
    %v4194 = vsel %vm191, %v4186, 0.0
    %4195 = vadd.xlane.f32.xlu0 %v4194
    %v4196 = vpop.xlane.xlu0 %4195
    %v4197 = vsel %vm191, %v4187, 0.0
    %4198 = vadd.xlane.f32.xlu0 %v4197
    %v4199 = vpop.xlane.xlu0 %4198
    %v4200 = vmul.f32 %v4190, %v204
    %v4201 = vmul.f32 %v4193, %v204
    %v4202 = vmul.f32 %v4196, %v204
    %v4203 = vmul.f32 %v4199, %v204
    %v4204 = vadd.f32 %v4200, 1e-06
    %v4205 = vadd.f32 %v4201, 1e-06
    %v4206 = vadd.f32 %v4202, 1e-06
    %v4207 = vadd.f32 %v4203, 1e-06
    %v4208 = vrsqrt.pop %v4204
    %v4209 = vrsqrt.pop %v4205
    %v4210 = vrsqrt.pop %v4206
    %v4211 = vrsqrt.pop %v4207
    %v4212 = vmul.f32 %v4180, %v4208
    %v4213 = vmul.f32 %v4181, %v4209
    %v4214 = vmul.f32 %v4182, %v4210
    %v4215 = vmul.f32 %v4183, %v4211
    %v4216 = vlaneseq
    %v4217 = vshrl.u32 %v4216, 7
    %v4218 = vsub.s32 3, %v4217
    %v4219 = vrot.slane %v245, %v4218
    %v4220 = vlaneseq
    %v4221 = vshrl.u32 %v4220, 7
    %v4222 = vsub.s32 3, %v4221
    %v4223 = vrot.slane %v246, %v4222
    %v4224 = vmul.f32 %v4212, %v4219
    %v4225 = vmul.f32 %v4213, %v4219
    %v4226 = vmul.f32 %v4214, %v4223
    %v4227 = vmul.f32 %v4215, %v4223
    %v4228 = vlaneseq
    %v4229 = vshrl.u32 %v4228, 7
    %v4230 = vsub.s32 5, %v4229
    %v4231 = vrot.slane %v189, %v4230
    %v4232 = vlaneseq
    %v4233 = vshrl.u32 %v4232, 7
    %v4234 = vsub.s32 5, %v4233
    %v4235 = vrot.slane %v190, %v4234
    %v4236 = vadd.f32 %v4224, %v4231
    %v4237 = vadd.f32 %v4225, %v4231
    %v4238 = vadd.f32 %v4226, %v4235
    %v4239 = vadd.f32 %v4227, %v4235
    %v4240 = vpack.c.bf16 %v4237, %v4236
    %v4241 = vpack.c.bf16 %v4239, %v4238
    %v4242 = vld [vmem:[%s16] sm:$0xff]
    %v4243 = vld [vmem:[%s16 + $0x8] sm:$0xff]
    %v4244 = vld [vmem:[%s16 + $0x10] sm:$0xff]
    %v4245 = vld [vmem:[%s16 + $0x18] sm:$0xff]
    %v4246 = vld [vmem:[%s16 + $0x20] sm:$0xff]
    %v4247 = vld [vmem:[%s16 + $0x28] sm:$0xff]
    %v4248 = vld [vmem:[%s16 + $0x30] sm:$0xff]
    %v4249 = vld [vmem:[%s16 + $0x38] sm:$0xff]
    %v4250 = vld [vmem:[%s17] sm:$0x3]
    %v4252 = vlaneseq
    %v4253 = vshrl.u32 %v4252, 7
    %v4254 = vsub.s32 0, %v4253
    %v4255 = vrot.slane %v4250, %v4254
    %v4256 = vlaneseq
    %v4257 = vshrl.u32 %v4256, 7
    %v4258 = vsub.s32 1, %v4257
    %v4259 = vrot.slane %v4250, %v4258
    %v4270 = vunpack.c.l.b16 %v4242
    %v4271 = vunpack.c.h.b16 %v4242
    %v4272 = vunpack.c.l.b16 %v4243
    %v4273 = vunpack.c.h.b16 %v4243
    %v4274 = vunpack.c.l.b16 %v4244
    %v4275 = vunpack.c.h.b16 %v4244
    %v4276 = vunpack.c.l.b16 %v4245
    %v4277 = vunpack.c.h.b16 %v4245
    %v4278 = vunpack.c.l.b16 %v4246
    %v4279 = vunpack.c.h.b16 %v4246
    %v4280 = vunpack.c.l.b16 %v4247
    %v4281 = vunpack.c.h.b16 %v4247
    %v4282 = vunpack.c.l.b16 %v4248
    %v4283 = vunpack.c.h.b16 %v4248
    %v4284 = vunpack.c.l.b16 %v4249
    %v4285 = vunpack.c.h.b16 %v4249
    %v4286 = vpack.c.b16 %v4272, %v4270
    %v4287 = vpack.c.b16 %v4273, %v4271
    %v4288 = vpack.c.b16 %v4276, %v4274
    %v4289 = vpack.c.b16 %v4277, %v4275
    %v4290 = vpack.c.b16 %v4280, %v4278
    %v4291 = vpack.c.b16 %v4281, %v4279
    %v4292 = vpack.c.b16 %v4284, %v4282
    %v4293 = vpack.c.b16 %v4285, %v4283
    %v4303 = vsel %vm191, %v4240, 0
    %v4306 = vsel %vm191, %v4241, 0
    %4308 = vmatprep.subr.bf16.mxu0 %v4287
    %4309 = vmatpush1.bf16.msra.mxu0 %v4286
    %4310 = vmatprep.subr.bf16.mxu0 %v4289
    %4311 = vmatpush1.bf16.msra.mxu0 %v4288
    %4312 = vmatprep.subr.bf16.mxu0 %v4291
    %4313 = vmatpush1.bf16.msra.mxu0 %v4290
    %4314 = vmatprep.subr.bf16.mxu0 %v4293
    %4315 = vmatpush1.bf16.msra.mxu0 %v4292
    %4316 = vmatprep.subr.bf16.mxu0 0
    %4317 = vmatpush1.bf16.msra.mxu0 0
    %4318 = vmatprep.subr.bf16.mxu0 0
    %4319 = vmatpush1.bf16.msra.mxu0 0
    %4320 = vmatprep.subr.bf16.mxu0 0
    %4321 = vmatpush1.bf16.msra.mxu0 0
    %4322 = vmatprep.subr.bf16.mxu0 0
    %4323 = vmatpush1.bf16.msra.mxu0 0
    %4324 = vmatprep.subr.bf16.mxu0 0
    %4325 = vmatpush1.bf16.msra.mxu0 0
    %4326 = vmatprep.subr.bf16.mxu0 0
    %4327 = vmatpush1.bf16.msra.mxu0 0
    %4328 = vmatprep.subr.bf16.mxu0 0
    %4329 = vmatpush1.bf16.msra.mxu0 0
    %4330 = vmatprep.subr.bf16.mxu0 0
    %4331 = vmatpush1.bf16.msra.mxu0 0
    %4332 = vmatprep.subr.bf16.mxu0 0
    %4333 = vmatpush1.bf16.msra.mxu0 0
    %4334 = vmatprep.subr.bf16.mxu0 0
    %4335 = vmatpush1.bf16.msra.mxu0 0
    %4336 = vmatprep.subr.bf16.mxu0 0
    %4337 = vmatpush1.bf16.msra.mxu0 0
    %4338 = vmatprep.subr.bf16.mxu0 0
    %4339 = vmatpush1.bf16.msra.mxu0 0
    %4340 = vmatprep.mubr.bf16.mxu0 0
    %4341 = vmatmul.mubr.bf16.gmra.mrb[0].mxu0 %v4303
    %v4342 = vpop.f32.mrb[0].mxu0
    %v4343 = vadd.f32 %v4255, %v4342
    %v4344 = vpop.f32.mrb[0].mxu0
    %v4345 = vadd.f32 %v4259, %v4344
    %v4346 = vpop.f32.mrb[0].mxu0
    %v4347 = vadd.f32 %v4255, %v4346
    %v4348 = vpop.f32.mrb[0].mxu0
    %v4349 = vadd.f32 %v4259, %v4348
    %4350 = vmatprep.mubr.bf16.mxu0 0
    %4351 = vmatmul.mubr.bf16.gmra.mrb[0].mxu0 %v4306
    %v4352 = vpop.f32.mrb[0].mxu0
    %v4353 = vadd.f32 %v4255, %v4352
    %v4354 = vpop.f32.mrb[0].mxu0
    %v4355 = vadd.f32 %v4259, %v4354
    %v4356 = vpop.f32.mrb[0].mxu0
    %v4357 = vadd.f32 %v4255, %v4356
    %v4358 = vpop.f32.mrb[0].mxu0
    %v4359 = vadd.f32 %v4259, %v4358
    %4360 = vdwg.mxu0
    %v4361 = vmul.f32 %v4343, %v4343
    %v4362 = vmul.f32 %v4345, %v4345
    %v4363 = vmul.f32 %v4347, %v4347
    %v4364 = vmul.f32 %v4349, %v4349
    %v4365 = vmul.f32 %v4353, %v4353
    %v4366 = vmul.f32 %v4355, %v4355
    %v4367 = vmul.f32 %v4357, %v4357
    %v4368 = vmul.f32 %v4359, %v4359
    %v4369 = vmul.f32 %v4343, %v4361
    %v4370 = vmul.f32 %v4345, %v4362
    %v4371 = vmul.f32 %v4347, %v4363
    %v4372 = vmul.f32 %v4349, %v4364
    %v4373 = vmul.f32 %v4353, %v4365
    %v4374 = vmul.f32 %v4355, %v4366
    %v4375 = vmul.f32 %v4357, %v4367
    %v4376 = vmul.f32 %v4359, %v4368
    %v4377 = vmul.f32 %v4369, 0.044715
    %v4378 = vmul.f32 %v4370, 0.044715
    %v4379 = vmul.f32 %v4371, 0.044715
    %v4380 = vmul.f32 %v4372, 0.044715
    %v4381 = vmul.f32 %v4373, 0.044715
    %v4382 = vmul.f32 %v4374, 0.044715
    %v4383 = vmul.f32 %v4375, 0.044715
    %v4384 = vmul.f32 %v4376, 0.044715
    %v4385 = vadd.f32 %v4343, %v4377
    %v4386 = vadd.f32 %v4345, %v4378
    %v4387 = vadd.f32 %v4347, %v4379
    %v4388 = vadd.f32 %v4349, %v4380
    %v4389 = vadd.f32 %v4353, %v4381
    %v4390 = vadd.f32 %v4355, %v4382
    %v4391 = vadd.f32 %v4357, %v4383
    %v4392 = vadd.f32 %v4359, %v4384
    %v4393 = vmul.f32 %v4385, 0.7978846
    %v4394 = vmul.f32 %v4386, 0.7978846
    %v4395 = vmul.f32 %v4387, 0.7978846
    %v4396 = vmul.f32 %v4388, 0.7978846
    %v4397 = vmul.f32 %v4389, 0.7978846
    %v4398 = vmul.f32 %v4390, 0.7978846
    %v4399 = vmul.f32 %v4391, 0.7978846
    %v4400 = vmul.f32 %v4392, 0.7978846
    %v4401 = vtanh.pop %v4393
    %v4402 = vtanh.pop %v4394
    %v4403 = vtanh.pop %v4395
    %v4404 = vtanh.pop %v4396
    %v4405 = vtanh.pop %v4397
    %v4406 = vtanh.pop %v4398
    %v4407 = vtanh.pop %v4399
    %v4408 = vtanh.pop %v4400
    %v4409 = vadd.f32 %v4401, 1.0
    %v4410 = vadd.f32 %v4402, 1.0
    %v4411 = vadd.f32 %v4403, 1.0
    %v4412 = vadd.f32 %v4404, 1.0
    %v4413 = vadd.f32 %v4405, 1.0
    %v4414 = vadd.f32 %v4406, 1.0
    %v4415 = vadd.f32 %v4407, 1.0
    %v4416 = vadd.f32 %v4408, 1.0
    %v4417 = vmul.f32 %v4409, 0.5
    %v4418 = vmul.f32 %v4410, 0.5
    %v4419 = vmul.f32 %v4411, 0.5
    %v4420 = vmul.f32 %v4412, 0.5
    %v4421 = vmul.f32 %v4413, 0.5
    %v4422 = vmul.f32 %v4414, 0.5
    %v4423 = vmul.f32 %v4415, 0.5
    %v4424 = vmul.f32 %v4416, 0.5
    %v4425 = vmul.f32 %v4343, %v4417
    %v4426 = vmul.f32 %v4345, %v4418
    %v4427 = vmul.f32 %v4347, %v4419
    %v4428 = vmul.f32 %v4349, %v4420
    %v4429 = vmul.f32 %v4353, %v4421
    %v4430 = vmul.f32 %v4355, %v4422
    %v4431 = vmul.f32 %v4357, %v4423
    %v4432 = vmul.f32 %v4359, %v4424
    %v4433 = vpack.c.bf16 %v4427, %v4425
    %v4434 = vpack.c.bf16 %v4428, %v4426
    %v4435 = vpack.c.bf16 %v4431, %v4429
    %v4436 = vpack.c.bf16 %v4432, %v4430
    %v4437 = vld [vmem:[%s18] sm:$0xf]
    %v4438 = vld [vmem:[%s18 + $0x4] sm:$0xf]
    %v4439 = vld [vmem:[%s18 + $0x8] sm:$0xf]
    %v4440 = vld [vmem:[%s18 + $0xc] sm:$0xf]
    %v4441 = vld [vmem:[%s18 + $0x10] sm:$0xf]
    %v4442 = vld [vmem:[%s18 + $0x14] sm:$0xf]
    %v4443 = vld [vmem:[%s18 + $0x18] sm:$0xf]
    %v4444 = vld [vmem:[%s18 + $0x1c] sm:$0xf]
    %v4445 = vld [vmem:[%s18 + $0x20] sm:$0xf]
    %v4446 = vld [vmem:[%s18 + $0x24] sm:$0xf]
    %v4447 = vld [vmem:[%s18 + $0x28] sm:$0xf]
    %v4448 = vld [vmem:[%s18 + $0x2c] sm:$0xf]
    %v4449 = vld [vmem:[%s18 + $0x30] sm:$0xf]
    %v4450 = vld [vmem:[%s18 + $0x34] sm:$0xf]
    %v4451 = vld [vmem:[%s18 + $0x38] sm:$0xf]
    %v4452 = vld [vmem:[%s18 + $0x3c] sm:$0xf]
    %v4453 = vld [vmem:[%s18 + $0x40] sm:$0xf]
    %v4454 = vld [vmem:[%s18 + $0x44] sm:$0xf]
    %v4455 = vld [vmem:[%s18 + $0x48] sm:$0xf]
    %v4456 = vld [vmem:[%s18 + $0x4c] sm:$0xf]
    %v4457 = vld [vmem:[%s18 + $0x50] sm:$0xf]
    %v4458 = vld [vmem:[%s18 + $0x54] sm:$0xf]
    %v4459 = vld [vmem:[%s18 + $0x58] sm:$0xf]
    %v4460 = vld [vmem:[%s18 + $0x5c] sm:$0xf]
    %v4461 = vld [vmem:[%s18 + $0x60] sm:$0xf]
    %v4462 = vld [vmem:[%s18 + $0x64] sm:$0xf]
    %v4463 = vld [vmem:[%s18 + $0x68] sm:$0xf]
    %v4464 = vld [vmem:[%s18 + $0x6c] sm:$0xf]
    %v4465 = vld [vmem:[%s18 + $0x70] sm:$0xf]
    %v4466 = vld [vmem:[%s18 + $0x74] sm:$0xf]
    %v4467 = vld [vmem:[%s18 + $0x78] sm:$0xf]
    %v4468 = vld [vmem:[%s18 + $0x7c] sm:$0xf]
    %v4469 = vld [vmem:[#allocation17] sm:$0x1]
    %v4471 = vlaneseq
    %v4472 = vshrl.u32 %v4471, 7
    %v4473 = vsub.s32 0, %v4472
    %v4474 = vrot.slane %v4469, %v4473
    %v4508 = vunpack.c.l.b16 %v4437
    %v4509 = vunpack.c.l.b16 %v4438
    %v4510 = vunpack.c.l.b16 %v4439
    %v4511 = vunpack.c.l.b16 %v4440
    %v4512 = vunpack.c.l.b16 %v4441
    %v4513 = vunpack.c.l.b16 %v4442
    %v4514 = vunpack.c.l.b16 %v4443
    %v4515 = vunpack.c.l.b16 %v4444
    %v4516 = vunpack.c.l.b16 %v4445
    %v4517 = vunpack.c.l.b16 %v4446
    %v4518 = vunpack.c.l.b16 %v4447
    %v4519 = vunpack.c.l.b16 %v4448
    %v4520 = vunpack.c.l.b16 %v4449
    %v4521 = vunpack.c.l.b16 %v4450
    %v4522 = vunpack.c.l.b16 %v4451
    %v4523 = vunpack.c.l.b16 %v4452
    %v4524 = vunpack.c.l.b16 %v4453
    %v4525 = vunpack.c.l.b16 %v4454
    %v4526 = vunpack.c.l.b16 %v4455
    %v4527 = vunpack.c.l.b16 %v4456
    %v4528 = vunpack.c.l.b16 %v4457
    %v4529 = vunpack.c.l.b16 %v4458
    %v4530 = vunpack.c.l.b16 %v4459
    %v4531 = vunpack.c.l.b16 %v4460
    %v4532 = vunpack.c.l.b16 %v4461
    %v4533 = vunpack.c.l.b16 %v4462
    %v4534 = vunpack.c.l.b16 %v4463
    %v4535 = vunpack.c.l.b16 %v4464
    %v4536 = vunpack.c.l.b16 %v4465
    %v4537 = vunpack.c.l.b16 %v4466
    %v4538 = vunpack.c.l.b16 %v4467
    %v4539 = vunpack.c.l.b16 %v4468
    %v4540 = vpack.c.b16 %v4509, %v4508
    %v4541 = vpack.c.b16 %v4511, %v4510
    %v4542 = vpack.c.b16 %v4513, %v4512
    %v4543 = vpack.c.b16 %v4515, %v4514
    %v4544 = vpack.c.b16 %v4517, %v4516
    %v4545 = vpack.c.b16 %v4519, %v4518
    %v4546 = vpack.c.b16 %v4521, %v4520
    %v4547 = vpack.c.b16 %v4523, %v4522
    %v4548 = vpack.c.b16 %v4525, %v4524
    %v4549 = vpack.c.b16 %v4527, %v4526
    %v4550 = vpack.c.b16 %v4529, %v4528
    %v4551 = vpack.c.b16 %v4531, %v4530
    %v4552 = vpack.c.b16 %v4533, %v4532
    %v4553 = vpack.c.b16 %v4535, %v4534
    %v4554 = vpack.c.b16 %v4537, %v4536
    %v4555 = vpack.c.b16 %v4539, %v4538
    %4572 = vmatprep.subr.bf16.mxu0 0
    %4573 = vmatpush1.bf16.msra.mxu0 %v4540
    %4574 = vmatprep.subr.bf16.mxu0 0
    %4575 = vmatpush1.bf16.msra.mxu0 %v4541
    %4576 = vmatprep.subr.bf16.mxu0 0
    %4577 = vmatpush1.bf16.msra.mxu0 %v4542
    %4578 = vmatprep.subr.bf16.mxu0 0
    %4579 = vmatpush1.bf16.msra.mxu0 %v4543
    %4580 = vmatprep.subr.bf16.mxu0 0
    %4581 = vmatpush1.bf16.msra.mxu0 %v4544
    %4582 = vmatprep.subr.bf16.mxu0 0
    %4583 = vmatpush1.bf16.msra.mxu0 %v4545
    %4584 = vmatprep.subr.bf16.mxu0 0
    %4585 = vmatpush1.bf16.msra.mxu0 %v4546
    %4586 = vmatprep.subr.bf16.mxu0 0
    %4587 = vmatpush1.bf16.msra.mxu0 %v4547
    %4588 = vmatprep.subr.bf16.mxu0 0
    %4589 = vmatpush1.bf16.msra.mxu0 %v4548
    %4590 = vmatprep.subr.bf16.mxu0 0
    %4591 = vmatpush1.bf16.msra.mxu0 %v4549
    %4592 = vmatprep.subr.bf16.mxu0 0
    %4593 = vmatpush1.bf16.msra.mxu0 %v4550
    %4594 = vmatprep.subr.bf16.mxu0 0
    %4595 = vmatpush1.bf16.msra.mxu0 %v4551
    %4596 = vmatprep.subr.bf16.mxu0 0
    %4597 = vmatpush1.bf16.msra.mxu0 %v4552
    %4598 = vmatprep.subr.bf16.mxu0 0
    %4599 = vmatpush1.bf16.msra.mxu0 %v4553
    %4600 = vmatprep.subr.bf16.mxu0 0
    %4601 = vmatpush1.bf16.msra.mxu0 %v4554
    %4602 = vmatprep.subr.bf16.mxu0 0
    %4603 = vmatpush1.bf16.msra.mxu0 %v4555
    %4604 = vmatprep.mubr.bf16.mxu0 %v4434
    %4605 = vmatmul.mubr.bf16.gmra.mrb[0].mxu0 %v4433
    %v4606 = vpop.f32.mrb[0].mxu0
    %v4607 = vadd.f32 %v4474, %v4606
    %v4608 = vpop.f32.mrb[0].mxu0
    %v4609 = vpop.f32.mrb[0].mxu0
    %v4610 = vadd.f32 %v4474, %v4609
    %v4611 = vpop.f32.mrb[0].mxu0
    %4612 = vmatprep.mubr.bf16.mxu0 %v4436
    %4613 = vmatmul.mubr.bf16.gmra.mrb[0].mxu0 %v4435
    %v4614 = vpop.f32.mrb[0].mxu0
    %v4615 = vadd.f32 %v4474, %v4614
    %v4616 = vpop.f32.mrb[0].mxu0
    %v4617 = vpop.f32.mrb[0].mxu0
    %v4618 = vadd.f32 %v4474, %v4617
    %v4619 = vpop.f32.mrb[0].mxu0
    %4620 = vdwg.mxu0
    %v4621 = vlaneseq
    %v4622 = vshrl.u32 %v4621, 7
    %v4623 = vsub.s32 1, %v4622
    %v4624 = vrot.slane %v189, %v4623
    %v4625 = vlaneseq
    %v4626 = vshrl.u32 %v4625, 7
    %v4627 = vsub.s32 1, %v4626
    %v4628 = vrot.slane %v190, %v4627
    %v4629 = vmul.f32 %v4607, %v4624
    %v4630 = vmul.f32 %v4610, %v4624
    %v4631 = vmul.f32 %v4615, %v4628
    %v4632 = vmul.f32 %v4618, %v4628
    %v4633 = vadd.f32 %v4160, %v4629
    %v4634 = vadd.f32 %v4161, %v4630
    %v4635 = vadd.f32 %v4162, %v4631
    %v4636 = vadd.f32 %v4163, %v4632
    %4637 = vst.msk [vmem:[#allocation19] sm:$0xff] %vm191, %v4633
    %4638 = vst.msk [vmem:[#allocation19 + $0x8] sm:$0xff] %vm191, %v4634
    %4639 = vst.msk [vmem:[#allocation19 + $0x10] sm:$0xff] %vm191, %v4635
    %4640 = vst.msk [vmem:[#allocation19 + $0x18] sm:$0xff] %vm191, %v4636
    // Predicated region
    $region122: #{fastvar_cross_attn_block.1} parent=1 // pred_check
      _
    $region123: #{fastvar_cross_attn_block.1} parent=1 // pred_check_branch
      %4642 = sbr.rel (0) target = $region125
    $region124: #{fastvar_cross_attn_block.1} parent=1 // pred_region
      %s4644 = ssub.s32 512, 512
      %4645 = vsyncadd [#allocation4], %s4644
      %s4646 = sshll.u32 [#allocation19], 4
      %s4647 = int_to_ptr.vmem [resolvable:$true] %s4646
      %4652 = dma.vmem_to_hbm [thread:$0]  %s4647, 512, %s20, [#allocation4], 128, 128, 8
    $region125: #{fastvar_cross_attn_block.1} parent=1 // pred_fallthru
      _
    // Predicated region
    $region126: #{fastvar_cross_attn_block.1} parent=1 // pred_check
      _
    $region127: #{fastvar_cross_attn_block.1} parent=1 // pred_check_branch
      %4654 = sbr.rel (0) target = $region129
    $region128: #{fastvar_cross_attn_block.1} parent=1 // pred_region
      %4655 = dma.done [#allocation4], 512
    $region129: #{fastvar_cross_attn_block.1} parent=1 // pred_fallthru
      _
    %4656 = vsyncpa [#allocation3], 1
    %4657 = vsyncpa [#allocation6], 1
    %4658 = vsyncpa [#allocation9], 1
    %4659 = vsyncpa [#allocation12], 1
    %4660 = vsyncpa [#allocation15], 1
    %4661 = vsyncpa [#allocation18], 1
    %4662 = vsyncpa [#allocation4], 1

</llo_original>
